<compile_context>
chip_gen: v7x
topology: tpu7x:2x2x1
jax: 0.10.0
libtpu: 0.0.40
codegen_flags: <defaults>
</compile_context>

<pallas_src>
import functools

import jax
import jax.numpy as jnp
import numpy as np
from jax.experimental import pallas as pl
from jax.experimental.pallas import tpu as pltpu

SAMPLE_RATE = 16000
N_MELS = 64
N_MELS_PAD = 128                  # lane-dense output (sliced to 64 in wrapper)
N_FFT = 1024
HOP = 256
RATIO = N_FFT // HOP              # 4 hop rows per frame
F_MIN = 0.0
F_MAX = 8000.0
NKEEP = N_FFT // 2                # 512 onesided bins kept (Nyquist row of the
                                  # mel filterbank is zero, so it is dropped)
TAIL_ROWS = 8                     # per-tile overlap rows (>= RATIO-1, 8-round)


# ----------------------------- parameter setup -----------------------------
def _hz_to_mel_htk(f):
    return 2595.0 * np.log10(1.0 + f / 700.0)


def _mel_to_hz_htk(m):
    return 700.0 * (10.0 ** (m / 2595.0) - 1.0)


def _make_mel_fbanks_full():
    """torchaudio.functional.melscale_fbanks(513, 0, 8000, 64, 16000,
    norm=None, mel_scale='htk') in float64.  Shape (513, 64)."""
    all_freqs = np.linspace(0.0, SAMPLE_RATE / 2.0, N_FFT // 2 + 1)
    m_min = _hz_to_mel_htk(F_MIN)
    m_max = _hz_to_mel_htk(F_MAX)
    m_pts = np.linspace(m_min, m_max, N_MELS + 2)
    f_pts = _mel_to_hz_htk(m_pts)
    f_diff = f_pts[1:] - f_pts[:-1]                       # (n_mels + 1,)
    slopes = f_pts[None, :] - all_freqs[:, None]          # (n_freqs, n_mels+2)
    down = -slopes[:, :-2] / f_diff[:-1]
    up = slopes[:, 2:] / f_diff[1:]
    return np.maximum(0.0, np.minimum(down, up))          # (513, 64)


def make_mel_fbanks_padded():
    """Filterbank with the (all-zero) Nyquist row dropped and the mel axis
    zero-padded to 128 lanes, cast to bf16.  Shape (NKEEP, N_MELS_PAD)."""
    fb = _make_mel_fbanks_full()[:NKEEP, :]               # drop zero Nyquist row
    fb_pad = np.zeros((NKEEP, N_MELS_PAD), np.float32)
    fb_pad[:, :N_MELS] = fb
    return jnp.asarray(fb_pad, dtype=jnp.bfloat16)


def make_windowed_dft_matrix():
    """Combined [cos | -sin] onesided-DFT matrix (Nyquist bin dropped) with the
    periodic Hann window folded in, cast to bf16.  Shape (N_FFT, 2*NKEEP)."""
    n = np.arange(N_FFT, dtype=np.float64)
    win = 0.5 * (1.0 - np.cos(2.0 * np.pi * n / N_FFT))   # torch.hann_window
    k = np.arange(NKEEP, dtype=np.float64)[None, :]
    ang = 2.0 * np.pi * n[:, None] * k / N_FFT
    dft = np.concatenate([win[:, None] * np.cos(ang),
                          win[:, None] * -np.sin(ang)], axis=1)
    return jnp.asarray(dft.astype(np.float32), dtype=jnp.bfloat16)


# ------------------------------- Pallas kernel ------------------------------
def logmel_kernel(hop_ref, tail_ref, dft_ref, fb_ref, out_ref, asm_ref):
    # hop_ref : (tile_f, HOP)            f32  non-overlapping hop rows of tile i
    # tail_ref: (1, TAIL_ROWS, HOP)      f32  first hop rows of tile i+1
    # dft_ref : (N_FFT, 2*NKEEP)         bf16 [cos | -sin], window folded in
    # fb_ref  : (NKEEP, N_MELS_PAD)      bf16 mel filterbank, zero-padded lanes
    # out_ref : (tile_f, N_MELS_PAD)     f32
    # asm_ref : (tile_f+TAIL_ROWS, HOP)  f32  scratch for overlap-frame assembly
    tile_f = hop_ref.shape[0]

    # Stage the tile's hop rows plus the 8-row overlap tail contiguously.
    asm_ref[:tile_f, :] = hop_ref[...]
    asm_ref[tile_f:, :] = tail_ref[0]

    # Frame r of this tile = hop rows r, r+1, r+2, r+3 (N_FFT == 4*HOP):
    # assemble with 4 sublane-offset slices, cast to bf16 for the MXU.
    frames = jnp.concatenate(
        [asm_ref[j:j + tile_f, :].astype(jnp.bfloat16) for j in range(RATIO)],
        axis=1)                                            # (tile_f, N_FFT)

    y = jnp.dot(frames, dft_ref[...],
                preferred_element_type=jnp.float32)        # single MXU pass
    re = y[:, :NKEEP]                                      # lane-aligned split
    im = y[:, NKEEP:]
    power = re * re + im * im                              # |X|^2, f32

    # bf16 inputs -> full-rate MXU; f32 accumulation.
    mel = jnp.dot(power.astype(jnp.bfloat16), fb_ref[...],
                  preferred_element_type=jnp.float32)
    out_ref[...] = jnp.log(mel + 1e-9)


@functools.partial(jax.jit, static_argnames=("tile_f",))
def _logmel_pallas(main, tails, dft_m, fb_pad, tile_f):
    f_pad = main.shape[0]
    g = f_pad // tile_f
    return pl.pallas_call(
        logmel_kernel,
        out_shape=jax.ShapeDtypeStruct((f_pad, N_MELS_PAD), jnp.float32),
        grid=(g,),
        in_specs=[
            pl.BlockSpec((tile_f, HOP), lambda i: (i, 0)),
            pl.BlockSpec((1, TAIL_ROWS, HOP), lambda i: (i, 0, 0)),
            # Constant index maps keep the DFT / mel matrices resident across
            # grid steps (~4.3 MiB even if double-buffered — ample headroom).
            pl.BlockSpec((N_FFT, 2 * NKEEP), lambda i: (0, 0)),
            pl.BlockSpec((NKEEP, N_MELS_PAD), lambda i: (0, 0)),
        ],
        out_specs=pl.BlockSpec((tile_f, N_MELS_PAD), lambda i: (i, 0)),
        scratch_shapes=[pltpu.VMEM((tile_f + TAIL_ROWS, HOP), jnp.float32)],
        compiler_params=pltpu.CompilerParams(
            dimension_semantics=("parallel",),   # shard frame tiles across TCs
            vmem_limit_bytes=32 << 20,           # ~12-19 MiB actually used
        ),
    )(main, tails, dft_m, fb_pad)


# --------------------------------- wrapper ----------------------------------
def _max_tile_f():
    """v7x has 64 MiB VMEM per TensorCore -> cap frame tiles at 512 rows;
    v5e/v6e (128 MiB) take 1024-row tiles to amortize per-step overhead."""
    try:
        kind = jax.devices()[0].device_kind.lower()
    except Exception:
        return 512
    return 512 if "7" in kind else 1024


def _pick_tile_f(n_frames, max_tile):
    """Bucketed tile sizes (multiples of 16 for bf16 sublane packing) so only a
    handful of tile shapes ever compile; prefer >= 2 grid steps so both v7x
    TensorCores get work."""
    for t in (1024, 512, 256, 128):
        if t <= max_tile and n_frames >= 2 * t:
            return t
    return 128


def log_mel_spectrogram(waveform, dft_m, fb_pad):
    """waveform: (1, L) or (L,) float32 -> (n_mels, n_frames) float32."""
    wave = jnp.reshape(waveform, (-1,)).astype(jnp.float32)
    length = wave.shape[0]
    n_frames = 1 + length // HOP
    # center=True: reflect-pad n_fft//2 on both sides.
    padded = jnp.pad(wave, (N_FFT // 2, N_FFT // 2), mode="reflect")

    tile_f = _pick_tile_f(n_frames, _max_tile_f())
    g = pl.cdiv(n_frames, tile_f)
    f_pad = g * tile_f

    # Hop-major layout (no 4x-expanded frames array in HBM): the kernel
    # assembles overlapping frames from (tile_f, HOP) hop tiles plus a small
    # per-tile overlap tail taken from the start of the next tile.
    total = (g + 1) * tile_f * HOP
    hops = jnp.pad(padded, (0, total - padded.shape[0]))
    hops = hops.reshape(g + 1, tile_f, HOP)
    main = hops[:g].reshape(f_pad, HOP)                    # hop rows [0, f_pad)
    tails = hops[1:, :TAIL_ROWS, :]                        # rows [(i+1)*tile_f, +8)

    out = _logmel_pallas(main, tails, dft_m, fb_pad, tile_f)
    # squeeze()-equivalent for a single-channel waveform: (n_mels, n_frames)
    return out[:n_frames, :N_MELS].T


# ------------------------- host-side reference (f64) ------------------------
def reference_logmel(wave_np):
    wave_np = np.asarray(wave_np, np.float64).reshape(-1)
    L = wave_np.shape[0]
    pad = np.pad(wave_np, (N_FFT // 2, N_FFT // 2), mode="reflect")
    n_frames = 1 + L // HOP
    n = np.arange(N_FFT)
    win = 0.5 * (1.0 - np.cos(2.0 * np.pi * n / N_FFT))
    frames = np.stack([pad[f * HOP:f * HOP + N_FFT] for f in range(n_frames)])
    spec = np.abs(np.fft.rfft(frames * win, axis=1)) ** 2  # (n_frames, 513)
    mel = spec @ _make_mel_fbanks_full()                   # (n_frames, 64)
    return np.log(mel + 1e-9).T                            # (64, n_frames)


# ----------------------------------- main -----------------------------------
if __name__ == "__main__":
    key = jax.random.PRNGKey(0)
    dft_m = make_windowed_dft_matrix()                     # (1024, 1024) bf16
    fb_pad = make_mel_fbanks_padded()                      # (512, 128)  bf16

    # Small clip (single tile) + medium clip (multi-tile grid, exercises the
    # cross-tile overlap tail).
    for L in (4096, 256 * 300):
        key, sub = jax.random.split(key)
        waveform = jax.random.normal(sub, (1, L), dtype=jnp.float32)

        out = jax.block_until_ready(log_mel_spectrogram(waveform, dft_m, fb_pad))

        n_frames = 1 + L // HOP
        assert out.shape == (N_MELS, n_frames), out.shape
        assert out.dtype == jnp.float32
        out_np = np.asarray(out)
        assert np.all(np.isfinite(out_np))

        # bf16 frames/DFT/filterbank -> ~1% relative error in mel power,
        # i.e. a few 1e-2 absolute error in log space.
        ref = reference_logmel(np.asarray(waveform))
        diff = np.abs(out_np - ref)
        assert np.mean(diff) < 0.02, f"mean |err| = {np.mean(diff)}"
        assert np.max(diff) < 0.35, f"max |err| = {np.max(diff)}"

    print("KERNEL_OK")
</pallas_src>

<mosaic_0001>
module attributes {stable_mosaic.version = 11 : i64} {
  func.func @logmel_kernel(%arg0: i32, %arg1: memref<128x256xf32, #tpu.memory_space<vmem>>, %arg2: memref<1x8x256xf32, #tpu.memory_space<vmem>>, %arg3: memref<1024x1024xbf16, #tpu.memory_space<vmem>>, %arg4: memref<512x128xbf16, #tpu.memory_space<vmem>>, %arg5: memref<128x128xf32, #tpu.memory_space<vmem>>, %arg6: memref<136x256xf32, #tpu.memory_space<vmem>>) attributes {dimension_semantics = [#tpu.dimension_semantics<parallel>], iteration_bounds = array<i64: 1>, scalar_prefetch = 0 : i64, scratch_operands = 1 : i64, tpu.core_type = #tpu.core_type<tc>, window_params = [{transform_indices = @transform_0, window_bounds = array<i64: 128, 256>}, {transform_indices = @transform_1, window_bounds = array<i64: 1, 8, 256>}, {pipeline_mode = #tpu.pipeline_mode<synchronous>, transform_indices = @transform_2, window_bounds = array<i64: 1024, 1024>}, {pipeline_mode = #tpu.pipeline_mode<synchronous>, transform_indices = @transform_3, window_bounds = array<i64: 512, 128>}, {transform_indices = @transform_4, window_bounds = array<i64: 128, 128>}]} {
    %c0 = arith.constant 0 : index
    %c0_0 = arith.constant 0 : index
    %0 = vector.load %arg1[%c0, %c0_0] : memref<128x256xf32, #tpu.memory_space<vmem>>, vector<128x256xf32>
    %c0_1 = arith.constant 0 : index
    %c0_2 = arith.constant 0 : index
    %1 = vector.load %arg6[%c0_1, %c0_2] : memref<136x256xf32, #tpu.memory_space<vmem>>, vector<128x256xf32>
    tpu.vector_store %arg6[%c0_1, %c0_2], %0 {strides = array<i32>} : memref<136x256xf32, #tpu.memory_space<vmem>>, vector<128x256xf32>,
    %c0_3 = arith.constant 0 : index
    %c0_4 = arith.constant 0 : index
    %c0_5 = arith.constant 0 : index
    %2 = vector.load %arg2[%c0_3, %c0_4, %c0_5] : memref<1x8x256xf32, #tpu.memory_space<vmem>>, vector<1x8x256xf32>
    %3 = vector.shape_cast %2 : vector<1x8x256xf32> to vector<8x256xf32>
    %c128 = arith.constant 128 : index
    %c0_6 = arith.constant 0 : index
    %4 = vector.load %arg6[%c128, %c0_6] : memref<136x256xf32, #tpu.memory_space<vmem>>, vector<8x256xf32>
    tpu.vector_store %arg6[%c128, %c0_6], %3 {strides = array<i32>} : memref<136x256xf32, #tpu.memory_space<vmem>>, vector<8x256xf32>,
    %c0_7 = arith.constant 0 : index
    %c0_8 = arith.constant 0 : index
    %5 = vector.load %arg6[%c0_7, %c0_8] : memref<136x256xf32, #tpu.memory_space<vmem>>, vector<128x256xf32>
    %6 = arith.truncf %5 : vector<128x256xf32> to vector<128x256xbf16>
    %c1 = arith.constant 1 : index
    %c0_9 = arith.constant 0 : index
    %7 = vector.load %arg6[%c1, %c0_9] : memref<136x256xf32, #tpu.memory_space<vmem>>, vector<128x256xf32>
    %8 = arith.truncf %7 : vector<128x256xf32> to vector<128x256xbf16>
    %c2 = arith.constant 2 : index
    %c0_10 = arith.constant 0 : index
    %9 = vector.load %arg6[%c2, %c0_10] : memref<136x256xf32, #tpu.memory_space<vmem>>, vector<128x256xf32>
    %10 = arith.truncf %9 : vector<128x256xf32> to vector<128x256xbf16>
    %c3 = arith.constant 3 : index
    %c0_11 = arith.constant 0 : index
    %11 = vector.load %arg6[%c3, %c0_11] : memref<136x256xf32, #tpu.memory_space<vmem>>, vector<128x256xf32>
    %12 = arith.truncf %11 : vector<128x256xf32> to vector<128x256xbf16>
    %13 = tpu.concatenate %6, %8, %10, %12 in 1 : vector<128x256xbf16>, vector<128x256xbf16>, vector<128x256xbf16>, vector<128x256xbf16> -> vector<128x1024xbf16>
    %c0_12 = arith.constant 0 : index
    %c0_13 = arith.constant 0 : index
    %14 = vector.load %arg3[%c0_12, %c0_13] : memref<1024x1024xbf16, #tpu.memory_space<vmem>>, vector<1024x1024xbf16>
    %cst = arith.constant dense<0.000000e+00> : vector<128x1024xf32>
    %15 = tpu.matmul %13, %14, %cst {dimension_numbers = #tpu.dot_dimension_numbers<[1], [0], [0], [1], [0, 0, 1, 1], [], []>} : vector<128x1024xbf16>, vector<1024x1024xbf16>, vector<128x1024xf32> -> vector<128x1024xf32>
    %16 = vector.extract_strided_slice %15 {offsets = [0, 0], sizes = [128, 512], strides = [1, 1]} : vector<128x1024xf32> to vector<128x512xf32>
    %17 = vector.extract_strided_slice %15 {offsets = [0, 512], sizes = [128, 512], strides = [1, 1]} : vector<128x1024xf32> to vector<128x512xf32>
    %18 = arith.mulf %16, %16 : vector<128x512xf32>
    %19 = arith.mulf %17, %17 : vector<128x512xf32>
    %20 = arith.addf %18, %19 : vector<128x512xf32>
    %21 = arith.truncf %20 : vector<128x512xf32> to vector<128x512xbf16>
    %c0_14 = arith.constant 0 : index
    %c0_15 = arith.constant 0 : index
    %22 = vector.load %arg4[%c0_14, %c0_15] : memref<512x128xbf16, #tpu.memory_space<vmem>>, vector<512x128xbf16>
    %cst_16 = arith.constant dense<0.000000e+00> : vector<128x128xf32>
    %23 = tpu.matmul %21, %22, %cst_16 {dimension_numbers = #tpu.dot_dimension_numbers<[1], [0], [0], [1], [0, 0, 1, 1], [], []>} : vector<128x512xbf16>, vector<512x128xbf16>, vector<128x128xf32> -> vector<128x128xf32>
    %cst_17 = arith.constant 9.99999971E-10 : f32
    %24 = vector.broadcast %cst_17 : f32 to vector<128x128xf32>
    %25 = arith.addf %23, %24 : vector<128x128xf32>
    %26 = math.log %25 : vector<128x128xf32>
    %c0_18 = arith.constant 0 : index
    %c0_19 = arith.constant 0 : index
    %27 = vector.load %arg5[%c0_18, %c0_19] : memref<128x128xf32, #tpu.memory_space<vmem>>, vector<128x128xf32>
    tpu.vector_store %arg5[%c0_18, %c0_19], %26 {strides = array<i32>} : memref<128x128xf32, #tpu.memory_space<vmem>>, vector<128x128xf32>,
    return
  }
  func.func @transform_0(%arg0: i32) -> (i32, i32) {
    %c0_i32 = arith.constant 0 : i32
    %c0_i32_0 = arith.constant 0 : i32
    return %arg0, %c0_i32 : i32, i32
  }
  func.func @transform_1(%arg0: i32) -> (i32, i32, i32) {
    %c0_i32 = arith.constant 0 : i32
    %c0_i32_0 = arith.constant 0 : i32
    %c0_i32_1 = arith.constant 0 : i32
    return %arg0, %c0_i32, %c0_i32_0 : i32, i32, i32
  }
  func.func @transform_2(%arg0: i32) -> (i32, i32) {
    %c0_i32 = arith.constant 0 : i32
    %c0_i32_0 = arith.constant 0 : i32
    %c0_i32_1 = arith.constant 0 : i32
    return %c0_i32, %c0_i32_0 : i32, i32
  }
  func.func @transform_3(%arg0: i32) -> (i32, i32) {
    %c0_i32 = arith.constant 0 : i32
    %c0_i32_0 = arith.constant 0 : i32
    %c0_i32_1 = arith.constant 0 : i32
    return %c0_i32, %c0_i32_0 : i32, i32
  }
  func.func @transform_4(%arg0: i32) -> (i32, i32) {
    %c0_i32 = arith.constant 0 : i32
    %c0_i32_0 = arith.constant 0 : i32
    return %arg0, %c0_i32 : i32, i32
  }
}

</mosaic_0001>

<llo_original>
// kernel: _logmel_pallas.1
$region0: #{_logmel_pallas.1}
  #allocation0 [shape = 'u32[]', space=smem, size = 0x4, offset = 0x4, fixed_abs, tag = 'smem constant byte address 0x4 - core index']
  #allocation1 [shape = 'u32[144,128]{1,0:T(1,128)}', space=vmem, size = 0x12000, scoped, tag = 'internal scratch']
  #allocation2 [shape = 'f32[136,256]{1,0:T(8,128)}', space=vmem, size = 0x22000, scoped, tag = 'scratch operand']
  %s0 = inlined_call_operand.hbm [shape: f32[128,256], index: 0, kind: input, shape index: {}]
  %s1 = inlined_call_operand.hbm [shape: f32[1,8,256], index: 1, kind: input, shape index: {}]
  %s2 = inlined_call_operand.hbm [shape: bf16[1024,1024], index: 2, kind: input, shape index: {}]
  %s3 = inlined_call_operand.hbm [shape: bf16[512,128], index: 3, kind: input, shape index: {}]
  %s4 = inlined_call_operand.hbm [shape: f32[128,128], index: 4, kind: output, shape index: {}]
  %s5 = sld [smem:[#allocation0]]
  $region42: #{_logmel_pallas.1} parent=0
    _
  %s7 = ssub.s32 1, %s5
  %s8 = scalar_select 0, %s7, %s5
  $region1: #{_logmel_pallas.1} parent=0
    #allocation3 [shape = 'u8[131072]{0}', space=vmem, size = 0x20000, scoped, tag = 'input window, operand 0, single buffered']
    #allocation4 [shape = 's32[1]{0}', space=sflag, size = 0x4, scoped, tag = 'scoped memory for _logmel_pallas.1']
    #allocation5 [shape = 's32[1]{0}', space=sflag, size = 0x4, scoped, tag = 'scoped memory for _logmel_pallas.1']
    #allocation6 [shape = 'u8[8192]{0}', space=vmem, size = 0x2000, scoped, tag = 'input window, operand 1, single buffered']
    #allocation7 [shape = 's32[1]{0}', space=sflag, size = 0x4, scoped, tag = 'scoped memory for _logmel_pallas.1']
    #allocation8 [shape = 'u8[2097152]{0}', space=vmem, size = 0x200000, scoped, tag = 'input window, operand 2, single buffered']
    #allocation9 [shape = 'u8[131072]{0}', space=vmem, size = 0x20000, scoped, tag = 'input window, operand 3, single buffered']
    #allocation10 [shape = 's32[1]{0}', space=sflag, size = 0x4, scoped, tag = 'scoped memory for _logmel_pallas.1']
    #allocation11 [shape = 'u8[65536]{0}', space=vmem, size = 0x10000, scoped, tag = 'output window, operand 0, single buffered']
    %9 = vsyncpa [#allocation4], 0
    %10 = vsyncpa [#allocation7], 0
    %11 = vsyncpa [#allocation10], 0
    %12 = vsyncpa [#allocation5], 0
    // Predicated region
    $region2: #{_logmel_pallas.1} parent=1 // pred_check
      _
    $region3: #{_logmel_pallas.1} parent=1 // pred_check_branch
      %14 = sbr.rel (0) target = $region5
    $region4: #{_logmel_pallas.1} parent=1 // pred_region
      %s16 = ssub.s32 4096, 4096
      %17 = vsyncadd [#allocation4], %s16
      %s18 = sshll.u32 [#allocation3], 4
      %s19 = int_to_ptr.vmem [resolvable:$true] %s18
      %24 = dma.hbm_to_vmem [thread:$0]  %s0, 4096, %s19, [#allocation4], 256, 256, 16
    $region5: #{_logmel_pallas.1} parent=1 // pred_fallthru
      _
    // Predicated region
    $region6: #{_logmel_pallas.1} parent=1 // pred_check
      _
    $region7: #{_logmel_pallas.1} parent=1 // pred_check_branch
      %26 = sbr.rel (0) target = $region9
    $region8: #{_logmel_pallas.1} parent=1 // pred_region
      %s28 = ssub.s32 256, 256
      %29 = vsyncadd [#allocation7], %s28
      %s31 = sshll.u32 [#allocation6], 4
      %s32 = int_to_ptr.vmem [resolvable:$true] %s31
      %34 = dma.hbm_to_vmem [thread:$0]  %s1, 256, %s32, [#allocation7]
    $region9: #{_logmel_pallas.1} parent=1 // pred_fallthru
      _
    // Predicated region
    $region10: #{_logmel_pallas.1} parent=1 // pred_check
      _
    $region11: #{_logmel_pallas.1} parent=1 // pred_check_branch
      %36 = sbr.rel (0) target = $region13
    $region12: #{_logmel_pallas.1} parent=1 // pred_region
      %s38 = ssub.s32 65536, 65536
      %39 = vsyncadd [#allocation7], %s38
      %s40 = sshll.u32 [#allocation8], 4
      %s41 = int_to_ptr.vmem [resolvable:$true] %s40
      %46 = dma.hbm_to_vmem [thread:$0]  %s2, 65536, %s41, [#allocation7], 512, 512, 32
    $region13: #{_logmel_pallas.1} parent=1 // pred_fallthru
      _
    // Predicated region
    $region14: #{_logmel_pallas.1} parent=1 // pred_check
      _
    $region15: #{_logmel_pallas.1} parent=1 // pred_check_branch
      %48 = sbr.rel (0) target = $region17
    $region16: #{_logmel_pallas.1} parent=1 // pred_region
      %s50 = ssub.s32 4096, 4096
      %51 = vsyncadd [#allocation10], %s50
      %s52 = sshll.u32 [#allocation9], 4
      %s53 = int_to_ptr.vmem [resolvable:$true] %s52
      %58 = dma.hbm_to_vmem [thread:$0]  %s3, 4096, %s53, [#allocation10], 64, 64, 4
    $region17: #{_logmel_pallas.1} parent=1 // pred_fallthru
      _
    // Predicated region
    $region18: #{_logmel_pallas.1} parent=1 // pred_check
      _
    $region19: #{_logmel_pallas.1} parent=1 // pred_check_branch
      %60 = sbr.rel (0) target = $region21
    $region20: #{_logmel_pallas.1} parent=1 // pred_region
      %61 = dma.done [#allocation4], 4096
    $region21: #{_logmel_pallas.1} parent=1 // pred_fallthru
      _
    // Predicated region
    $region22: #{_logmel_pallas.1} parent=1 // pred_check
      _
    $region23: #{_logmel_pallas.1} parent=1 // pred_check_branch
      %63 = sbr.rel (0) target = $region25
    $region24: #{_logmel_pallas.1} parent=1 // pred_region
      %64 = dma.done [#allocation7], 256
    $region25: #{_logmel_pallas.1} parent=1 // pred_fallthru
      _
    // Predicated region
    $region26: #{_logmel_pallas.1} parent=1 // pred_check
      _
    $region27: #{_logmel_pallas.1} parent=1 // pred_check_branch
      %66 = sbr.rel (0) target = $region29
    $region28: #{_logmel_pallas.1} parent=1 // pred_region
      %67 = dma.done [#allocation7], 65536
    $region29: #{_logmel_pallas.1} parent=1 // pred_fallthru
      _
    // Predicated region
    $region30: #{_logmel_pallas.1} parent=1 // pred_check
      _
    $region31: #{_logmel_pallas.1} parent=1 // pred_check_branch
      %69 = sbr.rel (0) target = $region33
    $region32: #{_logmel_pallas.1} parent=1 // pred_region
      %70 = dma.done [#allocation10], 4096
    $region33: #{_logmel_pallas.1} parent=1 // pred_fallthru
      _
    %v72 = vld [vmem:[#allocation3] sm:$0xff]
    %v73 = vld [vmem:[#allocation3 + $0x8] sm:$0xff]
    %v74 = vld [vmem:[#allocation3 + $0x10] sm:$0xff]
    %v75 = vld [vmem:[#allocation3 + $0x18] sm:$0xff]
    %v76 = vld [vmem:[#allocation3 + $0x20] sm:$0xff]
    %v77 = vld [vmem:[#allocation3 + $0x28] sm:$0xff]
    %v78 = vld [vmem:[#allocation3 + $0x30] sm:$0xff]
    %v79 = vld [vmem:[#allocation3 + $0x38] sm:$0xff]
    %v80 = vld [vmem:[#allocation3 + $0x40] sm:$0xff]
    %v81 = vld [vmem:[#allocation3 + $0x48] sm:$0xff]
    %v82 = vld [vmem:[#allocation3 + $0x50] sm:$0xff]
    %v83 = vld [vmem:[#allocation3 + $0x58] sm:$0xff]
    %v84 = vld [vmem:[#allocation3 + $0x60] sm:$0xff]
    %v85 = vld [vmem:[#allocation3 + $0x68] sm:$0xff]
    %v86 = vld [vmem:[#allocation3 + $0x70] sm:$0xff]
    %v87 = vld [vmem:[#allocation3 + $0x78] sm:$0xff]
    %v88 = vld [vmem:[#allocation3 + $0x80] sm:$0xff]
    %v89 = vld [vmem:[#allocation3 + $0x88] sm:$0xff]
    %v90 = vld [vmem:[#allocation3 + $0x90] sm:$0xff]
    %v91 = vld [vmem:[#allocation3 + $0x98] sm:$0xff]
    %v92 = vld [vmem:[#allocation3 + $0xa0] sm:$0xff]
    %v93 = vld [vmem:[#allocation3 + $0xa8] sm:$0xff]
    %v94 = vld [vmem:[#allocation3 + $0xb0] sm:$0xff]
    %v95 = vld [vmem:[#allocation3 + $0xb8] sm:$0xff]
    %v96 = vld [vmem:[#allocation3 + $0xc0] sm:$0xff]
    %v97 = vld [vmem:[#allocation3 + $0xc8] sm:$0xff]
    %v98 = vld [vmem:[#allocation3 + $0xd0] sm:$0xff]
    %v99 = vld [vmem:[#allocation3 + $0xd8] sm:$0xff]
    %v100 = vld [vmem:[#allocation3 + $0xe0] sm:$0xff]
    %v101 = vld [vmem:[#allocation3 + $0xe8] sm:$0xff]
    %v102 = vld [vmem:[#allocation3 + $0xf0] sm:$0xff]
    %v103 = vld [vmem:[#allocation3 + $0xf8] sm:$0xff]
    %104 = vst [vmem:[#allocation2] sm:$0xff] %v72
    %105 = vst [vmem:[#allocation2 + $0x8] sm:$0xff] %v73
    %106 = vst [vmem:[#allocation2 + $0x10] sm:$0xff] %v74
    %107 = vst [vmem:[#allocation2 + $0x18] sm:$0xff] %v75
    %108 = vst [vmem:[#allocation2 + $0x20] sm:$0xff] %v76
    %109 = vst [vmem:[#allocation2 + $0x28] sm:$0xff] %v77
    %110 = vst [vmem:[#allocation2 + $0x30] sm:$0xff] %v78
    %111 = vst [vmem:[#allocation2 + $0x38] sm:$0xff] %v79
    %112 = vst [vmem:[#allocation2 + $0x40] sm:$0xff] %v80
    %113 = vst [vmem:[#allocation2 + $0x48] sm:$0xff] %v81
    %114 = vst [vmem:[#allocation2 + $0x50] sm:$0xff] %v82
    %115 = vst [vmem:[#allocation2 + $0x58] sm:$0xff] %v83
    %116 = vst [vmem:[#allocation2 + $0x60] sm:$0xff] %v84
    %117 = vst [vmem:[#allocation2 + $0x68] sm:$0xff] %v85
    %118 = vst [vmem:[#allocation2 + $0x70] sm:$0xff] %v86
    %119 = vst [vmem:[#allocation2 + $0x78] sm:$0xff] %v87
    %120 = vst [vmem:[#allocation2 + $0x80] sm:$0xff] %v88
    %121 = vst [vmem:[#allocation2 + $0x88] sm:$0xff] %v89
    %122 = vst [vmem:[#allocation2 + $0x90] sm:$0xff] %v90
    %123 = vst [vmem:[#allocation2 + $0x98] sm:$0xff] %v91
    %124 = vst [vmem:[#allocation2 + $0xa0] sm:$0xff] %v92
    %125 = vst [vmem:[#allocation2 + $0xa8] sm:$0xff] %v93
    %126 = vst [vmem:[#allocation2 + $0xb0] sm:$0xff] %v94
    %127 = vst [vmem:[#allocation2 + $0xb8] sm:$0xff] %v95
    %128 = vst [vmem:[#allocation2 + $0xc0] sm:$0xff] %v96
    %129 = vst [vmem:[#allocation2 + $0xc8] sm:$0xff] %v97
    %130 = vst [vmem:[#allocation2 + $0xd0] sm:$0xff] %v98
    %131 = vst [vmem:[#allocation2 + $0xd8] sm:$0xff] %v99
    %132 = vst [vmem:[#allocation2 + $0xe0] sm:$0xff] %v100
    %133 = vst [vmem:[#allocation2 + $0xe8] sm:$0xff] %v101
    %134 = vst [vmem:[#allocation2 + $0xf0] sm:$0xff] %v102
    %135 = vst [vmem:[#allocation2 + $0xf8] sm:$0xff] %v103
    %v136 = vld [vmem:[#allocation6] sm:$0xff]
    %v137 = vld [vmem:[#allocation6 + $0x8] sm:$0xff]
    %138 = vst [vmem:[#allocation2 + $0x100] sm:$0xff] %v136
    %139 = vst [vmem:[#allocation2 + $0x108] sm:$0xff] %v137
    %v140 = vld [vmem:[#allocation2] sm:$0xff]
    %v141 = vld [vmem:[#allocation2 + $0x8] sm:$0xff]
    %v142 = vld [vmem:[#allocation2 + $0x10] sm:$0xff]
    %v143 = vld [vmem:[#allocation2 + $0x18] sm:$0xff]
    %v144 = vld [vmem:[#allocation2 + $0x20] sm:$0xff]
    %v145 = vld [vmem:[#allocation2 + $0x28] sm:$0xff]
    %v146 = vld [vmem:[#allocation2 + $0x30] sm:$0xff]
    %v147 = vld [vmem:[#allocation2 + $0x38] sm:$0xff]
    %v148 = vld [vmem:[#allocation2 + $0x40] sm:$0xff]
    %v149 = vld [vmem:[#allocation2 + $0x48] sm:$0xff]
    %v150 = vld [vmem:[#allocation2 + $0x50] sm:$0xff]
    %v151 = vld [vmem:[#allocation2 + $0x58] sm:$0xff]
    %v152 = vld [vmem:[#allocation2 + $0x60] sm:$0xff]
    %v153 = vld [vmem:[#allocation2 + $0x68] sm:$0xff]
    %v154 = vld [vmem:[#allocation2 + $0x70] sm:$0xff]
    %v155 = vld [vmem:[#allocation2 + $0x78] sm:$0xff]
    %v156 = vld [vmem:[#allocation2 + $0x80] sm:$0xff]
    %v157 = vld [vmem:[#allocation2 + $0x88] sm:$0xff]
    %v158 = vld [vmem:[#allocation2 + $0x90] sm:$0xff]
    %v159 = vld [vmem:[#allocation2 + $0x98] sm:$0xff]
    %v160 = vld [vmem:[#allocation2 + $0xa0] sm:$0xff]
    %v161 = vld [vmem:[#allocation2 + $0xa8] sm:$0xff]
    %v162 = vld [vmem:[#allocation2 + $0xb0] sm:$0xff]
    %v163 = vld [vmem:[#allocation2 + $0xb8] sm:$0xff]
    %v164 = vld [vmem:[#allocation2 + $0xc0] sm:$0xff]
    %v165 = vld [vmem:[#allocation2 + $0xc8] sm:$0xff]
    %v166 = vld [vmem:[#allocation2 + $0xd0] sm:$0xff]
    %v167 = vld [vmem:[#allocation2 + $0xd8] sm:$0xff]
    %v168 = vld [vmem:[#allocation2 + $0xe0] sm:$0xff]
    %v169 = vld [vmem:[#allocation2 + $0xe8] sm:$0xff]
    %v170 = vld [vmem:[#allocation2 + $0xf0] sm:$0xff]
    %v171 = vld [vmem:[#allocation2 + $0xf8] sm:$0xff]
    %v172 = vpack.c.bf16 %v142, %v140
    %v173 = vpack.c.bf16 %v143, %v141
    %v174 = vpack.c.bf16 %v146, %v144
    %v175 = vpack.c.bf16 %v147, %v145
    %v176 = vpack.c.bf16 %v150, %v148
    %v177 = vpack.c.bf16 %v151, %v149
    %v178 = vpack.c.bf16 %v154, %v152
    %v179 = vpack.c.bf16 %v155, %v153
    %v180 = vpack.c.bf16 %v158, %v156
    %v181 = vpack.c.bf16 %v159, %v157
    %v182 = vpack.c.bf16 %v162, %v160
    %v183 = vpack.c.bf16 %v163, %v161
    %v184 = vpack.c.bf16 %v166, %v164
    %v185 = vpack.c.bf16 %v167, %v165
    %v186 = vpack.c.bf16 %v170, %v168
    %v187 = vpack.c.bf16 %v171, %v169
    %v188 = vld [vmem:[#allocation2] sm:$0xfe]
    %v189 = vld [vmem:[#allocation2 + $0x8] sm:$0xfe]
    %v190 = vld [vmem:[#allocation2 + $0x10] sm:$0xff]
    %v191 = vld [vmem:[#allocation2 + $0x18] sm:$0xff]
    %v192 = vld [vmem:[#allocation2 + $0x20] sm:$0xff]
    %v193 = vld [vmem:[#allocation2 + $0x28] sm:$0xff]
    %v194 = vld [vmem:[#allocation2 + $0x30] sm:$0xff]
    %v195 = vld [vmem:[#allocation2 + $0x38] sm:$0xff]
    %v196 = vld [vmem:[#allocation2 + $0x40] sm:$0xff]
    %v197 = vld [vmem:[#allocation2 + $0x48] sm:$0xff]
    %v198 = vld [vmem:[#allocation2 + $0x50] sm:$0xff]
    %v199 = vld [vmem:[#allocation2 + $0x58] sm:$0xff]
    %v200 = vld [vmem:[#allocation2 + $0x60] sm:$0xff]
    %v201 = vld [vmem:[#allocation2 + $0x68] sm:$0xff]
    %v202 = vld [vmem:[#allocation2 + $0x70] sm:$0xff]
    %v203 = vld [vmem:[#allocation2 + $0x78] sm:$0xff]
    %v204 = vld [vmem:[#allocation2 + $0x80] sm:$0xff]
    %v205 = vld [vmem:[#allocation2 + $0x88] sm:$0xff]
    %v206 = vld [vmem:[#allocation2 + $0x90] sm:$0xff]
    %v207 = vld [vmem:[#allocation2 + $0x98] sm:$0xff]
    %v208 = vld [vmem:[#allocation2 + $0xa0] sm:$0xff]
    %v209 = vld [vmem:[#allocation2 + $0xa8] sm:$0xff]
    %v210 = vld [vmem:[#allocation2 + $0xb0] sm:$0xff]
    %v211 = vld [vmem:[#allocation2 + $0xb8] sm:$0xff]
    %v212 = vld [vmem:[#allocation2 + $0xc0] sm:$0xff]
    %v213 = vld [vmem:[#allocation2 + $0xc8] sm:$0xff]
    %v214 = vld [vmem:[#allocation2 + $0xd0] sm:$0xff]
    %v215 = vld [vmem:[#allocation2 + $0xd8] sm:$0xff]
    %v216 = vld [vmem:[#allocation2 + $0xe0] sm:$0xff]
    %v217 = vld [vmem:[#allocation2 + $0xe8] sm:$0xff]
    %v218 = vld [vmem:[#allocation2 + $0xf0] sm:$0xff]
    %v219 = vld [vmem:[#allocation2 + $0xf8] sm:$0xff]
    %v220 = vld [vmem:[#allocation2 + $0x100] sm:$0x1]
    %v221 = vld [vmem:[#allocation2 + $0x108] sm:$0x1]
    %v222 = vpack.c.bf16 %v190, %v188
    %v223 = vpack.c.bf16 %v191, %v189
    %v224 = vpack.c.bf16 %v194, %v192
    %v225 = vpack.c.bf16 %v195, %v193
    %v226 = vpack.c.bf16 %v198, %v196
    %v227 = vpack.c.bf16 %v199, %v197
    %v228 = vpack.c.bf16 %v202, %v200
    %v229 = vpack.c.bf16 %v203, %v201
    %v230 = vpack.c.bf16 %v206, %v204
    %v231 = vpack.c.bf16 %v207, %v205
    %v232 = vpack.c.bf16 %v210, %v208
    %v233 = vpack.c.bf16 %v211, %v209
    %v234 = vpack.c.bf16 %v214, %v212
    %v235 = vpack.c.bf16 %v215, %v213
    %v236 = vpack.c.bf16 %v218, %v216
    %v237 = vpack.c.bf16 %v219, %v217
    %v238 = vpack.c.bf16 %v220, %v220
    %v239 = vpack.c.bf16 %v221, %v221
    %v240 = vld [vmem:[#allocation2] sm:$0xfc]
    %v241 = vld [vmem:[#allocation2 + $0x8] sm:$0xfc]
    %v242 = vld [vmem:[#allocation2 + $0x100] sm:$0x3]
    %v243 = vld [vmem:[#allocation2 + $0x108] sm:$0x3]
    %v244 = vpack.c.bf16 %v190, %v240
    %v245 = vpack.c.bf16 %v191, %v241
    %v246 = vpack.c.bf16 %v242, %v242
    %v247 = vpack.c.bf16 %v243, %v243
    %v248 = vld [vmem:[#allocation2] sm:$0xf8]
    %v249 = vld [vmem:[#allocation2 + $0x8] sm:$0xf8]
    %v250 = vld [vmem:[#allocation2 + $0x100] sm:$0x7]
    %v251 = vld [vmem:[#allocation2 + $0x108] sm:$0x7]
    %v252 = vpack.c.bf16 %v190, %v248
    %v253 = vpack.c.bf16 %v191, %v249
    %v254 = vpack.c.bf16 %v250, %v250
    %v255 = vpack.c.bf16 %v251, %v251
    %vm256 = vsmask.f32 7424
    %v258 = vshrl.u32 %v222, 16
    %v260 = vshll.u32 %v222, 16
    %v262 = vrot.slane %v260, 1
    %v263 = vor.u32 %v258, %v262
    %v265 = vshll.u32 %v224, 16
    %v267 = vrot.slane %v265, 1
    %v268 = vsel %vm256, %v263, %v267
    %v270 = vshrl.u32 %v223, 16
    %v272 = vshll.u32 %v223, 16
    %v274 = vrot.slane %v272, 1
    %v275 = vor.u32 %v270, %v274
    %v277 = vshll.u32 %v225, 16
    %v279 = vrot.slane %v277, 1
    %v280 = vsel %vm256, %v275, %v279
    %v281 = vshrl.u32 %v224, 16
    %v283 = vor.u32 %v281, %v267
    %v285 = vshll.u32 %v226, 16
    %v287 = vrot.slane %v285, 1
    %v288 = vsel %vm256, %v283, %v287
    %v289 = vshrl.u32 %v225, 16
    %v291 = vor.u32 %v289, %v279
    %v293 = vshll.u32 %v227, 16
    %v295 = vrot.slane %v293, 1
    %v296 = vsel %vm256, %v291, %v295
    %v297 = vshrl.u32 %v226, 16
    %v299 = vor.u32 %v297, %v287
    %v301 = vshll.u32 %v228, 16
    %v303 = vrot.slane %v301, 1
    %v304 = vsel %vm256, %v299, %v303
    %v305 = vshrl.u32 %v227, 16
    %v307 = vor.u32 %v305, %v295
    %v309 = vshll.u32 %v229, 16
    %v311 = vrot.slane %v309, 1
    %v312 = vsel %vm256, %v307, %v311
    %v313 = vshrl.u32 %v228, 16
    %v315 = vor.u32 %v313, %v303
    %v317 = vshll.u32 %v230, 16
    %v319 = vrot.slane %v317, 1
    %v320 = vsel %vm256, %v315, %v319
    %v321 = vshrl.u32 %v229, 16
    %v323 = vor.u32 %v321, %v311
    %v325 = vshll.u32 %v231, 16
    %v327 = vrot.slane %v325, 1
    %v328 = vsel %vm256, %v323, %v327
    %v329 = vshrl.u32 %v230, 16
    %v331 = vor.u32 %v329, %v319
    %v333 = vshll.u32 %v232, 16
    %v335 = vrot.slane %v333, 1
    %v336 = vsel %vm256, %v331, %v335
    %v337 = vshrl.u32 %v231, 16
    %v339 = vor.u32 %v337, %v327
    %v341 = vshll.u32 %v233, 16
    %v343 = vrot.slane %v341, 1
    %v344 = vsel %vm256, %v339, %v343
    %v345 = vshrl.u32 %v232, 16
    %v347 = vor.u32 %v345, %v335
    %v349 = vshll.u32 %v234, 16
    %v351 = vrot.slane %v349, 1
    %v352 = vsel %vm256, %v347, %v351
    %v353 = vshrl.u32 %v233, 16
    %v355 = vor.u32 %v353, %v343
    %v357 = vshll.u32 %v235, 16
    %v359 = vrot.slane %v357, 1
    %v360 = vsel %vm256, %v355, %v359
    %v361 = vshrl.u32 %v234, 16
    %v363 = vor.u32 %v361, %v351
    %v365 = vshll.u32 %v236, 16
    %v367 = vrot.slane %v365, 1
    %v368 = vsel %vm256, %v363, %v367
    %v369 = vshrl.u32 %v235, 16
    %v371 = vor.u32 %v369, %v359
    %v373 = vshll.u32 %v237, 16
    %v375 = vrot.slane %v373, 1
    %v376 = vsel %vm256, %v371, %v375
    %v377 = vshrl.u32 %v236, 16
    %v379 = vor.u32 %v377, %v367
    %v381 = vshll.u32 %v238, 16
    %v383 = vrot.slane %v381, 1
    %v384 = vsel %vm256, %v379, %v383
    %v385 = vshrl.u32 %v237, 16
    %v387 = vor.u32 %v385, %v375
    %v389 = vshll.u32 %v239, 16
    %v391 = vrot.slane %v389, 1
    %v392 = vsel %vm256, %v387, %v391
    %vm427 = vcmask 1046528
    %v428 = vrot.slane %v244, 1
    %v429 = vrot.slane %v224, 1
    %v430 = vsel %vm427, %v428, %v429
    %v431 = vrot.slane %v245, 1
    %v432 = vrot.slane %v225, 1
    %v433 = vsel %vm427, %v431, %v432
    %v434 = vrot.slane %v226, 1
    %v435 = vsel %vm427, %v429, %v434
    %v436 = vrot.slane %v227, 1
    %v437 = vsel %vm427, %v432, %v436
    %v438 = vrot.slane %v228, 1
    %v439 = vsel %vm427, %v434, %v438
    %v440 = vrot.slane %v229, 1
    %v441 = vsel %vm427, %v436, %v440
    %v442 = vrot.slane %v230, 1
    %v443 = vsel %vm427, %v438, %v442
    %v444 = vrot.slane %v231, 1
    %v445 = vsel %vm427, %v440, %v444
    %v446 = vrot.slane %v232, 1
    %v447 = vsel %vm427, %v442, %v446
    %v448 = vrot.slane %v233, 1
    %v449 = vsel %vm427, %v444, %v448
    %v450 = vrot.slane %v234, 1
    %v451 = vsel %vm427, %v446, %v450
    %v452 = vrot.slane %v235, 1
    %v453 = vsel %vm427, %v448, %v452
    %v454 = vrot.slane %v236, 1
    %v455 = vsel %vm427, %v450, %v454
    %v456 = vrot.slane %v237, 1
    %v457 = vsel %vm427, %v452, %v456
    %v458 = vrot.slane %v246, 1
    %v459 = vsel %vm427, %v454, %v458
    %v460 = vrot.slane %v247, 1
    %v461 = vsel %vm427, %v456, %v460
    %vm478 = vsmask.f32 6400
    %v480 = vshrl.u32 %v252, 16
    %v482 = vrot.slane %v480, 1
    %v483 = vshll.u32 %v252, 16
    %v485 = vrot.slane %v483, 2
    %v486 = vor.u32 %v482, %v485
    %v487 = vrot.slane %v281, 1
    %v488 = vrot.slane %v265, 2
    %v489 = vor.u32 %v487, %v488
    %v490 = vsel %vm478, %v486, %v489
    %v492 = vshrl.u32 %v253, 16
    %v494 = vrot.slane %v492, 1
    %v495 = vshll.u32 %v253, 16
    %v497 = vrot.slane %v495, 2
    %v498 = vor.u32 %v494, %v497
    %v499 = vrot.slane %v289, 1
    %v500 = vrot.slane %v277, 2
    %v501 = vor.u32 %v499, %v500
    %v502 = vsel %vm478, %v498, %v501
    %v503 = vrot.slane %v297, 1
    %v504 = vrot.slane %v285, 2
    %v505 = vor.u32 %v503, %v504
    %v506 = vsel %vm478, %v489, %v505
    %v507 = vrot.slane %v305, 1
    %v508 = vrot.slane %v293, 2
    %v509 = vor.u32 %v507, %v508
    %v510 = vsel %vm478, %v501, %v509
    %v511 = vrot.slane %v313, 1
    %v512 = vrot.slane %v301, 2
    %v513 = vor.u32 %v511, %v512
    %v514 = vsel %vm478, %v505, %v513
    %v515 = vrot.slane %v321, 1
    %v516 = vrot.slane %v309, 2
    %v517 = vor.u32 %v515, %v516
    %v518 = vsel %vm478, %v509, %v517
    %v519 = vrot.slane %v329, 1
    %v520 = vrot.slane %v317, 2
    %v521 = vor.u32 %v519, %v520
    %v522 = vsel %vm478, %v513, %v521
    %v523 = vrot.slane %v337, 1
    %v524 = vrot.slane %v325, 2
    %v525 = vor.u32 %v523, %v524
    %v526 = vsel %vm478, %v517, %v525
    %v527 = vrot.slane %v345, 1
    %v528 = vrot.slane %v333, 2
    %v529 = vor.u32 %v527, %v528
    %v530 = vsel %vm478, %v521, %v529
    %v531 = vrot.slane %v353, 1
    %v532 = vrot.slane %v341, 2
    %v533 = vor.u32 %v531, %v532
    %v534 = vsel %vm478, %v525, %v533
    %v535 = vrot.slane %v361, 1
    %v536 = vrot.slane %v349, 2
    %v537 = vor.u32 %v535, %v536
    %v538 = vsel %vm478, %v529, %v537
    %v539 = vrot.slane %v369, 1
    %v540 = vrot.slane %v357, 2
    %v541 = vor.u32 %v539, %v540
    %v542 = vsel %vm478, %v533, %v541
    %v543 = vrot.slane %v377, 1
    %v544 = vrot.slane %v365, 2
    %v545 = vor.u32 %v543, %v544
    %v546 = vsel %vm478, %v537, %v545
    %v547 = vrot.slane %v385, 1
    %v548 = vrot.slane %v373, 2
    %v549 = vor.u32 %v547, %v548
    %v550 = vsel %vm478, %v541, %v549
    %v552 = vshrl.u32 %v254, 16
    %v554 = vrot.slane %v552, 1
    %v555 = vshll.u32 %v254, 16
    %v557 = vrot.slane %v555, 2
    %v558 = vor.u32 %v554, %v557
    %v559 = vsel %vm478, %v545, %v558
    %v561 = vshrl.u32 %v255, 16
    %v563 = vrot.slane %v561, 1
    %v564 = vshll.u32 %v255, 16
    %v566 = vrot.slane %v564, 2
    %v567 = vor.u32 %v563, %v566
    %v568 = vsel %vm478, %v549, %v567
    %v585 = vld [vmem:[#allocation8] sm:$0xff]
    %v586 = vld [vmem:[#allocation8 + $0x8] sm:$0xff]
    %v587 = vld [vmem:[#allocation8 + $0x10] sm:$0xff]
    %v588 = vld [vmem:[#allocation8 + $0x18] sm:$0xff]
    %v589 = vld [vmem:[#allocation8 + $0x20] sm:$0xff]
    %v590 = vld [vmem:[#allocation8 + $0x28] sm:$0xff]
    %v591 = vld [vmem:[#allocation8 + $0x30] sm:$0xff]
    %v592 = vld [vmem:[#allocation8 + $0x38] sm:$0xff]
    %v593 = vld [vmem:[#allocation8 + $0x40] sm:$0xff]
    %v594 = vld [vmem:[#allocation8 + $0x48] sm:$0xff]
    %v595 = vld [vmem:[#allocation8 + $0x50] sm:$0xff]
    %v596 = vld [vmem:[#allocation8 + $0x58] sm:$0xff]
    %v597 = vld [vmem:[#allocation8 + $0x60] sm:$0xff]
    %v598 = vld [vmem:[#allocation8 + $0x68] sm:$0xff]
    %v599 = vld [vmem:[#allocation8 + $0x70] sm:$0xff]
    %v600 = vld [vmem:[#allocation8 + $0x78] sm:$0xff]
    %v601 = vld [vmem:[#allocation8 + $0x80] sm:$0xff]
    %v602 = vld [vmem:[#allocation8 + $0x88] sm:$0xff]
    %v603 = vld [vmem:[#allocation8 + $0x90] sm:$0xff]
    %v604 = vld [vmem:[#allocation8 + $0x98] sm:$0xff]
    %v605 = vld [vmem:[#allocation8 + $0xa0] sm:$0xff]
    %v606 = vld [vmem:[#allocation8 + $0xa8] sm:$0xff]
    %v607 = vld [vmem:[#allocation8 + $0xb0] sm:$0xff]
    %v608 = vld [vmem:[#allocation8 + $0xb8] sm:$0xff]
    %v609 = vld [vmem:[#allocation8 + $0xc0] sm:$0xff]
    %v610 = vld [vmem:[#allocation8 + $0xc8] sm:$0xff]
    %v611 = vld [vmem:[#allocation8 + $0xd0] sm:$0xff]
    %v612 = vld [vmem:[#allocation8 + $0xd8] sm:$0xff]
    %v613 = vld [vmem:[#allocation8 + $0xe0] sm:$0xff]
    %v614 = vld [vmem:[#allocation8 + $0xe8] sm:$0xff]
    %v615 = vld [vmem:[#allocation8 + $0xf0] sm:$0xff]
    %v616 = vld [vmem:[#allocation8 + $0xf8] sm:$0xff]
    %v617 = vld [vmem:[#allocation8 + $0x100] sm:$0xff]
    %v618 = vld [vmem:[#allocation8 + $0x108] sm:$0xff]
    %v619 = vld [vmem:[#allocation8 + $0x110] sm:$0xff]
    %v620 = vld [vmem:[#allocation8 + $0x118] sm:$0xff]
    %v621 = vld [vmem:[#allocation8 + $0x120] sm:$0xff]
    %v622 = vld [vmem:[#allocation8 + $0x128] sm:$0xff]
    %v623 = vld [vmem:[#allocation8 + $0x130] sm:$0xff]
    %v624 = vld [vmem:[#allocation8 + $0x138] sm:$0xff]
    %v625 = vld [vmem:[#allocation8 + $0x140] sm:$0xff]
    %v626 = vld [vmem:[#allocation8 + $0x148] sm:$0xff]
    %v627 = vld [vmem:[#allocation8 + $0x150] sm:$0xff]
    %v628 = vld [vmem:[#allocation8 + $0x158] sm:$0xff]
    %v629 = vld [vmem:[#allocation8 + $0x160] sm:$0xff]
    %v630 = vld [vmem:[#allocation8 + $0x168] sm:$0xff]
    %v631 = vld [vmem:[#allocation8 + $0x170] sm:$0xff]
    %v632 = vld [vmem:[#allocation8 + $0x178] sm:$0xff]
    %v633 = vld [vmem:[#allocation8 + $0x180] sm:$0xff]
    %v634 = vld [vmem:[#allocation8 + $0x188] sm:$0xff]
    %v635 = vld [vmem:[#allocation8 + $0x190] sm:$0xff]
    %v636 = vld [vmem:[#allocation8 + $0x198] sm:$0xff]
    %v637 = vld [vmem:[#allocation8 + $0x1a0] sm:$0xff]
    %v638 = vld [vmem:[#allocation8 + $0x1a8] sm:$0xff]
    %v639 = vld [vmem:[#allocation8 + $0x1b0] sm:$0xff]
    %v640 = vld [vmem:[#allocation8 + $0x1b8] sm:$0xff]
    %v641 = vld [vmem:[#allocation8 + $0x1c0] sm:$0xff]
    %v642 = vld [vmem:[#allocation8 + $0x1c8] sm:$0xff]
    %v643 = vld [vmem:[#allocation8 + $0x1d0] sm:$0xff]
    %v644 = vld [vmem:[#allocation8 + $0x1d8] sm:$0xff]
    %v645 = vld [vmem:[#allocation8 + $0x1e0] sm:$0xff]
    %v646 = vld [vmem:[#allocation8 + $0x1e8] sm:$0xff]
    %v647 = vld [vmem:[#allocation8 + $0x1f0] sm:$0xff]
    %v648 = vld [vmem:[#allocation8 + $0x1f8] sm:$0xff]
    %v649 = vld [vmem:[#allocation8 + $0x200] sm:$0xff]
    %v650 = vld [vmem:[#allocation8 + $0x208] sm:$0xff]
    %v651 = vld [vmem:[#allocation8 + $0x210] sm:$0xff]
    %v652 = vld [vmem:[#allocation8 + $0x218] sm:$0xff]
    %v653 = vld [vmem:[#allocation8 + $0x220] sm:$0xff]
    %v654 = vld [vmem:[#allocation8 + $0x228] sm:$0xff]
    %v655 = vld [vmem:[#allocation8 + $0x230] sm:$0xff]
    %v656 = vld [vmem:[#allocation8 + $0x238] sm:$0xff]
    %v657 = vld [vmem:[#allocation8 + $0x240] sm:$0xff]
    %v658 = vld [vmem:[#allocation8 + $0x248] sm:$0xff]
    %v659 = vld [vmem:[#allocation8 + $0x250] sm:$0xff]
    %v660 = vld [vmem:[#allocation8 + $0x258] sm:$0xff]
    %v661 = vld [vmem:[#allocation8 + $0x260] sm:$0xff]
    %v662 = vld [vmem:[#allocation8 + $0x268] sm:$0xff]
    %v663 = vld [vmem:[#allocation8 + $0x270] sm:$0xff]
    %v664 = vld [vmem:[#allocation8 + $0x278] sm:$0xff]
    %v665 = vld [vmem:[#allocation8 + $0x280] sm:$0xff]
    %v666 = vld [vmem:[#allocation8 + $0x288] sm:$0xff]
    %v667 = vld [vmem:[#allocation8 + $0x290] sm:$0xff]
    %v668 = vld [vmem:[#allocation8 + $0x298] sm:$0xff]
    %v669 = vld [vmem:[#allocation8 + $0x2a0] sm:$0xff]
    %v670 = vld [vmem:[#allocation8 + $0x2a8] sm:$0xff]
    %v671 = vld [vmem:[#allocation8 + $0x2b0] sm:$0xff]
    %v672 = vld [vmem:[#allocation8 + $0x2b8] sm:$0xff]
    %v673 = vld [vmem:[#allocation8 + $0x2c0] sm:$0xff]
    %v674 = vld [vmem:[#allocation8 + $0x2c8] sm:$0xff]
    %v675 = vld [vmem:[#allocation8 + $0x2d0] sm:$0xff]
    %v676 = vld [vmem:[#allocation8 + $0x2d8] sm:$0xff]
    %v677 = vld [vmem:[#allocation8 + $0x2e0] sm:$0xff]
    %v678 = vld [vmem:[#allocation8 + $0x2e8] sm:$0xff]
    %v679 = vld [vmem:[#allocation8 + $0x2f0] sm:$0xff]
    %v680 = vld [vmem:[#allocation8 + $0x2f8] sm:$0xff]
    %v681 = vld [vmem:[#allocation8 + $0x300] sm:$0xff]
    %v682 = vld [vmem:[#allocation8 + $0x308] sm:$0xff]
    %v683 = vld [vmem:[#allocation8 + $0x310] sm:$0xff]
    %v684 = vld [vmem:[#allocation8 + $0x318] sm:$0xff]
    %v685 = vld [vmem:[#allocation8 + $0x320] sm:$0xff]
    %v686 = vld [vmem:[#allocation8 + $0x328] sm:$0xff]
    %v687 = vld [vmem:[#allocation8 + $0x330] sm:$0xff]
    %v688 = vld [vmem:[#allocation8 + $0x338] sm:$0xff]
    %v689 = vld [vmem:[#allocation8 + $0x340] sm:$0xff]
    %v690 = vld [vmem:[#allocation8 + $0x348] sm:$0xff]
    %v691 = vld [vmem:[#allocation8 + $0x350] sm:$0xff]
    %v692 = vld [vmem:[#allocation8 + $0x358] sm:$0xff]
    %v693 = vld [vmem:[#allocation8 + $0x360] sm:$0xff]
    %v694 = vld [vmem:[#allocation8 + $0x368] sm:$0xff]
    %v695 = vld [vmem:[#allocation8 + $0x370] sm:$0xff]
    %v696 = vld [vmem:[#allocation8 + $0x378] sm:$0xff]
    %v697 = vld [vmem:[#allocation8 + $0x380] sm:$0xff]
    %v698 = vld [vmem:[#allocation8 + $0x388] sm:$0xff]
    %v699 = vld [vmem:[#allocation8 + $0x390] sm:$0xff]
    %v700 = vld [vmem:[#allocation8 + $0x398] sm:$0xff]
    %v701 = vld [vmem:[#allocation8 + $0x3a0] sm:$0xff]
    %v702 = vld [vmem:[#allocation8 + $0x3a8] sm:$0xff]
    %v703 = vld [vmem:[#allocation8 + $0x3b0] sm:$0xff]
    %v704 = vld [vmem:[#allocation8 + $0x3b8] sm:$0xff]
    %v705 = vld [vmem:[#allocation8 + $0x3c0] sm:$0xff]
    %v706 = vld [vmem:[#allocation8 + $0x3c8] sm:$0xff]
    %v707 = vld [vmem:[#allocation8 + $0x3d0] sm:$0xff]
    %v708 = vld [vmem:[#allocation8 + $0x3d8] sm:$0xff]
    %v709 = vld [vmem:[#allocation8 + $0x3e0] sm:$0xff]
    %v710 = vld [vmem:[#allocation8 + $0x3e8] sm:$0xff]
    %v711 = vld [vmem:[#allocation8 + $0x3f0] sm:$0xff]
    %v712 = vld [vmem:[#allocation8 + $0x3f8] sm:$0xff]
    %v713 = vld [vmem:[#allocation8 + $0x400] sm:$0xff]
    %v714 = vld [vmem:[#allocation8 + $0x408] sm:$0xff]
    %v715 = vld [vmem:[#allocation8 + $0x410] sm:$0xff]
    %v716 = vld [vmem:[#allocation8 + $0x418] sm:$0xff]
    %v717 = vld [vmem:[#allocation8 + $0x420] sm:$0xff]
    %v718 = vld [vmem:[#allocation8 + $0x428] sm:$0xff]
    %v719 = vld [vmem:[#allocation8 + $0x430] sm:$0xff]
    %v720 = vld [vmem:[#allocation8 + $0x438] sm:$0xff]
    %v721 = vld [vmem:[#allocation8 + $0x440] sm:$0xff]
    %v722 = vld [vmem:[#allocation8 + $0x448] sm:$0xff]
    %v723 = vld [vmem:[#allocation8 + $0x450] sm:$0xff]
    %v724 = vld [vmem:[#allocation8 + $0x458] sm:$0xff]
    %v725 = vld [vmem:[#allocation8 + $0x460] sm:$0xff]
    %v726 = vld [vmem:[#allocation8 + $0x468] sm:$0xff]
    %v727 = vld [vmem:[#allocation8 + $0x470] sm:$0xff]
    %v728 = vld [vmem:[#allocation8 + $0x478] sm:$0xff]
    %v729 = vld [vmem:[#allocation8 + $0x480] sm:$0xff]
    %v730 = vld [vmem:[#allocation8 + $0x488] sm:$0xff]
    %v731 = vld [vmem:[#allocation8 + $0x490] sm:$0xff]
    %v732 = vld [vmem:[#allocation8 + $0x498] sm:$0xff]
    %v733 = vld [vmem:[#allocation8 + $0x4a0] sm:$0xff]
    %v734 = vld [vmem:[#allocation8 + $0x4a8] sm:$0xff]
    %v735 = vld [vmem:[#allocation8 + $0x4b0] sm:$0xff]
    %v736 = vld [vmem:[#allocation8 + $0x4b8] sm:$0xff]
    %v737 = vld [vmem:[#allocation8 + $0x4c0] sm:$0xff]
    %v738 = vld [vmem:[#allocation8 + $0x4c8] sm:$0xff]
    %v739 = vld [vmem:[#allocation8 + $0x4d0] sm:$0xff]
    %v740 = vld [vmem:[#allocation8 + $0x4d8] sm:$0xff]
    %v741 = vld [vmem:[#allocation8 + $0x4e0] sm:$0xff]
    %v742 = vld [vmem:[#allocation8 + $0x4e8] sm:$0xff]
    %v743 = vld [vmem:[#allocation8 + $0x4f0] sm:$0xff]
    %v744 = vld [vmem:[#allocation8 + $0x4f8] sm:$0xff]
    %v745 = vld [vmem:[#allocation8 + $0x500] sm:$0xff]
    %v746 = vld [vmem:[#allocation8 + $0x508] sm:$0xff]
    %v747 = vld [vmem:[#allocation8 + $0x510] sm:$0xff]
    %v748 = vld [vmem:[#allocation8 + $0x518] sm:$0xff]
    %v749 = vld [vmem:[#allocation8 + $0x520] sm:$0xff]
    %v750 = vld [vmem:[#allocation8 + $0x528] sm:$0xff]
    %v751 = vld [vmem:[#allocation8 + $0x530] sm:$0xff]
    %v752 = vld [vmem:[#allocation8 + $0x538] sm:$0xff]
    %v753 = vld [vmem:[#allocation8 + $0x540] sm:$0xff]
    %v754 = vld [vmem:[#allocation8 + $0x548] sm:$0xff]
    %v755 = vld [vmem:[#allocation8 + $0x550] sm:$0xff]
    %v756 = vld [vmem:[#allocation8 + $0x558] sm:$0xff]
    %v757 = vld [vmem:[#allocation8 + $0x560] sm:$0xff]
    %v758 = vld [vmem:[#allocation8 + $0x568] sm:$0xff]
    %v759 = vld [vmem:[#allocation8 + $0x570] sm:$0xff]
    %v760 = vld [vmem:[#allocation8 + $0x578] sm:$0xff]
    %v761 = vld [vmem:[#allocation8 + $0x580] sm:$0xff]
    %v762 = vld [vmem:[#allocation8 + $0x588] sm:$0xff]
    %v763 = vld [vmem:[#allocation8 + $0x590] sm:$0xff]
    %v764 = vld [vmem:[#allocation8 + $0x598] sm:$0xff]
    %v765 = vld [vmem:[#allocation8 + $0x5a0] sm:$0xff]
    %v766 = vld [vmem:[#allocation8 + $0x5a8] sm:$0xff]
    %v767 = vld [vmem:[#allocation8 + $0x5b0] sm:$0xff]
    %v768 = vld [vmem:[#allocation8 + $0x5b8] sm:$0xff]
    %v769 = vld [vmem:[#allocation8 + $0x5c0] sm:$0xff]
    %v770 = vld [vmem:[#allocation8 + $0x5c8] sm:$0xff]
    %v771 = vld [vmem:[#allocation8 + $0x5d0] sm:$0xff]
    %v772 = vld [vmem:[#allocation8 + $0x5d8] sm:$0xff]
    %v773 = vld [vmem:[#allocation8 + $0x5e0] sm:$0xff]
    %v774 = vld [vmem:[#allocation8 + $0x5e8] sm:$0xff]
    %v775 = vld [vmem:[#allocation8 + $0x5f0] sm:$0xff]
    %v776 = vld [vmem:[#allocation8 + $0x5f8] sm:$0xff]
    %v777 = vld [vmem:[#allocation8 + $0x600] sm:$0xff]
    %v778 = vld [vmem:[#allocation8 + $0x608] sm:$0xff]
    %v779 = vld [vmem:[#allocation8 + $0x610] sm:$0xff]
    %v780 = vld [vmem:[#allocation8 + $0x618] sm:$0xff]
    %v781 = vld [vmem:[#allocation8 + $0x620] sm:$0xff]
    %v782 = vld [vmem:[#allocation8 + $0x628] sm:$0xff]
    %v783 = vld [vmem:[#allocation8 + $0x630] sm:$0xff]
    %v784 = vld [vmem:[#allocation8 + $0x638] sm:$0xff]
    %v785 = vld [vmem:[#allocation8 + $0x640] sm:$0xff]
    %v786 = vld [vmem:[#allocation8 + $0x648] sm:$0xff]
    %v787 = vld [vmem:[#allocation8 + $0x650] sm:$0xff]
    %v788 = vld [vmem:[#allocation8 + $0x658] sm:$0xff]
    %v789 = vld [vmem:[#allocation8 + $0x660] sm:$0xff]
    %v790 = vld [vmem:[#allocation8 + $0x668] sm:$0xff]
    %v791 = vld [vmem:[#allocation8 + $0x670] sm:$0xff]
    %v792 = vld [vmem:[#allocation8 + $0x678] sm:$0xff]
    %v793 = vld [vmem:[#allocation8 + $0x680] sm:$0xff]
    %v794 = vld [vmem:[#allocation8 + $0x688] sm:$0xff]
    %v795 = vld [vmem:[#allocation8 + $0x690] sm:$0xff]
    %v796 = vld [vmem:[#allocation8 + $0x698] sm:$0xff]
    %v797 = vld [vmem:[#allocation8 + $0x6a0] sm:$0xff]
    %v798 = vld [vmem:[#allocation8 + $0x6a8] sm:$0xff]
    %v799 = vld [vmem:[#allocation8 + $0x6b0] sm:$0xff]
    %v800 = vld [vmem:[#allocation8 + $0x6b8] sm:$0xff]
    %v801 = vld [vmem:[#allocation8 + $0x6c0] sm:$0xff]
    %v802 = vld [vmem:[#allocation8 + $0x6c8] sm:$0xff]
    %v803 = vld [vmem:[#allocation8 + $0x6d0] sm:$0xff]
    %v804 = vld [vmem:[#allocation8 + $0x6d8] sm:$0xff]
    %v805 = vld [vmem:[#allocation8 + $0x6e0] sm:$0xff]
    %v806 = vld [vmem:[#allocation8 + $0x6e8] sm:$0xff]
    %v807 = vld [vmem:[#allocation8 + $0x6f0] sm:$0xff]
    %v808 = vld [vmem:[#allocation8 + $0x6f8] sm:$0xff]
    %v809 = vld [vmem:[#allocation8 + $0x700] sm:$0xff]
    %v810 = vld [vmem:[#allocation8 + $0x708] sm:$0xff]
    %v811 = vld [vmem:[#allocation8 + $0x710] sm:$0xff]
    %v812 = vld [vmem:[#allocation8 + $0x718] sm:$0xff]
    %v813 = vld [vmem:[#allocation8 + $0x720] sm:$0xff]
    %v814 = vld [vmem:[#allocation8 + $0x728] sm:$0xff]
    %v815 = vld [vmem:[#allocation8 + $0x730] sm:$0xff]
    %v816 = vld [vmem:[#allocation8 + $0x738] sm:$0xff]
    %v817 = vld [vmem:[#allocation8 + $0x740] sm:$0xff]
    %v818 = vld [vmem:[#allocation8 + $0x748] sm:$0xff]
    %v819 = vld [vmem:[#allocation8 + $0x750] sm:$0xff]
    %v820 = vld [vmem:[#allocation8 + $0x758] sm:$0xff]
    %v821 = vld [vmem:[#allocation8 + $0x760] sm:$0xff]
    %v822 = vld [vmem:[#allocation8 + $0x768] sm:$0xff]
    %v823 = vld [vmem:[#allocation8 + $0x770] sm:$0xff]
    %v824 = vld [vmem:[#allocation8 + $0x778] sm:$0xff]
    %v825 = vld [vmem:[#allocation8 + $0x780] sm:$0xff]
    %v826 = vld [vmem:[#allocation8 + $0x788] sm:$0xff]
    %v827 = vld [vmem:[#allocation8 + $0x790] sm:$0xff]
    %v828 = vld [vmem:[#allocation8 + $0x798] sm:$0xff]
    %v829 = vld [vmem:[#allocation8 + $0x7a0] sm:$0xff]
    %v830 = vld [vmem:[#allocation8 + $0x7a8] sm:$0xff]
    %v831 = vld [vmem:[#allocation8 + $0x7b0] sm:$0xff]
    %v832 = vld [vmem:[#allocation8 + $0x7b8] sm:$0xff]
    %v833 = vld [vmem:[#allocation8 + $0x7c0] sm:$0xff]
    %v834 = vld [vmem:[#allocation8 + $0x7c8] sm:$0xff]
    %v835 = vld [vmem:[#allocation8 + $0x7d0] sm:$0xff]
    %v836 = vld [vmem:[#allocation8 + $0x7d8] sm:$0xff]
    %v837 = vld [vmem:[#allocation8 + $0x7e0] sm:$0xff]
    %v838 = vld [vmem:[#allocation8 + $0x7e8] sm:$0xff]
    %v839 = vld [vmem:[#allocation8 + $0x7f0] sm:$0xff]
    %v840 = vld [vmem:[#allocation8 + $0x7f8] sm:$0xff]
    %v841 = vld [vmem:[#allocation8 + $0x800] sm:$0xff]
    %v842 = vld [vmem:[#allocation8 + $0x808] sm:$0xff]
    %v843 = vld [vmem:[#allocation8 + $0x810] sm:$0xff]
    %v844 = vld [vmem:[#allocation8 + $0x818] sm:$0xff]
    %v845 = vld [vmem:[#allocation8 + $0x820] sm:$0xff]
    %v846 = vld [vmem:[#allocation8 + $0x828] sm:$0xff]
    %v847 = vld [vmem:[#allocation8 + $0x830] sm:$0xff]
    %v848 = vld [vmem:[#allocation8 + $0x838] sm:$0xff]
    %v849 = vld [vmem:[#allocation8 + $0x840] sm:$0xff]
    %v850 = vld [vmem:[#allocation8 + $0x848] sm:$0xff]
    %v851 = vld [vmem:[#allocation8 + $0x850] sm:$0xff]
    %v852 = vld [vmem:[#allocation8 + $0x858] sm:$0xff]
    %v853 = vld [vmem:[#allocation8 + $0x860] sm:$0xff]
    %v854 = vld [vmem:[#allocation8 + $0x868] sm:$0xff]
    %v855 = vld [vmem:[#allocation8 + $0x870] sm:$0xff]
    %v856 = vld [vmem:[#allocation8 + $0x878] sm:$0xff]
    %v857 = vld [vmem:[#allocation8 + $0x880] sm:$0xff]
    %v858 = vld [vmem:[#allocation8 + $0x888] sm:$0xff]
    %v859 = vld [vmem:[#allocation8 + $0x890] sm:$0xff]
    %v860 = vld [vmem:[#allocation8 + $0x898] sm:$0xff]
    %v861 = vld [vmem:[#allocation8 + $0x8a0] sm:$0xff]
    %v862 = vld [vmem:[#allocation8 + $0x8a8] sm:$0xff]
    %v863 = vld [vmem:[#allocation8 + $0x8b0] sm:$0xff]
    %v864 = vld [vmem:[#allocation8 + $0x8b8] sm:$0xff]
    %v865 = vld [vmem:[#allocation8 + $0x8c0] sm:$0xff]
    %v866 = vld [vmem:[#allocation8 + $0x8c8] sm:$0xff]
    %v867 = vld [vmem:[#allocation8 + $0x8d0] sm:$0xff]
    %v868 = vld [vmem:[#allocation8 + $0x8d8] sm:$0xff]
    %v869 = vld [vmem:[#allocation8 + $0x8e0] sm:$0xff]
    %v870 = vld [vmem:[#allocation8 + $0x8e8] sm:$0xff]
    %v871 = vld [vmem:[#allocation8 + $0x8f0] sm:$0xff]
    %v872 = vld [vmem:[#allocation8 + $0x8f8] sm:$0xff]
    %v873 = vld [vmem:[#allocation8 + $0x900] sm:$0xff]
    %v874 = vld [vmem:[#allocation8 + $0x908] sm:$0xff]
    %v875 = vld [vmem:[#allocation8 + $0x910] sm:$0xff]
    %v876 = vld [vmem:[#allocation8 + $0x918] sm:$0xff]
    %v877 = vld [vmem:[#allocation8 + $0x920] sm:$0xff]
    %v878 = vld [vmem:[#allocation8 + $0x928] sm:$0xff]
    %v879 = vld [vmem:[#allocation8 + $0x930] sm:$0xff]
    %v880 = vld [vmem:[#allocation8 + $0x938] sm:$0xff]
    %v881 = vld [vmem:[#allocation8 + $0x940] sm:$0xff]
    %v882 = vld [vmem:[#allocation8 + $0x948] sm:$0xff]
    %v883 = vld [vmem:[#allocation8 + $0x950] sm:$0xff]
    %v884 = vld [vmem:[#allocation8 + $0x958] sm:$0xff]
    %v885 = vld [vmem:[#allocation8 + $0x960] sm:$0xff]
    %v886 = vld [vmem:[#allocation8 + $0x968] sm:$0xff]
    %v887 = vld [vmem:[#allocation8 + $0x970] sm:$0xff]
    %v888 = vld [vmem:[#allocation8 + $0x978] sm:$0xff]
    %v889 = vld [vmem:[#allocation8 + $0x980] sm:$0xff]
    %v890 = vld [vmem:[#allocation8 + $0x988] sm:$0xff]
    %v891 = vld [vmem:[#allocation8 + $0x990] sm:$0xff]
    %v892 = vld [vmem:[#allocation8 + $0x998] sm:$0xff]
    %v893 = vld [vmem:[#allocation8 + $0x9a0] sm:$0xff]
    %v894 = vld [vmem:[#allocation8 + $0x9a8] sm:$0xff]
    %v895 = vld [vmem:[#allocation8 + $0x9b0] sm:$0xff]
    %v896 = vld [vmem:[#allocation8 + $0x9b8] sm:$0xff]
    %v897 = vld [vmem:[#allocation8 + $0x9c0] sm:$0xff]
    %v898 = vld [vmem:[#allocation8 + $0x9c8] sm:$0xff]
    %v899 = vld [vmem:[#allocation8 + $0x9d0] sm:$0xff]
    %v900 = vld [vmem:[#allocation8 + $0x9d8] sm:$0xff]
    %v901 = vld [vmem:[#allocation8 + $0x9e0] sm:$0xff]
    %v902 = vld [vmem:[#allocation8 + $0x9e8] sm:$0xff]
    %v903 = vld [vmem:[#allocation8 + $0x9f0] sm:$0xff]
    %v904 = vld [vmem:[#allocation8 + $0x9f8] sm:$0xff]
    %v905 = vld [vmem:[#allocation8 + $0xa00] sm:$0xff]
    %v906 = vld [vmem:[#allocation8 + $0xa08] sm:$0xff]
    %v907 = vld [vmem:[#allocation8 + $0xa10] sm:$0xff]
    %v908 = vld [vmem:[#allocation8 + $0xa18] sm:$0xff]
    %v909 = vld [vmem:[#allocation8 + $0xa20] sm:$0xff]
    %v910 = vld [vmem:[#allocation8 + $0xa28] sm:$0xff]
    %v911 = vld [vmem:[#allocation8 + $0xa30] sm:$0xff]
    %v912 = vld [vmem:[#allocation8 + $0xa38] sm:$0xff]
    %v913 = vld [vmem:[#allocation8 + $0xa40] sm:$0xff]
    %v914 = vld [vmem:[#allocation8 + $0xa48] sm:$0xff]
    %v915 = vld [vmem:[#allocation8 + $0xa50] sm:$0xff]
    %v916 = vld [vmem:[#allocation8 + $0xa58] sm:$0xff]
    %v917 = vld [vmem:[#allocation8 + $0xa60] sm:$0xff]
    %v918 = vld [vmem:[#allocation8 + $0xa68] sm:$0xff]
    %v919 = vld [vmem:[#allocation8 + $0xa70] sm:$0xff]
    %v920 = vld [vmem:[#allocation8 + $0xa78] sm:$0xff]
    %v921 = vld [vmem:[#allocation8 + $0xa80] sm:$0xff]
    %v922 = vld [vmem:[#allocation8 + $0xa88] sm:$0xff]
    %v923 = vld [vmem:[#allocation8 + $0xa90] sm:$0xff]
    %v924 = vld [vmem:[#allocation8 + $0xa98] sm:$0xff]
    %v925 = vld [vmem:[#allocation8 + $0xaa0] sm:$0xff]
    %v926 = vld [vmem:[#allocation8 + $0xaa8] sm:$0xff]
    %v927 = vld [vmem:[#allocation8 + $0xab0] sm:$0xff]
    %v928 = vld [vmem:[#allocation8 + $0xab8] sm:$0xff]
    %v929 = vld [vmem:[#allocation8 + $0xac0] sm:$0xff]
    %v930 = vld [vmem:[#allocation8 + $0xac8] sm:$0xff]
    %v931 = vld [vmem:[#allocation8 + $0xad0] sm:$0xff]
    %v932 = vld [vmem:[#allocation8 + $0xad8] sm:$0xff]
    %v933 = vld [vmem:[#allocation8 + $0xae0] sm:$0xff]
    %v934 = vld [vmem:[#allocation8 + $0xae8] sm:$0xff]
    %v935 = vld [vmem:[#allocation8 + $0xaf0] sm:$0xff]
    %v936 = vld [vmem:[#allocation8 + $0xaf8] sm:$0xff]
    %v937 = vld [vmem:[#allocation8 + $0xb00] sm:$0xff]
    %v938 = vld [vmem:[#allocation8 + $0xb08] sm:$0xff]
    %v939 = vld [vmem:[#allocation8 + $0xb10] sm:$0xff]
    %v940 = vld [vmem:[#allocation8 + $0xb18] sm:$0xff]
    %v941 = vld [vmem:[#allocation8 + $0xb20] sm:$0xff]
    %v942 = vld [vmem:[#allocation8 + $0xb28] sm:$0xff]
    %v943 = vld [vmem:[#allocation8 + $0xb30] sm:$0xff]
    %v944 = vld [vmem:[#allocation8 + $0xb38] sm:$0xff]
    %v945 = vld [vmem:[#allocation8 + $0xb40] sm:$0xff]
    %v946 = vld [vmem:[#allocation8 + $0xb48] sm:$0xff]
    %v947 = vld [vmem:[#allocation8 + $0xb50] sm:$0xff]
    %v948 = vld [vmem:[#allocation8 + $0xb58] sm:$0xff]
    %v949 = vld [vmem:[#allocation8 + $0xb60] sm:$0xff]
    %v950 = vld [vmem:[#allocation8 + $0xb68] sm:$0xff]
    %v951 = vld [vmem:[#allocation8 + $0xb70] sm:$0xff]
    %v952 = vld [vmem:[#allocation8 + $0xb78] sm:$0xff]
    %v953 = vld [vmem:[#allocation8 + $0xb80] sm:$0xff]
    %v954 = vld [vmem:[#allocation8 + $0xb88] sm:$0xff]
    %v955 = vld [vmem:[#allocation8 + $0xb90] sm:$0xff]
    %v956 = vld [vmem:[#allocation8 + $0xb98] sm:$0xff]
    %v957 = vld [vmem:[#allocation8 + $0xba0] sm:$0xff]
    %v958 = vld [vmem:[#allocation8 + $0xba8] sm:$0xff]
    %v959 = vld [vmem:[#allocation8 + $0xbb0] sm:$0xff]
    %v960 = vld [vmem:[#allocation8 + $0xbb8] sm:$0xff]
    %v961 = vld [vmem:[#allocation8 + $0xbc0] sm:$0xff]
    %v962 = vld [vmem:[#allocation8 + $0xbc8] sm:$0xff]
    %v963 = vld [vmem:[#allocation8 + $0xbd0] sm:$0xff]
    %v964 = vld [vmem:[#allocation8 + $0xbd8] sm:$0xff]
    %v965 = vld [vmem:[#allocation8 + $0xbe0] sm:$0xff]
    %v966 = vld [vmem:[#allocation8 + $0xbe8] sm:$0xff]
    %v967 = vld [vmem:[#allocation8 + $0xbf0] sm:$0xff]
    %v968 = vld [vmem:[#allocation8 + $0xbf8] sm:$0xff]
    %v969 = vld [vmem:[#allocation8 + $0xc00] sm:$0xff]
    %v970 = vld [vmem:[#allocation8 + $0xc08] sm:$0xff]
    %v971 = vld [vmem:[#allocation8 + $0xc10] sm:$0xff]
    %v972 = vld [vmem:[#allocation8 + $0xc18] sm:$0xff]
    %v973 = vld [vmem:[#allocation8 + $0xc20] sm:$0xff]
    %v974 = vld [vmem:[#allocation8 + $0xc28] sm:$0xff]
    %v975 = vld [vmem:[#allocation8 + $0xc30] sm:$0xff]
    %v976 = vld [vmem:[#allocation8 + $0xc38] sm:$0xff]
    %v977 = vld [vmem:[#allocation8 + $0xc40] sm:$0xff]
    %v978 = vld [vmem:[#allocation8 + $0xc48] sm:$0xff]
    %v979 = vld [vmem:[#allocation8 + $0xc50] sm:$0xff]
    %v980 = vld [vmem:[#allocation8 + $0xc58] sm:$0xff]
    %v981 = vld [vmem:[#allocation8 + $0xc60] sm:$0xff]
    %v982 = vld [vmem:[#allocation8 + $0xc68] sm:$0xff]
    %v983 = vld [vmem:[#allocation8 + $0xc70] sm:$0xff]
    %v984 = vld [vmem:[#allocation8 + $0xc78] sm:$0xff]
    %v985 = vld [vmem:[#allocation8 + $0xc80] sm:$0xff]
    %v986 = vld [vmem:[#allocation8 + $0xc88] sm:$0xff]
    %v987 = vld [vmem:[#allocation8 + $0xc90] sm:$0xff]
    %v988 = vld [vmem:[#allocation8 + $0xc98] sm:$0xff]
    %v989 = vld [vmem:[#allocation8 + $0xca0] sm:$0xff]
    %v990 = vld [vmem:[#allocation8 + $0xca8] sm:$0xff]
    %v991 = vld [vmem:[#allocation8 + $0xcb0] sm:$0xff]
    %v992 = vld [vmem:[#allocation8 + $0xcb8] sm:$0xff]
    %v993 = vld [vmem:[#allocation8 + $0xcc0] sm:$0xff]
    %v994 = vld [vmem:[#allocation8 + $0xcc8] sm:$0xff]
    %v995 = vld [vmem:[#allocation8 + $0xcd0] sm:$0xff]
    %v996 = vld [vmem:[#allocation8 + $0xcd8] sm:$0xff]
    %v997 = vld [vmem:[#allocation8 + $0xce0] sm:$0xff]
    %v998 = vld [vmem:[#allocation8 + $0xce8] sm:$0xff]
    %v999 = vld [vmem:[#allocation8 + $0xcf0] sm:$0xff]
    %v1000 = vld [vmem:[#allocation8 + $0xcf8] sm:$0xff]
    %v1001 = vld [vmem:[#allocation8 + $0xd00] sm:$0xff]
    %v1002 = vld [vmem:[#allocation8 + $0xd08] sm:$0xff]
    %v1003 = vld [vmem:[#allocation8 + $0xd10] sm:$0xff]
    %v1004 = vld [vmem:[#allocation8 + $0xd18] sm:$0xff]
    %v1005 = vld [vmem:[#allocation8 + $0xd20] sm:$0xff]
    %v1006 = vld [vmem:[#allocation8 + $0xd28] sm:$0xff]
    %v1007 = vld [vmem:[#allocation8 + $0xd30] sm:$0xff]
    %v1008 = vld [vmem:[#allocation8 + $0xd38] sm:$0xff]
    %v1009 = vld [vmem:[#allocation8 + $0xd40] sm:$0xff]
    %v1010 = vld [vmem:[#allocation8 + $0xd48] sm:$0xff]
    %v1011 = vld [vmem:[#allocation8 + $0xd50] sm:$0xff]
    %v1012 = vld [vmem:[#allocation8 + $0xd58] sm:$0xff]
    %v1013 = vld [vmem:[#allocation8 + $0xd60] sm:$0xff]
    %v1014 = vld [vmem:[#allocation8 + $0xd68] sm:$0xff]
    %v1015 = vld [vmem:[#allocation8 + $0xd70] sm:$0xff]
    %v1016 = vld [vmem:[#allocation8 + $0xd78] sm:$0xff]
    %v1017 = vld [vmem:[#allocation8 + $0xd80] sm:$0xff]
    %v1018 = vld [vmem:[#allocation8 + $0xd88] sm:$0xff]
    %v1019 = vld [vmem:[#allocation8 + $0xd90] sm:$0xff]
    %v1020 = vld [vmem:[#allocation8 + $0xd98] sm:$0xff]
    %v1021 = vld [vmem:[#allocation8 + $0xda0] sm:$0xff]
    %v1022 = vld [vmem:[#allocation8 + $0xda8] sm:$0xff]
    %v1023 = vld [vmem:[#allocation8 + $0xdb0] sm:$0xff]
    %v1024 = vld [vmem:[#allocation8 + $0xdb8] sm:$0xff]
    %v1025 = vld [vmem:[#allocation8 + $0xdc0] sm:$0xff]
    %v1026 = vld [vmem:[#allocation8 + $0xdc8] sm:$0xff]
    %v1027 = vld [vmem:[#allocation8 + $0xdd0] sm:$0xff]
    %v1028 = vld [vmem:[#allocation8 + $0xdd8] sm:$0xff]
    %v1029 = vld [vmem:[#allocation8 + $0xde0] sm:$0xff]
    %v1030 = vld [vmem:[#allocation8 + $0xde8] sm:$0xff]
    %v1031 = vld [vmem:[#allocation8 + $0xdf0] sm:$0xff]
    %v1032 = vld [vmem:[#allocation8 + $0xdf8] sm:$0xff]
    %v1033 = vld [vmem:[#allocation8 + $0xe00] sm:$0xff]
    %v1034 = vld [vmem:[#allocation8 + $0xe08] sm:$0xff]
    %v1035 = vld [vmem:[#allocation8 + $0xe10] sm:$0xff]
    %v1036 = vld [vmem:[#allocation8 + $0xe18] sm:$0xff]
    %v1037 = vld [vmem:[#allocation8 + $0xe20] sm:$0xff]
    %v1038 = vld [vmem:[#allocation8 + $0xe28] sm:$0xff]
    %v1039 = vld [vmem:[#allocation8 + $0xe30] sm:$0xff]
    %v1040 = vld [vmem:[#allocation8 + $0xe38] sm:$0xff]
    %v1041 = vld [vmem:[#allocation8 + $0xe40] sm:$0xff]
    %v1042 = vld [vmem:[#allocation8 + $0xe48] sm:$0xff]
    %v1043 = vld [vmem:[#allocation8 + $0xe50] sm:$0xff]
    %v1044 = vld [vmem:[#allocation8 + $0xe58] sm:$0xff]
    %v1045 = vld [vmem:[#allocation8 + $0xe60] sm:$0xff]
    %v1046 = vld [vmem:[#allocation8 + $0xe68] sm:$0xff]
    %v1047 = vld [vmem:[#allocation8 + $0xe70] sm:$0xff]
    %v1048 = vld [vmem:[#allocation8 + $0xe78] sm:$0xff]
    %v1049 = vld [vmem:[#allocation8 + $0xe80] sm:$0xff]
    %v1050 = vld [vmem:[#allocation8 + $0xe88] sm:$0xff]
    %v1051 = vld [vmem:[#allocation8 + $0xe90] sm:$0xff]
    %v1052 = vld [vmem:[#allocation8 + $0xe98] sm:$0xff]
    %v1053 = vld [vmem:[#allocation8 + $0xea0] sm:$0xff]
    %v1054 = vld [vmem:[#allocation8 + $0xea8] sm:$0xff]
    %v1055 = vld [vmem:[#allocation8 + $0xeb0] sm:$0xff]
    %v1056 = vld [vmem:[#allocation8 + $0xeb8] sm:$0xff]
    %v1057 = vld [vmem:[#allocation8 + $0xec0] sm:$0xff]
    %v1058 = vld [vmem:[#allocation8 + $0xec8] sm:$0xff]
    %v1059 = vld [vmem:[#allocation8 + $0xed0] sm:$0xff]
    %v1060 = vld [vmem:[#allocation8 + $0xed8] sm:$0xff]
    %v1061 = vld [vmem:[#allocation8 + $0xee0] sm:$0xff]
    %v1062 = vld [vmem:[#allocation8 + $0xee8] sm:$0xff]
    %v1063 = vld [vmem:[#allocation8 + $0xef0] sm:$0xff]
    %v1064 = vld [vmem:[#allocation8 + $0xef8] sm:$0xff]
    %v1065 = vld [vmem:[#allocation8 + $0xf00] sm:$0xff]
    %v1066 = vld [vmem:[#allocation8 + $0xf08] sm:$0xff]
    %v1067 = vld [vmem:[#allocation8 + $0xf10] sm:$0xff]
    %v1068 = vld [vmem:[#allocation8 + $0xf18] sm:$0xff]
    %v1069 = vld [vmem:[#allocation8 + $0xf20] sm:$0xff]
    %v1070 = vld [vmem:[#allocation8 + $0xf28] sm:$0xff]
    %v1071 = vld [vmem:[#allocation8 + $0xf30] sm:$0xff]
    %v1072 = vld [vmem:[#allocation8 + $0xf38] sm:$0xff]
    %v1073 = vld [vmem:[#allocation8 + $0xf40] sm:$0xff]
    %v1074 = vld [vmem:[#allocation8 + $0xf48] sm:$0xff]
    %v1075 = vld [vmem:[#allocation8 + $0xf50] sm:$0xff]
    %v1076 = vld [vmem:[#allocation8 + $0xf58] sm:$0xff]
    %v1077 = vld [vmem:[#allocation8 + $0xf60] sm:$0xff]
    %v1078 = vld [vmem:[#allocation8 + $0xf68] sm:$0xff]
    %v1079 = vld [vmem:[#allocation8 + $0xf70] sm:$0xff]
    %v1080 = vld [vmem:[#allocation8 + $0xf78] sm:$0xff]
    %v1081 = vld [vmem:[#allocation8 + $0xf80] sm:$0xff]
    %v1082 = vld [vmem:[#allocation8 + $0xf88] sm:$0xff]
    %v1083 = vld [vmem:[#allocation8 + $0xf90] sm:$0xff]
    %v1084 = vld [vmem:[#allocation8 + $0xf98] sm:$0xff]
    %v1085 = vld [vmem:[#allocation8 + $0xfa0] sm:$0xff]
    %v1086 = vld [vmem:[#allocation8 + $0xfa8] sm:$0xff]
    %v1087 = vld [vmem:[#allocation8 + $0xfb0] sm:$0xff]
    %v1088 = vld [vmem:[#allocation8 + $0xfb8] sm:$0xff]
    %v1089 = vld [vmem:[#allocation8 + $0xfc0] sm:$0xff]
    %v1090 = vld [vmem:[#allocation8 + $0xfc8] sm:$0xff]
    %v1091 = vld [vmem:[#allocation8 + $0xfd0] sm:$0xff]
    %v1092 = vld [vmem:[#allocation8 + $0xfd8] sm:$0xff]
    %v1093 = vld [vmem:[#allocation8 + $0xfe0] sm:$0xff]
    %v1094 = vld [vmem:[#allocation8 + $0xfe8] sm:$0xff]
    %v1095 = vld [vmem:[#allocation8 + $0xff0] sm:$0xff]
    %v1096 = vld [vmem:[#allocation8 + $0xff8] sm:$0xff]
    %v1609 = vunpack.c.l.b16 %v585
    %v1610 = vunpack.c.h.b16 %v585
    %v1611 = vunpack.c.l.b16 %v586
    %v1612 = vunpack.c.h.b16 %v586
    %v1613 = vunpack.c.l.b16 %v587
    %v1614 = vunpack.c.h.b16 %v587
    %v1615 = vunpack.c.l.b16 %v588
    %v1616 = vunpack.c.h.b16 %v588
    %v1617 = vunpack.c.l.b16 %v589
    %v1618 = vunpack.c.h.b16 %v589
    %v1619 = vunpack.c.l.b16 %v590
    %v1620 = vunpack.c.h.b16 %v590
    %v1621 = vunpack.c.l.b16 %v591
    %v1622 = vunpack.c.h.b16 %v591
    %v1623 = vunpack.c.l.b16 %v592
    %v1624 = vunpack.c.h.b16 %v592
    %v1625 = vunpack.c.l.b16 %v593
    %v1626 = vunpack.c.h.b16 %v593
    %v1627 = vunpack.c.l.b16 %v594
    %v1628 = vunpack.c.h.b16 %v594
    %v1629 = vunpack.c.l.b16 %v595
    %v1630 = vunpack.c.h.b16 %v595
    %v1631 = vunpack.c.l.b16 %v596
    %v1632 = vunpack.c.h.b16 %v596
    %v1633 = vunpack.c.l.b16 %v597
    %v1634 = vunpack.c.h.b16 %v597
    %v1635 = vunpack.c.l.b16 %v598
    %v1636 = vunpack.c.h.b16 %v598
    %v1637 = vunpack.c.l.b16 %v599
    %v1638 = vunpack.c.h.b16 %v599
    %v1639 = vunpack.c.l.b16 %v600
    %v1640 = vunpack.c.h.b16 %v600
    %v1641 = vunpack.c.l.b16 %v601
    %v1642 = vunpack.c.h.b16 %v601
    %v1643 = vunpack.c.l.b16 %v602
    %v1644 = vunpack.c.h.b16 %v602
    %v1645 = vunpack.c.l.b16 %v603
    %v1646 = vunpack.c.h.b16 %v603
    %v1647 = vunpack.c.l.b16 %v604
    %v1648 = vunpack.c.h.b16 %v604
    %v1649 = vunpack.c.l.b16 %v605
    %v1650 = vunpack.c.h.b16 %v605
    %v1651 = vunpack.c.l.b16 %v606
    %v1652 = vunpack.c.h.b16 %v606
    %v1653 = vunpack.c.l.b16 %v607
    %v1654 = vunpack.c.h.b16 %v607
    %v1655 = vunpack.c.l.b16 %v608
    %v1656 = vunpack.c.h.b16 %v608
    %v1657 = vunpack.c.l.b16 %v609
    %v1658 = vunpack.c.h.b16 %v609
    %v1659 = vunpack.c.l.b16 %v610
    %v1660 = vunpack.c.h.b16 %v610
    %v1661 = vunpack.c.l.b16 %v611
    %v1662 = vunpack.c.h.b16 %v611
    %v1663 = vunpack.c.l.b16 %v612
    %v1664 = vunpack.c.h.b16 %v612
    %v1665 = vunpack.c.l.b16 %v613
    %v1666 = vunpack.c.h.b16 %v613
    %v1667 = vunpack.c.l.b16 %v614
    %v1668 = vunpack.c.h.b16 %v614
    %v1669 = vunpack.c.l.b16 %v615
    %v1670 = vunpack.c.h.b16 %v615
    %v1671 = vunpack.c.l.b16 %v616
    %v1672 = vunpack.c.h.b16 %v616
    %v1673 = vunpack.c.l.b16 %v617
    %v1674 = vunpack.c.h.b16 %v617
    %v1675 = vunpack.c.l.b16 %v618
    %v1676 = vunpack.c.h.b16 %v618
    %v1677 = vunpack.c.l.b16 %v619
    %v1678 = vunpack.c.h.b16 %v619
    %v1679 = vunpack.c.l.b16 %v620
    %v1680 = vunpack.c.h.b16 %v620
    %v1681 = vunpack.c.l.b16 %v621
    %v1682 = vunpack.c.h.b16 %v621
    %v1683 = vunpack.c.l.b16 %v622
    %v1684 = vunpack.c.h.b16 %v622
    %v1685 = vunpack.c.l.b16 %v623
    %v1686 = vunpack.c.h.b16 %v623
    %v1687 = vunpack.c.l.b16 %v624
    %v1688 = vunpack.c.h.b16 %v624
    %v1689 = vunpack.c.l.b16 %v625
    %v1690 = vunpack.c.h.b16 %v625
    %v1691 = vunpack.c.l.b16 %v626
    %v1692 = vunpack.c.h.b16 %v626
    %v1693 = vunpack.c.l.b16 %v627
    %v1694 = vunpack.c.h.b16 %v627
    %v1695 = vunpack.c.l.b16 %v628
    %v1696 = vunpack.c.h.b16 %v628
    %v1697 = vunpack.c.l.b16 %v629
    %v1698 = vunpack.c.h.b16 %v629
    %v1699 = vunpack.c.l.b16 %v630
    %v1700 = vunpack.c.h.b16 %v630
    %v1701 = vunpack.c.l.b16 %v631
    %v1702 = vunpack.c.h.b16 %v631
    %v1703 = vunpack.c.l.b16 %v632
    %v1704 = vunpack.c.h.b16 %v632
    %v1705 = vunpack.c.l.b16 %v633
    %v1706 = vunpack.c.h.b16 %v633
    %v1707 = vunpack.c.l.b16 %v634
    %v1708 = vunpack.c.h.b16 %v634
    %v1709 = vunpack.c.l.b16 %v635
    %v1710 = vunpack.c.h.b16 %v635
    %v1711 = vunpack.c.l.b16 %v636
    %v1712 = vunpack.c.h.b16 %v636
    %v1713 = vunpack.c.l.b16 %v637
    %v1714 = vunpack.c.h.b16 %v637
    %v1715 = vunpack.c.l.b16 %v638
    %v1716 = vunpack.c.h.b16 %v638
    %v1717 = vunpack.c.l.b16 %v639
    %v1718 = vunpack.c.h.b16 %v639
    %v1719 = vunpack.c.l.b16 %v640
    %v1720 = vunpack.c.h.b16 %v640
    %v1721 = vunpack.c.l.b16 %v641
    %v1722 = vunpack.c.h.b16 %v641
    %v1723 = vunpack.c.l.b16 %v642
    %v1724 = vunpack.c.h.b16 %v642
    %v1725 = vunpack.c.l.b16 %v643
    %v1726 = vunpack.c.h.b16 %v643
    %v1727 = vunpack.c.l.b16 %v644
    %v1728 = vunpack.c.h.b16 %v644
    %v1729 = vunpack.c.l.b16 %v645
    %v1730 = vunpack.c.h.b16 %v645
    %v1731 = vunpack.c.l.b16 %v646
    %v1732 = vunpack.c.h.b16 %v646
    %v1733 = vunpack.c.l.b16 %v647
    %v1734 = vunpack.c.h.b16 %v647
    %v1735 = vunpack.c.l.b16 %v648
    %v1736 = vunpack.c.h.b16 %v648
    %v1737 = vunpack.c.l.b16 %v649
    %v1738 = vunpack.c.h.b16 %v649
    %v1739 = vunpack.c.l.b16 %v650
    %v1740 = vunpack.c.h.b16 %v650
    %v1741 = vunpack.c.l.b16 %v651
    %v1742 = vunpack.c.h.b16 %v651
    %v1743 = vunpack.c.l.b16 %v652
    %v1744 = vunpack.c.h.b16 %v652
    %v1745 = vunpack.c.l.b16 %v653
    %v1746 = vunpack.c.h.b16 %v653
    %v1747 = vunpack.c.l.b16 %v654
    %v1748 = vunpack.c.h.b16 %v654
    %v1749 = vunpack.c.l.b16 %v655
    %v1750 = vunpack.c.h.b16 %v655
    %v1751 = vunpack.c.l.b16 %v656
    %v1752 = vunpack.c.h.b16 %v656
    %v1753 = vunpack.c.l.b16 %v657
    %v1754 = vunpack.c.h.b16 %v657
    %v1755 = vunpack.c.l.b16 %v658
    %v1756 = vunpack.c.h.b16 %v658
    %v1757 = vunpack.c.l.b16 %v659
    %v1758 = vunpack.c.h.b16 %v659
    %v1759 = vunpack.c.l.b16 %v660
    %v1760 = vunpack.c.h.b16 %v660
    %v1761 = vunpack.c.l.b16 %v661
    %v1762 = vunpack.c.h.b16 %v661
    %v1763 = vunpack.c.l.b16 %v662
    %v1764 = vunpack.c.h.b16 %v662
    %v1765 = vunpack.c.l.b16 %v663
    %v1766 = vunpack.c.h.b16 %v663
    %v1767 = vunpack.c.l.b16 %v664
    %v1768 = vunpack.c.h.b16 %v664
    %v1769 = vunpack.c.l.b16 %v665
    %v1770 = vunpack.c.h.b16 %v665
    %v1771 = vunpack.c.l.b16 %v666
    %v1772 = vunpack.c.h.b16 %v666
    %v1773 = vunpack.c.l.b16 %v667
    %v1774 = vunpack.c.h.b16 %v667
    %v1775 = vunpack.c.l.b16 %v668
    %v1776 = vunpack.c.h.b16 %v668
    %v1777 = vunpack.c.l.b16 %v669
    %v1778 = vunpack.c.h.b16 %v669
    %v1779 = vunpack.c.l.b16 %v670
    %v1780 = vunpack.c.h.b16 %v670
    %v1781 = vunpack.c.l.b16 %v671
    %v1782 = vunpack.c.h.b16 %v671
    %v1783 = vunpack.c.l.b16 %v672
    %v1784 = vunpack.c.h.b16 %v672
    %v1785 = vunpack.c.l.b16 %v673
    %v1786 = vunpack.c.h.b16 %v673
    %v1787 = vunpack.c.l.b16 %v674
    %v1788 = vunpack.c.h.b16 %v674
    %v1789 = vunpack.c.l.b16 %v675
    %v1790 = vunpack.c.h.b16 %v675
    %v1791 = vunpack.c.l.b16 %v676
    %v1792 = vunpack.c.h.b16 %v676
    %v1793 = vunpack.c.l.b16 %v677
    %v1794 = vunpack.c.h.b16 %v677
    %v1795 = vunpack.c.l.b16 %v678
    %v1796 = vunpack.c.h.b16 %v678
    %v1797 = vunpack.c.l.b16 %v679
    %v1798 = vunpack.c.h.b16 %v679
    %v1799 = vunpack.c.l.b16 %v680
    %v1800 = vunpack.c.h.b16 %v680
    %v1801 = vunpack.c.l.b16 %v681
    %v1802 = vunpack.c.h.b16 %v681
    %v1803 = vunpack.c.l.b16 %v682
    %v1804 = vunpack.c.h.b16 %v682
    %v1805 = vunpack.c.l.b16 %v683
    %v1806 = vunpack.c.h.b16 %v683
    %v1807 = vunpack.c.l.b16 %v684
    %v1808 = vunpack.c.h.b16 %v684
    %v1809 = vunpack.c.l.b16 %v685
    %v1810 = vunpack.c.h.b16 %v685
    %v1811 = vunpack.c.l.b16 %v686
    %v1812 = vunpack.c.h.b16 %v686
    %v1813 = vunpack.c.l.b16 %v687
    %v1814 = vunpack.c.h.b16 %v687
    %v1815 = vunpack.c.l.b16 %v688
    %v1816 = vunpack.c.h.b16 %v688
    %v1817 = vunpack.c.l.b16 %v689
    %v1818 = vunpack.c.h.b16 %v689
    %v1819 = vunpack.c.l.b16 %v690
    %v1820 = vunpack.c.h.b16 %v690
    %v1821 = vunpack.c.l.b16 %v691
    %v1822 = vunpack.c.h.b16 %v691
    %v1823 = vunpack.c.l.b16 %v692
    %v1824 = vunpack.c.h.b16 %v692
    %v1825 = vunpack.c.l.b16 %v693
    %v1826 = vunpack.c.h.b16 %v693
    %v1827 = vunpack.c.l.b16 %v694
    %v1828 = vunpack.c.h.b16 %v694
    %v1829 = vunpack.c.l.b16 %v695
    %v1830 = vunpack.c.h.b16 %v695
    %v1831 = vunpack.c.l.b16 %v696
    %v1832 = vunpack.c.h.b16 %v696
    %v1833 = vunpack.c.l.b16 %v697
    %v1834 = vunpack.c.h.b16 %v697
    %v1835 = vunpack.c.l.b16 %v698
    %v1836 = vunpack.c.h.b16 %v698
    %v1837 = vunpack.c.l.b16 %v699
    %v1838 = vunpack.c.h.b16 %v699
    %v1839 = vunpack.c.l.b16 %v700
    %v1840 = vunpack.c.h.b16 %v700
    %v1841 = vunpack.c.l.b16 %v701
    %v1842 = vunpack.c.h.b16 %v701
    %v1843 = vunpack.c.l.b16 %v702
    %v1844 = vunpack.c.h.b16 %v702
    %v1845 = vunpack.c.l.b16 %v703
    %v1846 = vunpack.c.h.b16 %v703
    %v1847 = vunpack.c.l.b16 %v704
    %v1848 = vunpack.c.h.b16 %v704
    %v1849 = vunpack.c.l.b16 %v705
    %v1850 = vunpack.c.h.b16 %v705
    %v1851 = vunpack.c.l.b16 %v706
    %v1852 = vunpack.c.h.b16 %v706
    %v1853 = vunpack.c.l.b16 %v707
    %v1854 = vunpack.c.h.b16 %v707
    %v1855 = vunpack.c.l.b16 %v708
    %v1856 = vunpack.c.h.b16 %v708
    %v1857 = vunpack.c.l.b16 %v709
    %v1858 = vunpack.c.h.b16 %v709
    %v1859 = vunpack.c.l.b16 %v710
    %v1860 = vunpack.c.h.b16 %v710
    %v1861 = vunpack.c.l.b16 %v711
    %v1862 = vunpack.c.h.b16 %v711
    %v1863 = vunpack.c.l.b16 %v712
    %v1864 = vunpack.c.h.b16 %v712
    %v1865 = vunpack.c.l.b16 %v713
    %v1866 = vunpack.c.h.b16 %v713
    %v1867 = vunpack.c.l.b16 %v714
    %v1868 = vunpack.c.h.b16 %v714
    %v1869 = vunpack.c.l.b16 %v715
    %v1870 = vunpack.c.h.b16 %v715
    %v1871 = vunpack.c.l.b16 %v716
    %v1872 = vunpack.c.h.b16 %v716
    %v1873 = vunpack.c.l.b16 %v717
    %v1874 = vunpack.c.h.b16 %v717
    %v1875 = vunpack.c.l.b16 %v718
    %v1876 = vunpack.c.h.b16 %v718
    %v1877 = vunpack.c.l.b16 %v719
    %v1878 = vunpack.c.h.b16 %v719
    %v1879 = vunpack.c.l.b16 %v720
    %v1880 = vunpack.c.h.b16 %v720
    %v1881 = vunpack.c.l.b16 %v721
    %v1882 = vunpack.c.h.b16 %v721
    %v1883 = vunpack.c.l.b16 %v722
    %v1884 = vunpack.c.h.b16 %v722
    %v1885 = vunpack.c.l.b16 %v723
    %v1886 = vunpack.c.h.b16 %v723
    %v1887 = vunpack.c.l.b16 %v724
    %v1888 = vunpack.c.h.b16 %v724
    %v1889 = vunpack.c.l.b16 %v725
    %v1890 = vunpack.c.h.b16 %v725
    %v1891 = vunpack.c.l.b16 %v726
    %v1892 = vunpack.c.h.b16 %v726
    %v1893 = vunpack.c.l.b16 %v727
    %v1894 = vunpack.c.h.b16 %v727
    %v1895 = vunpack.c.l.b16 %v728
    %v1896 = vunpack.c.h.b16 %v728
    %v1897 = vunpack.c.l.b16 %v729
    %v1898 = vunpack.c.h.b16 %v729
    %v1899 = vunpack.c.l.b16 %v730
    %v1900 = vunpack.c.h.b16 %v730
    %v1901 = vunpack.c.l.b16 %v731
    %v1902 = vunpack.c.h.b16 %v731
    %v1903 = vunpack.c.l.b16 %v732
    %v1904 = vunpack.c.h.b16 %v732
    %v1905 = vunpack.c.l.b16 %v733
    %v1906 = vunpack.c.h.b16 %v733
    %v1907 = vunpack.c.l.b16 %v734
    %v1908 = vunpack.c.h.b16 %v734
    %v1909 = vunpack.c.l.b16 %v735
    %v1910 = vunpack.c.h.b16 %v735
    %v1911 = vunpack.c.l.b16 %v736
    %v1912 = vunpack.c.h.b16 %v736
    %v1913 = vunpack.c.l.b16 %v737
    %v1914 = vunpack.c.h.b16 %v737
    %v1915 = vunpack.c.l.b16 %v738
    %v1916 = vunpack.c.h.b16 %v738
    %v1917 = vunpack.c.l.b16 %v739
    %v1918 = vunpack.c.h.b16 %v739
    %v1919 = vunpack.c.l.b16 %v740
    %v1920 = vunpack.c.h.b16 %v740
    %v1921 = vunpack.c.l.b16 %v741
    %v1922 = vunpack.c.h.b16 %v741
    %v1923 = vunpack.c.l.b16 %v742
    %v1924 = vunpack.c.h.b16 %v742
    %v1925 = vunpack.c.l.b16 %v743
    %v1926 = vunpack.c.h.b16 %v743
    %v1927 = vunpack.c.l.b16 %v744
    %v1928 = vunpack.c.h.b16 %v744
    %v1929 = vunpack.c.l.b16 %v745
    %v1930 = vunpack.c.h.b16 %v745
    %v1931 = vunpack.c.l.b16 %v746
    %v1932 = vunpack.c.h.b16 %v746
    %v1933 = vunpack.c.l.b16 %v747
    %v1934 = vunpack.c.h.b16 %v747
    %v1935 = vunpack.c.l.b16 %v748
    %v1936 = vunpack.c.h.b16 %v748
    %v1937 = vunpack.c.l.b16 %v749
    %v1938 = vunpack.c.h.b16 %v749
    %v1939 = vunpack.c.l.b16 %v750
    %v1940 = vunpack.c.h.b16 %v750
    %v1941 = vunpack.c.l.b16 %v751
    %v1942 = vunpack.c.h.b16 %v751
    %v1943 = vunpack.c.l.b16 %v752
    %v1944 = vunpack.c.h.b16 %v752
    %v1945 = vunpack.c.l.b16 %v753
    %v1946 = vunpack.c.h.b16 %v753
    %v1947 = vunpack.c.l.b16 %v754
    %v1948 = vunpack.c.h.b16 %v754
    %v1949 = vunpack.c.l.b16 %v755
    %v1950 = vunpack.c.h.b16 %v755
    %v1951 = vunpack.c.l.b16 %v756
    %v1952 = vunpack.c.h.b16 %v756
    %v1953 = vunpack.c.l.b16 %v757
    %v1954 = vunpack.c.h.b16 %v757
    %v1955 = vunpack.c.l.b16 %v758
    %v1956 = vunpack.c.h.b16 %v758
    %v1957 = vunpack.c.l.b16 %v759
    %v1958 = vunpack.c.h.b16 %v759
    %v1959 = vunpack.c.l.b16 %v760
    %v1960 = vunpack.c.h.b16 %v760
    %v1961 = vunpack.c.l.b16 %v761
    %v1962 = vunpack.c.h.b16 %v761
    %v1963 = vunpack.c.l.b16 %v762
    %v1964 = vunpack.c.h.b16 %v762
    %v1965 = vunpack.c.l.b16 %v763
    %v1966 = vunpack.c.h.b16 %v763
    %v1967 = vunpack.c.l.b16 %v764
    %v1968 = vunpack.c.h.b16 %v764
    %v1969 = vunpack.c.l.b16 %v765
    %v1970 = vunpack.c.h.b16 %v765
    %v1971 = vunpack.c.l.b16 %v766
    %v1972 = vunpack.c.h.b16 %v766
    %v1973 = vunpack.c.l.b16 %v767
    %v1974 = vunpack.c.h.b16 %v767
    %v1975 = vunpack.c.l.b16 %v768
    %v1976 = vunpack.c.h.b16 %v768
    %v1977 = vunpack.c.l.b16 %v769
    %v1978 = vunpack.c.h.b16 %v769
    %v1979 = vunpack.c.l.b16 %v770
    %v1980 = vunpack.c.h.b16 %v770
    %v1981 = vunpack.c.l.b16 %v771
    %v1982 = vunpack.c.h.b16 %v771
    %v1983 = vunpack.c.l.b16 %v772
    %v1984 = vunpack.c.h.b16 %v772
    %v1985 = vunpack.c.l.b16 %v773
    %v1986 = vunpack.c.h.b16 %v773
    %v1987 = vunpack.c.l.b16 %v774
    %v1988 = vunpack.c.h.b16 %v774
    %v1989 = vunpack.c.l.b16 %v775
    %v1990 = vunpack.c.h.b16 %v775
    %v1991 = vunpack.c.l.b16 %v776
    %v1992 = vunpack.c.h.b16 %v776
    %v1993 = vunpack.c.l.b16 %v777
    %v1994 = vunpack.c.h.b16 %v777
    %v1995 = vunpack.c.l.b16 %v778
    %v1996 = vunpack.c.h.b16 %v778
    %v1997 = vunpack.c.l.b16 %v779
    %v1998 = vunpack.c.h.b16 %v779
    %v1999 = vunpack.c.l.b16 %v780
    %v2000 = vunpack.c.h.b16 %v780
    %v2001 = vunpack.c.l.b16 %v781
    %v2002 = vunpack.c.h.b16 %v781
    %v2003 = vunpack.c.l.b16 %v782
    %v2004 = vunpack.c.h.b16 %v782
    %v2005 = vunpack.c.l.b16 %v783
    %v2006 = vunpack.c.h.b16 %v783
    %v2007 = vunpack.c.l.b16 %v784
    %v2008 = vunpack.c.h.b16 %v784
    %v2009 = vunpack.c.l.b16 %v785
    %v2010 = vunpack.c.h.b16 %v785
    %v2011 = vunpack.c.l.b16 %v786
    %v2012 = vunpack.c.h.b16 %v786
    %v2013 = vunpack.c.l.b16 %v787
    %v2014 = vunpack.c.h.b16 %v787
    %v2015 = vunpack.c.l.b16 %v788
    %v2016 = vunpack.c.h.b16 %v788
    %v2017 = vunpack.c.l.b16 %v789
    %v2018 = vunpack.c.h.b16 %v789
    %v2019 = vunpack.c.l.b16 %v790
    %v2020 = vunpack.c.h.b16 %v790
    %v2021 = vunpack.c.l.b16 %v791
    %v2022 = vunpack.c.h.b16 %v791
    %v2023 = vunpack.c.l.b16 %v792
    %v2024 = vunpack.c.h.b16 %v792
    %v2025 = vunpack.c.l.b16 %v793
    %v2026 = vunpack.c.h.b16 %v793
    %v2027 = vunpack.c.l.b16 %v794
    %v2028 = vunpack.c.h.b16 %v794
    %v2029 = vunpack.c.l.b16 %v795
    %v2030 = vunpack.c.h.b16 %v795
    %v2031 = vunpack.c.l.b16 %v796
    %v2032 = vunpack.c.h.b16 %v796
    %v2033 = vunpack.c.l.b16 %v797
    %v2034 = vunpack.c.h.b16 %v797
    %v2035 = vunpack.c.l.b16 %v798
    %v2036 = vunpack.c.h.b16 %v798
    %v2037 = vunpack.c.l.b16 %v799
    %v2038 = vunpack.c.h.b16 %v799
    %v2039 = vunpack.c.l.b16 %v800
    %v2040 = vunpack.c.h.b16 %v800
    %v2041 = vunpack.c.l.b16 %v801
    %v2042 = vunpack.c.h.b16 %v801
    %v2043 = vunpack.c.l.b16 %v802
    %v2044 = vunpack.c.h.b16 %v802
    %v2045 = vunpack.c.l.b16 %v803
    %v2046 = vunpack.c.h.b16 %v803
    %v2047 = vunpack.c.l.b16 %v804
    %v2048 = vunpack.c.h.b16 %v804
    %v2049 = vunpack.c.l.b16 %v805
    %v2050 = vunpack.c.h.b16 %v805
    %v2051 = vunpack.c.l.b16 %v806
    %v2052 = vunpack.c.h.b16 %v806
    %v2053 = vunpack.c.l.b16 %v807
    %v2054 = vunpack.c.h.b16 %v807
    %v2055 = vunpack.c.l.b16 %v808
    %v2056 = vunpack.c.h.b16 %v808
    %v2057 = vunpack.c.l.b16 %v809
    %v2058 = vunpack.c.h.b16 %v809
    %v2059 = vunpack.c.l.b16 %v810
    %v2060 = vunpack.c.h.b16 %v810
    %v2061 = vunpack.c.l.b16 %v811
    %v2062 = vunpack.c.h.b16 %v811
    %v2063 = vunpack.c.l.b16 %v812
    %v2064 = vunpack.c.h.b16 %v812
    %v2065 = vunpack.c.l.b16 %v813
    %v2066 = vunpack.c.h.b16 %v813
    %v2067 = vunpack.c.l.b16 %v814
    %v2068 = vunpack.c.h.b16 %v814
    %v2069 = vunpack.c.l.b16 %v815
    %v2070 = vunpack.c.h.b16 %v815
    %v2071 = vunpack.c.l.b16 %v816
    %v2072 = vunpack.c.h.b16 %v816
    %v2073 = vunpack.c.l.b16 %v817
    %v2074 = vunpack.c.h.b16 %v817
    %v2075 = vunpack.c.l.b16 %v818
    %v2076 = vunpack.c.h.b16 %v818
    %v2077 = vunpack.c.l.b16 %v819
    %v2078 = vunpack.c.h.b16 %v819
    %v2079 = vunpack.c.l.b16 %v820
    %v2080 = vunpack.c.h.b16 %v820
    %v2081 = vunpack.c.l.b16 %v821
    %v2082 = vunpack.c.h.b16 %v821
    %v2083 = vunpack.c.l.b16 %v822
    %v2084 = vunpack.c.h.b16 %v822
    %v2085 = vunpack.c.l.b16 %v823
    %v2086 = vunpack.c.h.b16 %v823
    %v2087 = vunpack.c.l.b16 %v824
    %v2088 = vunpack.c.h.b16 %v824
    %v2089 = vunpack.c.l.b16 %v825
    %v2090 = vunpack.c.h.b16 %v825
    %v2091 = vunpack.c.l.b16 %v826
    %v2092 = vunpack.c.h.b16 %v826
    %v2093 = vunpack.c.l.b16 %v827
    %v2094 = vunpack.c.h.b16 %v827
    %v2095 = vunpack.c.l.b16 %v828
    %v2096 = vunpack.c.h.b16 %v828
    %v2097 = vunpack.c.l.b16 %v829
    %v2098 = vunpack.c.h.b16 %v829
    %v2099 = vunpack.c.l.b16 %v830
    %v2100 = vunpack.c.h.b16 %v830
    %v2101 = vunpack.c.l.b16 %v831
    %v2102 = vunpack.c.h.b16 %v831
    %v2103 = vunpack.c.l.b16 %v832
    %v2104 = vunpack.c.h.b16 %v832
    %v2105 = vunpack.c.l.b16 %v833
    %v2106 = vunpack.c.h.b16 %v833
    %v2107 = vunpack.c.l.b16 %v834
    %v2108 = vunpack.c.h.b16 %v834
    %v2109 = vunpack.c.l.b16 %v835
    %v2110 = vunpack.c.h.b16 %v835
    %v2111 = vunpack.c.l.b16 %v836
    %v2112 = vunpack.c.h.b16 %v836
    %v2113 = vunpack.c.l.b16 %v837
    %v2114 = vunpack.c.h.b16 %v837
    %v2115 = vunpack.c.l.b16 %v838
    %v2116 = vunpack.c.h.b16 %v838
    %v2117 = vunpack.c.l.b16 %v839
    %v2118 = vunpack.c.h.b16 %v839
    %v2119 = vunpack.c.l.b16 %v840
    %v2120 = vunpack.c.h.b16 %v840
    %v2121 = vunpack.c.l.b16 %v841
    %v2122 = vunpack.c.h.b16 %v841
    %v2123 = vunpack.c.l.b16 %v842
    %v2124 = vunpack.c.h.b16 %v842
    %v2125 = vunpack.c.l.b16 %v843
    %v2126 = vunpack.c.h.b16 %v843
    %v2127 = vunpack.c.l.b16 %v844
    %v2128 = vunpack.c.h.b16 %v844
    %v2129 = vunpack.c.l.b16 %v845
    %v2130 = vunpack.c.h.b16 %v845
    %v2131 = vunpack.c.l.b16 %v846
    %v2132 = vunpack.c.h.b16 %v846
    %v2133 = vunpack.c.l.b16 %v847
    %v2134 = vunpack.c.h.b16 %v847
    %v2135 = vunpack.c.l.b16 %v848
    %v2136 = vunpack.c.h.b16 %v848
    %v2137 = vunpack.c.l.b16 %v849
    %v2138 = vunpack.c.h.b16 %v849
    %v2139 = vunpack.c.l.b16 %v850
    %v2140 = vunpack.c.h.b16 %v850
    %v2141 = vunpack.c.l.b16 %v851
    %v2142 = vunpack.c.h.b16 %v851
    %v2143 = vunpack.c.l.b16 %v852
    %v2144 = vunpack.c.h.b16 %v852
    %v2145 = vunpack.c.l.b16 %v853
    %v2146 = vunpack.c.h.b16 %v853
    %v2147 = vunpack.c.l.b16 %v854
    %v2148 = vunpack.c.h.b16 %v854
    %v2149 = vunpack.c.l.b16 %v855
    %v2150 = vunpack.c.h.b16 %v855
    %v2151 = vunpack.c.l.b16 %v856
    %v2152 = vunpack.c.h.b16 %v856
    %v2153 = vunpack.c.l.b16 %v857
    %v2154 = vunpack.c.h.b16 %v857
    %v2155 = vunpack.c.l.b16 %v858
    %v2156 = vunpack.c.h.b16 %v858
    %v2157 = vunpack.c.l.b16 %v859
    %v2158 = vunpack.c.h.b16 %v859
    %v2159 = vunpack.c.l.b16 %v860
    %v2160 = vunpack.c.h.b16 %v860
    %v2161 = vunpack.c.l.b16 %v861
    %v2162 = vunpack.c.h.b16 %v861
    %v2163 = vunpack.c.l.b16 %v862
    %v2164 = vunpack.c.h.b16 %v862
    %v2165 = vunpack.c.l.b16 %v863
    %v2166 = vunpack.c.h.b16 %v863
    %v2167 = vunpack.c.l.b16 %v864
    %v2168 = vunpack.c.h.b16 %v864
    %v2169 = vunpack.c.l.b16 %v865
    %v2170 = vunpack.c.h.b16 %v865
    %v2171 = vunpack.c.l.b16 %v866
    %v2172 = vunpack.c.h.b16 %v866
    %v2173 = vunpack.c.l.b16 %v867
    %v2174 = vunpack.c.h.b16 %v867
    %v2175 = vunpack.c.l.b16 %v868
    %v2176 = vunpack.c.h.b16 %v868
    %v2177 = vunpack.c.l.b16 %v869
    %v2178 = vunpack.c.h.b16 %v869
    %v2179 = vunpack.c.l.b16 %v870
    %v2180 = vunpack.c.h.b16 %v870
    %v2181 = vunpack.c.l.b16 %v871
    %v2182 = vunpack.c.h.b16 %v871
    %v2183 = vunpack.c.l.b16 %v872
    %v2184 = vunpack.c.h.b16 %v872
    %v2185 = vunpack.c.l.b16 %v873
    %v2186 = vunpack.c.h.b16 %v873
    %v2187 = vunpack.c.l.b16 %v874
    %v2188 = vunpack.c.h.b16 %v874
    %v2189 = vunpack.c.l.b16 %v875
    %v2190 = vunpack.c.h.b16 %v875
    %v2191 = vunpack.c.l.b16 %v876
    %v2192 = vunpack.c.h.b16 %v876
    %v2193 = vunpack.c.l.b16 %v877
    %v2194 = vunpack.c.h.b16 %v877
    %v2195 = vunpack.c.l.b16 %v878
    %v2196 = vunpack.c.h.b16 %v878
    %v2197 = vunpack.c.l.b16 %v879
    %v2198 = vunpack.c.h.b16 %v879
    %v2199 = vunpack.c.l.b16 %v880
    %v2200 = vunpack.c.h.b16 %v880
    %v2201 = vunpack.c.l.b16 %v881
    %v2202 = vunpack.c.h.b16 %v881
    %v2203 = vunpack.c.l.b16 %v882
    %v2204 = vunpack.c.h.b16 %v882
    %v2205 = vunpack.c.l.b16 %v883
    %v2206 = vunpack.c.h.b16 %v883
    %v2207 = vunpack.c.l.b16 %v884
    %v2208 = vunpack.c.h.b16 %v884
    %v2209 = vunpack.c.l.b16 %v885
    %v2210 = vunpack.c.h.b16 %v885
    %v2211 = vunpack.c.l.b16 %v886
    %v2212 = vunpack.c.h.b16 %v886
    %v2213 = vunpack.c.l.b16 %v887
    %v2214 = vunpack.c.h.b16 %v887
    %v2215 = vunpack.c.l.b16 %v888
    %v2216 = vunpack.c.h.b16 %v888
    %v2217 = vunpack.c.l.b16 %v889
    %v2218 = vunpack.c.h.b16 %v889
    %v2219 = vunpack.c.l.b16 %v890
    %v2220 = vunpack.c.h.b16 %v890
    %v2221 = vunpack.c.l.b16 %v891
    %v2222 = vunpack.c.h.b16 %v891
    %v2223 = vunpack.c.l.b16 %v892
    %v2224 = vunpack.c.h.b16 %v892
    %v2225 = vunpack.c.l.b16 %v893
    %v2226 = vunpack.c.h.b16 %v893
    %v2227 = vunpack.c.l.b16 %v894
    %v2228 = vunpack.c.h.b16 %v894
    %v2229 = vunpack.c.l.b16 %v895
    %v2230 = vunpack.c.h.b16 %v895
    %v2231 = vunpack.c.l.b16 %v896
    %v2232 = vunpack.c.h.b16 %v896
    %v2233 = vunpack.c.l.b16 %v897
    %v2234 = vunpack.c.h.b16 %v897
    %v2235 = vunpack.c.l.b16 %v898
    %v2236 = vunpack.c.h.b16 %v898
    %v2237 = vunpack.c.l.b16 %v899
    %v2238 = vunpack.c.h.b16 %v899
    %v2239 = vunpack.c.l.b16 %v900
    %v2240 = vunpack.c.h.b16 %v900
    %v2241 = vunpack.c.l.b16 %v901
    %v2242 = vunpack.c.h.b16 %v901
    %v2243 = vunpack.c.l.b16 %v902
    %v2244 = vunpack.c.h.b16 %v902
    %v2245 = vunpack.c.l.b16 %v903
    %v2246 = vunpack.c.h.b16 %v903
    %v2247 = vunpack.c.l.b16 %v904
    %v2248 = vunpack.c.h.b16 %v904
    %v2249 = vunpack.c.l.b16 %v905
    %v2250 = vunpack.c.h.b16 %v905
    %v2251 = vunpack.c.l.b16 %v906
    %v2252 = vunpack.c.h.b16 %v906
    %v2253 = vunpack.c.l.b16 %v907
    %v2254 = vunpack.c.h.b16 %v907
    %v2255 = vunpack.c.l.b16 %v908
    %v2256 = vunpack.c.h.b16 %v908
    %v2257 = vunpack.c.l.b16 %v909
    %v2258 = vunpack.c.h.b16 %v909
    %v2259 = vunpack.c.l.b16 %v910
    %v2260 = vunpack.c.h.b16 %v910
    %v2261 = vunpack.c.l.b16 %v911
    %v2262 = vunpack.c.h.b16 %v911
    %v2263 = vunpack.c.l.b16 %v912
    %v2264 = vunpack.c.h.b16 %v912
    %v2265 = vunpack.c.l.b16 %v913
    %v2266 = vunpack.c.h.b16 %v913
    %v2267 = vunpack.c.l.b16 %v914
    %v2268 = vunpack.c.h.b16 %v914
    %v2269 = vunpack.c.l.b16 %v915
    %v2270 = vunpack.c.h.b16 %v915
    %v2271 = vunpack.c.l.b16 %v916
    %v2272 = vunpack.c.h.b16 %v916
    %v2273 = vunpack.c.l.b16 %v917
    %v2274 = vunpack.c.h.b16 %v917
    %v2275 = vunpack.c.l.b16 %v918
    %v2276 = vunpack.c.h.b16 %v918
    %v2277 = vunpack.c.l.b16 %v919
    %v2278 = vunpack.c.h.b16 %v919
    %v2279 = vunpack.c.l.b16 %v920
    %v2280 = vunpack.c.h.b16 %v920
    %v2281 = vunpack.c.l.b16 %v921
    %v2282 = vunpack.c.h.b16 %v921
    %v2283 = vunpack.c.l.b16 %v922
    %v2284 = vunpack.c.h.b16 %v922
    %v2285 = vunpack.c.l.b16 %v923
    %v2286 = vunpack.c.h.b16 %v923
    %v2287 = vunpack.c.l.b16 %v924
    %v2288 = vunpack.c.h.b16 %v924
    %v2289 = vunpack.c.l.b16 %v925
    %v2290 = vunpack.c.h.b16 %v925
    %v2291 = vunpack.c.l.b16 %v926
    %v2292 = vunpack.c.h.b16 %v926
    %v2293 = vunpack.c.l.b16 %v927
    %v2294 = vunpack.c.h.b16 %v927
    %v2295 = vunpack.c.l.b16 %v928
    %v2296 = vunpack.c.h.b16 %v928
    %v2297 = vunpack.c.l.b16 %v929
    %v2298 = vunpack.c.h.b16 %v929
    %v2299 = vunpack.c.l.b16 %v930
    %v2300 = vunpack.c.h.b16 %v930
    %v2301 = vunpack.c.l.b16 %v931
    %v2302 = vunpack.c.h.b16 %v931
    %v2303 = vunpack.c.l.b16 %v932
    %v2304 = vunpack.c.h.b16 %v932
    %v2305 = vunpack.c.l.b16 %v933
    %v2306 = vunpack.c.h.b16 %v933
    %v2307 = vunpack.c.l.b16 %v934
    %v2308 = vunpack.c.h.b16 %v934
    %v2309 = vunpack.c.l.b16 %v935
    %v2310 = vunpack.c.h.b16 %v935
    %v2311 = vunpack.c.l.b16 %v936
    %v2312 = vunpack.c.h.b16 %v936
    %v2313 = vunpack.c.l.b16 %v937
    %v2314 = vunpack.c.h.b16 %v937
    %v2315 = vunpack.c.l.b16 %v938
    %v2316 = vunpack.c.h.b16 %v938
    %v2317 = vunpack.c.l.b16 %v939
    %v2318 = vunpack.c.h.b16 %v939
    %v2319 = vunpack.c.l.b16 %v940
    %v2320 = vunpack.c.h.b16 %v940
    %v2321 = vunpack.c.l.b16 %v941
    %v2322 = vunpack.c.h.b16 %v941
    %v2323 = vunpack.c.l.b16 %v942
    %v2324 = vunpack.c.h.b16 %v942
    %v2325 = vunpack.c.l.b16 %v943
    %v2326 = vunpack.c.h.b16 %v943
    %v2327 = vunpack.c.l.b16 %v944
    %v2328 = vunpack.c.h.b16 %v944
    %v2329 = vunpack.c.l.b16 %v945
    %v2330 = vunpack.c.h.b16 %v945
    %v2331 = vunpack.c.l.b16 %v946
    %v2332 = vunpack.c.h.b16 %v946
    %v2333 = vunpack.c.l.b16 %v947
    %v2334 = vunpack.c.h.b16 %v947
    %v2335 = vunpack.c.l.b16 %v948
    %v2336 = vunpack.c.h.b16 %v948
    %v2337 = vunpack.c.l.b16 %v949
    %v2338 = vunpack.c.h.b16 %v949
    %v2339 = vunpack.c.l.b16 %v950
    %v2340 = vunpack.c.h.b16 %v950
    %v2341 = vunpack.c.l.b16 %v951
    %v2342 = vunpack.c.h.b16 %v951
    %v2343 = vunpack.c.l.b16 %v952
    %v2344 = vunpack.c.h.b16 %v952
    %v2345 = vunpack.c.l.b16 %v953
    %v2346 = vunpack.c.h.b16 %v953
    %v2347 = vunpack.c.l.b16 %v954
    %v2348 = vunpack.c.h.b16 %v954
    %v2349 = vunpack.c.l.b16 %v955
    %v2350 = vunpack.c.h.b16 %v955
    %v2351 = vunpack.c.l.b16 %v956
    %v2352 = vunpack.c.h.b16 %v956
    %v2353 = vunpack.c.l.b16 %v957
    %v2354 = vunpack.c.h.b16 %v957
    %v2355 = vunpack.c.l.b16 %v958
    %v2356 = vunpack.c.h.b16 %v958
    %v2357 = vunpack.c.l.b16 %v959
    %v2358 = vunpack.c.h.b16 %v959
    %v2359 = vunpack.c.l.b16 %v960
    %v2360 = vunpack.c.h.b16 %v960
    %v2361 = vunpack.c.l.b16 %v961
    %v2362 = vunpack.c.h.b16 %v961
    %v2363 = vunpack.c.l.b16 %v962
    %v2364 = vunpack.c.h.b16 %v962
    %v2365 = vunpack.c.l.b16 %v963
    %v2366 = vunpack.c.h.b16 %v963
    %v2367 = vunpack.c.l.b16 %v964
    %v2368 = vunpack.c.h.b16 %v964
    %v2369 = vunpack.c.l.b16 %v965
    %v2370 = vunpack.c.h.b16 %v965
    %v2371 = vunpack.c.l.b16 %v966
    %v2372 = vunpack.c.h.b16 %v966
    %v2373 = vunpack.c.l.b16 %v967
    %v2374 = vunpack.c.h.b16 %v967
    %v2375 = vunpack.c.l.b16 %v968
    %v2376 = vunpack.c.h.b16 %v968
    %v2377 = vunpack.c.l.b16 %v969
    %v2378 = vunpack.c.h.b16 %v969
    %v2379 = vunpack.c.l.b16 %v970
    %v2380 = vunpack.c.h.b16 %v970
    %v2381 = vunpack.c.l.b16 %v971
    %v2382 = vunpack.c.h.b16 %v971
    %v2383 = vunpack.c.l.b16 %v972
    %v2384 = vunpack.c.h.b16 %v972
    %v2385 = vunpack.c.l.b16 %v973
    %v2386 = vunpack.c.h.b16 %v973
    %v2387 = vunpack.c.l.b16 %v974
    %v2388 = vunpack.c.h.b16 %v974
    %v2389 = vunpack.c.l.b16 %v975
    %v2390 = vunpack.c.h.b16 %v975
    %v2391 = vunpack.c.l.b16 %v976
    %v2392 = vunpack.c.h.b16 %v976
    %v2393 = vunpack.c.l.b16 %v977
    %v2394 = vunpack.c.h.b16 %v977
    %v2395 = vunpack.c.l.b16 %v978
    %v2396 = vunpack.c.h.b16 %v978
    %v2397 = vunpack.c.l.b16 %v979
    %v2398 = vunpack.c.h.b16 %v979
    %v2399 = vunpack.c.l.b16 %v980
    %v2400 = vunpack.c.h.b16 %v980
    %v2401 = vunpack.c.l.b16 %v981
    %v2402 = vunpack.c.h.b16 %v981
    %v2403 = vunpack.c.l.b16 %v982
    %v2404 = vunpack.c.h.b16 %v982
    %v2405 = vunpack.c.l.b16 %v983
    %v2406 = vunpack.c.h.b16 %v983
    %v2407 = vunpack.c.l.b16 %v984
    %v2408 = vunpack.c.h.b16 %v984
    %v2409 = vunpack.c.l.b16 %v985
    %v2410 = vunpack.c.h.b16 %v985
    %v2411 = vunpack.c.l.b16 %v986
    %v2412 = vunpack.c.h.b16 %v986
    %v2413 = vunpack.c.l.b16 %v987
    %v2414 = vunpack.c.h.b16 %v987
    %v2415 = vunpack.c.l.b16 %v988
    %v2416 = vunpack.c.h.b16 %v988
    %v2417 = vunpack.c.l.b16 %v989
    %v2418 = vunpack.c.h.b16 %v989
    %v2419 = vunpack.c.l.b16 %v990
    %v2420 = vunpack.c.h.b16 %v990
    %v2421 = vunpack.c.l.b16 %v991
    %v2422 = vunpack.c.h.b16 %v991
    %v2423 = vunpack.c.l.b16 %v992
    %v2424 = vunpack.c.h.b16 %v992
    %v2425 = vunpack.c.l.b16 %v993
    %v2426 = vunpack.c.h.b16 %v993
    %v2427 = vunpack.c.l.b16 %v994
    %v2428 = vunpack.c.h.b16 %v994
    %v2429 = vunpack.c.l.b16 %v995
    %v2430 = vunpack.c.h.b16 %v995
    %v2431 = vunpack.c.l.b16 %v996
    %v2432 = vunpack.c.h.b16 %v996
    %v2433 = vunpack.c.l.b16 %v997
    %v2434 = vunpack.c.h.b16 %v997
    %v2435 = vunpack.c.l.b16 %v998
    %v2436 = vunpack.c.h.b16 %v998
    %v2437 = vunpack.c.l.b16 %v999
    %v2438 = vunpack.c.h.b16 %v999
    %v2439 = vunpack.c.l.b16 %v1000
    %v2440 = vunpack.c.h.b16 %v1000
    %v2441 = vunpack.c.l.b16 %v1001
    %v2442 = vunpack.c.h.b16 %v1001
    %v2443 = vunpack.c.l.b16 %v1002
    %v2444 = vunpack.c.h.b16 %v1002
    %v2445 = vunpack.c.l.b16 %v1003
    %v2446 = vunpack.c.h.b16 %v1003
    %v2447 = vunpack.c.l.b16 %v1004
    %v2448 = vunpack.c.h.b16 %v1004
    %v2449 = vunpack.c.l.b16 %v1005
    %v2450 = vunpack.c.h.b16 %v1005
    %v2451 = vunpack.c.l.b16 %v1006
    %v2452 = vunpack.c.h.b16 %v1006
    %v2453 = vunpack.c.l.b16 %v1007
    %v2454 = vunpack.c.h.b16 %v1007
    %v2455 = vunpack.c.l.b16 %v1008
    %v2456 = vunpack.c.h.b16 %v1008
    %v2457 = vunpack.c.l.b16 %v1009
    %v2458 = vunpack.c.h.b16 %v1009
    %v2459 = vunpack.c.l.b16 %v1010
    %v2460 = vunpack.c.h.b16 %v1010
    %v2461 = vunpack.c.l.b16 %v1011
    %v2462 = vunpack.c.h.b16 %v1011
    %v2463 = vunpack.c.l.b16 %v1012
    %v2464 = vunpack.c.h.b16 %v1012
    %v2465 = vunpack.c.l.b16 %v1013
    %v2466 = vunpack.c.h.b16 %v1013
    %v2467 = vunpack.c.l.b16 %v1014
    %v2468 = vunpack.c.h.b16 %v1014
    %v2469 = vunpack.c.l.b16 %v1015
    %v2470 = vunpack.c.h.b16 %v1015
    %v2471 = vunpack.c.l.b16 %v1016
    %v2472 = vunpack.c.h.b16 %v1016
    %v2473 = vunpack.c.l.b16 %v1017
    %v2474 = vunpack.c.h.b16 %v1017
    %v2475 = vunpack.c.l.b16 %v1018
    %v2476 = vunpack.c.h.b16 %v1018
    %v2477 = vunpack.c.l.b16 %v1019
    %v2478 = vunpack.c.h.b16 %v1019
    %v2479 = vunpack.c.l.b16 %v1020
    %v2480 = vunpack.c.h.b16 %v1020
    %v2481 = vunpack.c.l.b16 %v1021
    %v2482 = vunpack.c.h.b16 %v1021
    %v2483 = vunpack.c.l.b16 %v1022
    %v2484 = vunpack.c.h.b16 %v1022
    %v2485 = vunpack.c.l.b16 %v1023
    %v2486 = vunpack.c.h.b16 %v1023
    %v2487 = vunpack.c.l.b16 %v1024
    %v2488 = vunpack.c.h.b16 %v1024
    %v2489 = vunpack.c.l.b16 %v1025
    %v2490 = vunpack.c.h.b16 %v1025
    %v2491 = vunpack.c.l.b16 %v1026
    %v2492 = vunpack.c.h.b16 %v1026
    %v2493 = vunpack.c.l.b16 %v1027
    %v2494 = vunpack.c.h.b16 %v1027
    %v2495 = vunpack.c.l.b16 %v1028
    %v2496 = vunpack.c.h.b16 %v1028
    %v2497 = vunpack.c.l.b16 %v1029
    %v2498 = vunpack.c.h.b16 %v1029
    %v2499 = vunpack.c.l.b16 %v1030
    %v2500 = vunpack.c.h.b16 %v1030
    %v2501 = vunpack.c.l.b16 %v1031
    %v2502 = vunpack.c.h.b16 %v1031
    %v2503 = vunpack.c.l.b16 %v1032
    %v2504 = vunpack.c.h.b16 %v1032
    %v2505 = vunpack.c.l.b16 %v1033
    %v2506 = vunpack.c.h.b16 %v1033
    %v2507 = vunpack.c.l.b16 %v1034
    %v2508 = vunpack.c.h.b16 %v1034
    %v2509 = vunpack.c.l.b16 %v1035
    %v2510 = vunpack.c.h.b16 %v1035
    %v2511 = vunpack.c.l.b16 %v1036
    %v2512 = vunpack.c.h.b16 %v1036
    %v2513 = vunpack.c.l.b16 %v1037
    %v2514 = vunpack.c.h.b16 %v1037
    %v2515 = vunpack.c.l.b16 %v1038
    %v2516 = vunpack.c.h.b16 %v1038
    %v2517 = vunpack.c.l.b16 %v1039
    %v2518 = vunpack.c.h.b16 %v1039
    %v2519 = vunpack.c.l.b16 %v1040
    %v2520 = vunpack.c.h.b16 %v1040
    %v2521 = vunpack.c.l.b16 %v1041
    %v2522 = vunpack.c.h.b16 %v1041
    %v2523 = vunpack.c.l.b16 %v1042
    %v2524 = vunpack.c.h.b16 %v1042
    %v2525 = vunpack.c.l.b16 %v1043
    %v2526 = vunpack.c.h.b16 %v1043
    %v2527 = vunpack.c.l.b16 %v1044
    %v2528 = vunpack.c.h.b16 %v1044
    %v2529 = vunpack.c.l.b16 %v1045
    %v2530 = vunpack.c.h.b16 %v1045
    %v2531 = vunpack.c.l.b16 %v1046
    %v2532 = vunpack.c.h.b16 %v1046
    %v2533 = vunpack.c.l.b16 %v1047
    %v2534 = vunpack.c.h.b16 %v1047
    %v2535 = vunpack.c.l.b16 %v1048
    %v2536 = vunpack.c.h.b16 %v1048
    %v2537 = vunpack.c.l.b16 %v1049
    %v2538 = vunpack.c.h.b16 %v1049
    %v2539 = vunpack.c.l.b16 %v1050
    %v2540 = vunpack.c.h.b16 %v1050
    %v2541 = vunpack.c.l.b16 %v1051
    %v2542 = vunpack.c.h.b16 %v1051
    %v2543 = vunpack.c.l.b16 %v1052
    %v2544 = vunpack.c.h.b16 %v1052
    %v2545 = vunpack.c.l.b16 %v1053
    %v2546 = vunpack.c.h.b16 %v1053
    %v2547 = vunpack.c.l.b16 %v1054
    %v2548 = vunpack.c.h.b16 %v1054
    %v2549 = vunpack.c.l.b16 %v1055
    %v2550 = vunpack.c.h.b16 %v1055
    %v2551 = vunpack.c.l.b16 %v1056
    %v2552 = vunpack.c.h.b16 %v1056
    %v2553 = vunpack.c.l.b16 %v1057
    %v2554 = vunpack.c.h.b16 %v1057
    %v2555 = vunpack.c.l.b16 %v1058
    %v2556 = vunpack.c.h.b16 %v1058
    %v2557 = vunpack.c.l.b16 %v1059
    %v2558 = vunpack.c.h.b16 %v1059
    %v2559 = vunpack.c.l.b16 %v1060
    %v2560 = vunpack.c.h.b16 %v1060
    %v2561 = vunpack.c.l.b16 %v1061
    %v2562 = vunpack.c.h.b16 %v1061
    %v2563 = vunpack.c.l.b16 %v1062
    %v2564 = vunpack.c.h.b16 %v1062
    %v2565 = vunpack.c.l.b16 %v1063
    %v2566 = vunpack.c.h.b16 %v1063
    %v2567 = vunpack.c.l.b16 %v1064
    %v2568 = vunpack.c.h.b16 %v1064
    %v2569 = vunpack.c.l.b16 %v1065
    %v2570 = vunpack.c.h.b16 %v1065
    %v2571 = vunpack.c.l.b16 %v1066
    %v2572 = vunpack.c.h.b16 %v1066
    %v2573 = vunpack.c.l.b16 %v1067
    %v2574 = vunpack.c.h.b16 %v1067
    %v2575 = vunpack.c.l.b16 %v1068
    %v2576 = vunpack.c.h.b16 %v1068
    %v2577 = vunpack.c.l.b16 %v1069
    %v2578 = vunpack.c.h.b16 %v1069
    %v2579 = vunpack.c.l.b16 %v1070
    %v2580 = vunpack.c.h.b16 %v1070
    %v2581 = vunpack.c.l.b16 %v1071
    %v2582 = vunpack.c.h.b16 %v1071
    %v2583 = vunpack.c.l.b16 %v1072
    %v2584 = vunpack.c.h.b16 %v1072
    %v2585 = vunpack.c.l.b16 %v1073
    %v2586 = vunpack.c.h.b16 %v1073
    %v2587 = vunpack.c.l.b16 %v1074
    %v2588 = vunpack.c.h.b16 %v1074
    %v2589 = vunpack.c.l.b16 %v1075
    %v2590 = vunpack.c.h.b16 %v1075
    %v2591 = vunpack.c.l.b16 %v1076
    %v2592 = vunpack.c.h.b16 %v1076
    %v2593 = vunpack.c.l.b16 %v1077
    %v2594 = vunpack.c.h.b16 %v1077
    %v2595 = vunpack.c.l.b16 %v1078
    %v2596 = vunpack.c.h.b16 %v1078
    %v2597 = vunpack.c.l.b16 %v1079
    %v2598 = vunpack.c.h.b16 %v1079
    %v2599 = vunpack.c.l.b16 %v1080
    %v2600 = vunpack.c.h.b16 %v1080
    %v2601 = vunpack.c.l.b16 %v1081
    %v2602 = vunpack.c.h.b16 %v1081
    %v2603 = vunpack.c.l.b16 %v1082
    %v2604 = vunpack.c.h.b16 %v1082
    %v2605 = vunpack.c.l.b16 %v1083
    %v2606 = vunpack.c.h.b16 %v1083
    %v2607 = vunpack.c.l.b16 %v1084
    %v2608 = vunpack.c.h.b16 %v1084
    %v2609 = vunpack.c.l.b16 %v1085
    %v2610 = vunpack.c.h.b16 %v1085
    %v2611 = vunpack.c.l.b16 %v1086
    %v2612 = vunpack.c.h.b16 %v1086
    %v2613 = vunpack.c.l.b16 %v1087
    %v2614 = vunpack.c.h.b16 %v1087
    %v2615 = vunpack.c.l.b16 %v1088
    %v2616 = vunpack.c.h.b16 %v1088
    %v2617 = vunpack.c.l.b16 %v1089
    %v2618 = vunpack.c.h.b16 %v1089
    %v2619 = vunpack.c.l.b16 %v1090
    %v2620 = vunpack.c.h.b16 %v1090
    %v2621 = vunpack.c.l.b16 %v1091
    %v2622 = vunpack.c.h.b16 %v1091
    %v2623 = vunpack.c.l.b16 %v1092
    %v2624 = vunpack.c.h.b16 %v1092
    %v2625 = vunpack.c.l.b16 %v1093
    %v2626 = vunpack.c.h.b16 %v1093
    %v2627 = vunpack.c.l.b16 %v1094
    %v2628 = vunpack.c.h.b16 %v1094
    %v2629 = vunpack.c.l.b16 %v1095
    %v2630 = vunpack.c.h.b16 %v1095
    %v2631 = vunpack.c.l.b16 %v1096
    %v2632 = vunpack.c.h.b16 %v1096
    %v2633 = vpack.c.b16 %v1617, %v1609
    %v2634 = vpack.c.b16 %v1618, %v1610
    %v2635 = vpack.c.b16 %v1619, %v1611
    %v2636 = vpack.c.b16 %v1620, %v1612
    %v2637 = vpack.c.b16 %v1621, %v1613
    %v2638 = vpack.c.b16 %v1622, %v1614
    %v2639 = vpack.c.b16 %v1623, %v1615
    %v2640 = vpack.c.b16 %v1624, %v1616
    %v2641 = vpack.c.b16 %v1633, %v1625
    %v2642 = vpack.c.b16 %v1634, %v1626
    %v2643 = vpack.c.b16 %v1635, %v1627
    %v2644 = vpack.c.b16 %v1636, %v1628
    %v2645 = vpack.c.b16 %v1637, %v1629
    %v2646 = vpack.c.b16 %v1638, %v1630
    %v2647 = vpack.c.b16 %v1639, %v1631
    %v2648 = vpack.c.b16 %v1640, %v1632
    %v2649 = vpack.c.b16 %v1649, %v1641
    %v2650 = vpack.c.b16 %v1650, %v1642
    %v2651 = vpack.c.b16 %v1651, %v1643
    %v2652 = vpack.c.b16 %v1652, %v1644
    %v2653 = vpack.c.b16 %v1653, %v1645
    %v2654 = vpack.c.b16 %v1654, %v1646
    %v2655 = vpack.c.b16 %v1655, %v1647
    %v2656 = vpack.c.b16 %v1656, %v1648
    %v2657 = vpack.c.b16 %v1665, %v1657
    %v2658 = vpack.c.b16 %v1666, %v1658
    %v2659 = vpack.c.b16 %v1667, %v1659
    %v2660 = vpack.c.b16 %v1668, %v1660
    %v2661 = vpack.c.b16 %v1669, %v1661
    %v2662 = vpack.c.b16 %v1670, %v1662
    %v2663 = vpack.c.b16 %v1671, %v1663
    %v2664 = vpack.c.b16 %v1672, %v1664
    %v2665 = vpack.c.b16 %v1681, %v1673
    %v2666 = vpack.c.b16 %v1682, %v1674
    %v2667 = vpack.c.b16 %v1683, %v1675
    %v2668 = vpack.c.b16 %v1684, %v1676
    %v2669 = vpack.c.b16 %v1685, %v1677
    %v2670 = vpack.c.b16 %v1686, %v1678
    %v2671 = vpack.c.b16 %v1687, %v1679
    %v2672 = vpack.c.b16 %v1688, %v1680
    %v2673 = vpack.c.b16 %v1697, %v1689
    %v2674 = vpack.c.b16 %v1698, %v1690
    %v2675 = vpack.c.b16 %v1699, %v1691
    %v2676 = vpack.c.b16 %v1700, %v1692
    %v2677 = vpack.c.b16 %v1701, %v1693
    %v2678 = vpack.c.b16 %v1702, %v1694
    %v2679 = vpack.c.b16 %v1703, %v1695
    %v2680 = vpack.c.b16 %v1704, %v1696
    %v2681 = vpack.c.b16 %v1713, %v1705
    %v2682 = vpack.c.b16 %v1714, %v1706
    %v2683 = vpack.c.b16 %v1715, %v1707
    %v2684 = vpack.c.b16 %v1716, %v1708
    %v2685 = vpack.c.b16 %v1717, %v1709
    %v2686 = vpack.c.b16 %v1718, %v1710
    %v2687 = vpack.c.b16 %v1719, %v1711
    %v2688 = vpack.c.b16 %v1720, %v1712
    %v2689 = vpack.c.b16 %v1729, %v1721
    %v2690 = vpack.c.b16 %v1730, %v1722
    %v2691 = vpack.c.b16 %v1731, %v1723
    %v2692 = vpack.c.b16 %v1732, %v1724
    %v2693 = vpack.c.b16 %v1733, %v1725
    %v2694 = vpack.c.b16 %v1734, %v1726
    %v2695 = vpack.c.b16 %v1735, %v1727
    %v2696 = vpack.c.b16 %v1736, %v1728
    %v2697 = vpack.c.b16 %v1745, %v1737
    %v2698 = vpack.c.b16 %v1746, %v1738
    %v2699 = vpack.c.b16 %v1747, %v1739
    %v2700 = vpack.c.b16 %v1748, %v1740
    %v2701 = vpack.c.b16 %v1749, %v1741
    %v2702 = vpack.c.b16 %v1750, %v1742
    %v2703 = vpack.c.b16 %v1751, %v1743
    %v2704 = vpack.c.b16 %v1752, %v1744
    %v2705 = vpack.c.b16 %v1761, %v1753
    %v2706 = vpack.c.b16 %v1762, %v1754
    %v2707 = vpack.c.b16 %v1763, %v1755
    %v2708 = vpack.c.b16 %v1764, %v1756
    %v2709 = vpack.c.b16 %v1765, %v1757
    %v2710 = vpack.c.b16 %v1766, %v1758
    %v2711 = vpack.c.b16 %v1767, %v1759
    %v2712 = vpack.c.b16 %v1768, %v1760
    %v2713 = vpack.c.b16 %v1777, %v1769
    %v2714 = vpack.c.b16 %v1778, %v1770
    %v2715 = vpack.c.b16 %v1779, %v1771
    %v2716 = vpack.c.b16 %v1780, %v1772
    %v2717 = vpack.c.b16 %v1781, %v1773
    %v2718 = vpack.c.b16 %v1782, %v1774
    %v2719 = vpack.c.b16 %v1783, %v1775
    %v2720 = vpack.c.b16 %v1784, %v1776
    %v2721 = vpack.c.b16 %v1793, %v1785
    %v2722 = vpack.c.b16 %v1794, %v1786
    %v2723 = vpack.c.b16 %v1795, %v1787
    %v2724 = vpack.c.b16 %v1796, %v1788
    %v2725 = vpack.c.b16 %v1797, %v1789
    %v2726 = vpack.c.b16 %v1798, %v1790
    %v2727 = vpack.c.b16 %v1799, %v1791
    %v2728 = vpack.c.b16 %v1800, %v1792
    %v2729 = vpack.c.b16 %v1809, %v1801
    %v2730 = vpack.c.b16 %v1810, %v1802
    %v2731 = vpack.c.b16 %v1811, %v1803
    %v2732 = vpack.c.b16 %v1812, %v1804
    %v2733 = vpack.c.b16 %v1813, %v1805
    %v2734 = vpack.c.b16 %v1814, %v1806
    %v2735 = vpack.c.b16 %v1815, %v1807
    %v2736 = vpack.c.b16 %v1816, %v1808
    %v2737 = vpack.c.b16 %v1825, %v1817
    %v2738 = vpack.c.b16 %v1826, %v1818
    %v2739 = vpack.c.b16 %v1827, %v1819
    %v2740 = vpack.c.b16 %v1828, %v1820
    %v2741 = vpack.c.b16 %v1829, %v1821
    %v2742 = vpack.c.b16 %v1830, %v1822
    %v2743 = vpack.c.b16 %v1831, %v1823
    %v2744 = vpack.c.b16 %v1832, %v1824
    %v2745 = vpack.c.b16 %v1841, %v1833
    %v2746 = vpack.c.b16 %v1842, %v1834
    %v2747 = vpack.c.b16 %v1843, %v1835
    %v2748 = vpack.c.b16 %v1844, %v1836
    %v2749 = vpack.c.b16 %v1845, %v1837
    %v2750 = vpack.c.b16 %v1846, %v1838
    %v2751 = vpack.c.b16 %v1847, %v1839
    %v2752 = vpack.c.b16 %v1848, %v1840
    %v2753 = vpack.c.b16 %v1857, %v1849
    %v2754 = vpack.c.b16 %v1858, %v1850
    %v2755 = vpack.c.b16 %v1859, %v1851
    %v2756 = vpack.c.b16 %v1860, %v1852
    %v2757 = vpack.c.b16 %v1861, %v1853
    %v2758 = vpack.c.b16 %v1862, %v1854
    %v2759 = vpack.c.b16 %v1863, %v1855
    %v2760 = vpack.c.b16 %v1864, %v1856
    %v2761 = vpack.c.b16 %v1873, %v1865
    %v2762 = vpack.c.b16 %v1874, %v1866
    %v2763 = vpack.c.b16 %v1875, %v1867
    %v2764 = vpack.c.b16 %v1876, %v1868
    %v2765 = vpack.c.b16 %v1877, %v1869
    %v2766 = vpack.c.b16 %v1878, %v1870
    %v2767 = vpack.c.b16 %v1879, %v1871
    %v2768 = vpack.c.b16 %v1880, %v1872
    %v2769 = vpack.c.b16 %v1889, %v1881
    %v2770 = vpack.c.b16 %v1890, %v1882
    %v2771 = vpack.c.b16 %v1891, %v1883
    %v2772 = vpack.c.b16 %v1892, %v1884
    %v2773 = vpack.c.b16 %v1893, %v1885
    %v2774 = vpack.c.b16 %v1894, %v1886
    %v2775 = vpack.c.b16 %v1895, %v1887
    %v2776 = vpack.c.b16 %v1896, %v1888
    %v2777 = vpack.c.b16 %v1905, %v1897
    %v2778 = vpack.c.b16 %v1906, %v1898
    %v2779 = vpack.c.b16 %v1907, %v1899
    %v2780 = vpack.c.b16 %v1908, %v1900
    %v2781 = vpack.c.b16 %v1909, %v1901
    %v2782 = vpack.c.b16 %v1910, %v1902
    %v2783 = vpack.c.b16 %v1911, %v1903
    %v2784 = vpack.c.b16 %v1912, %v1904
    %v2785 = vpack.c.b16 %v1921, %v1913
    %v2786 = vpack.c.b16 %v1922, %v1914
    %v2787 = vpack.c.b16 %v1923, %v1915
    %v2788 = vpack.c.b16 %v1924, %v1916
    %v2789 = vpack.c.b16 %v1925, %v1917
    %v2790 = vpack.c.b16 %v1926, %v1918
    %v2791 = vpack.c.b16 %v1927, %v1919
    %v2792 = vpack.c.b16 %v1928, %v1920
    %v2793 = vpack.c.b16 %v1937, %v1929
    %v2794 = vpack.c.b16 %v1938, %v1930
    %v2795 = vpack.c.b16 %v1939, %v1931
    %v2796 = vpack.c.b16 %v1940, %v1932
    %v2797 = vpack.c.b16 %v1941, %v1933
    %v2798 = vpack.c.b16 %v1942, %v1934
    %v2799 = vpack.c.b16 %v1943, %v1935
    %v2800 = vpack.c.b16 %v1944, %v1936
    %v2801 = vpack.c.b16 %v1953, %v1945
    %v2802 = vpack.c.b16 %v1954, %v1946
    %v2803 = vpack.c.b16 %v1955, %v1947
    %v2804 = vpack.c.b16 %v1956, %v1948
    %v2805 = vpack.c.b16 %v1957, %v1949
    %v2806 = vpack.c.b16 %v1958, %v1950
    %v2807 = vpack.c.b16 %v1959, %v1951
    %v2808 = vpack.c.b16 %v1960, %v1952
    %v2809 = vpack.c.b16 %v1969, %v1961
    %v2810 = vpack.c.b16 %v1970, %v1962
    %v2811 = vpack.c.b16 %v1971, %v1963
    %v2812 = vpack.c.b16 %v1972, %v1964
    %v2813 = vpack.c.b16 %v1973, %v1965
    %v2814 = vpack.c.b16 %v1974, %v1966
    %v2815 = vpack.c.b16 %v1975, %v1967
    %v2816 = vpack.c.b16 %v1976, %v1968
    %v2817 = vpack.c.b16 %v1985, %v1977
    %v2818 = vpack.c.b16 %v1986, %v1978
    %v2819 = vpack.c.b16 %v1987, %v1979
    %v2820 = vpack.c.b16 %v1988, %v1980
    %v2821 = vpack.c.b16 %v1989, %v1981
    %v2822 = vpack.c.b16 %v1990, %v1982
    %v2823 = vpack.c.b16 %v1991, %v1983
    %v2824 = vpack.c.b16 %v1992, %v1984
    %v2825 = vpack.c.b16 %v2001, %v1993
    %v2826 = vpack.c.b16 %v2002, %v1994
    %v2827 = vpack.c.b16 %v2003, %v1995
    %v2828 = vpack.c.b16 %v2004, %v1996
    %v2829 = vpack.c.b16 %v2005, %v1997
    %v2830 = vpack.c.b16 %v2006, %v1998
    %v2831 = vpack.c.b16 %v2007, %v1999
    %v2832 = vpack.c.b16 %v2008, %v2000
    %v2833 = vpack.c.b16 %v2017, %v2009
    %v2834 = vpack.c.b16 %v2018, %v2010
    %v2835 = vpack.c.b16 %v2019, %v2011
    %v2836 = vpack.c.b16 %v2020, %v2012
    %v2837 = vpack.c.b16 %v2021, %v2013
    %v2838 = vpack.c.b16 %v2022, %v2014
    %v2839 = vpack.c.b16 %v2023, %v2015
    %v2840 = vpack.c.b16 %v2024, %v2016
    %v2841 = vpack.c.b16 %v2033, %v2025
    %v2842 = vpack.c.b16 %v2034, %v2026
    %v2843 = vpack.c.b16 %v2035, %v2027
    %v2844 = vpack.c.b16 %v2036, %v2028
    %v2845 = vpack.c.b16 %v2037, %v2029
    %v2846 = vpack.c.b16 %v2038, %v2030
    %v2847 = vpack.c.b16 %v2039, %v2031
    %v2848 = vpack.c.b16 %v2040, %v2032
    %v2849 = vpack.c.b16 %v2049, %v2041
    %v2850 = vpack.c.b16 %v2050, %v2042
    %v2851 = vpack.c.b16 %v2051, %v2043
    %v2852 = vpack.c.b16 %v2052, %v2044
    %v2853 = vpack.c.b16 %v2053, %v2045
    %v2854 = vpack.c.b16 %v2054, %v2046
    %v2855 = vpack.c.b16 %v2055, %v2047
    %v2856 = vpack.c.b16 %v2056, %v2048
    %v2857 = vpack.c.b16 %v2065, %v2057
    %v2858 = vpack.c.b16 %v2066, %v2058
    %v2859 = vpack.c.b16 %v2067, %v2059
    %v2860 = vpack.c.b16 %v2068, %v2060
    %v2861 = vpack.c.b16 %v2069, %v2061
    %v2862 = vpack.c.b16 %v2070, %v2062
    %v2863 = vpack.c.b16 %v2071, %v2063
    %v2864 = vpack.c.b16 %v2072, %v2064
    %v2865 = vpack.c.b16 %v2081, %v2073
    %v2866 = vpack.c.b16 %v2082, %v2074
    %v2867 = vpack.c.b16 %v2083, %v2075
    %v2868 = vpack.c.b16 %v2084, %v2076
    %v2869 = vpack.c.b16 %v2085, %v2077
    %v2870 = vpack.c.b16 %v2086, %v2078
    %v2871 = vpack.c.b16 %v2087, %v2079
    %v2872 = vpack.c.b16 %v2088, %v2080
    %v2873 = vpack.c.b16 %v2097, %v2089
    %v2874 = vpack.c.b16 %v2098, %v2090
    %v2875 = vpack.c.b16 %v2099, %v2091
    %v2876 = vpack.c.b16 %v2100, %v2092
    %v2877 = vpack.c.b16 %v2101, %v2093
    %v2878 = vpack.c.b16 %v2102, %v2094
    %v2879 = vpack.c.b16 %v2103, %v2095
    %v2880 = vpack.c.b16 %v2104, %v2096
    %v2881 = vpack.c.b16 %v2113, %v2105
    %v2882 = vpack.c.b16 %v2114, %v2106
    %v2883 = vpack.c.b16 %v2115, %v2107
    %v2884 = vpack.c.b16 %v2116, %v2108
    %v2885 = vpack.c.b16 %v2117, %v2109
    %v2886 = vpack.c.b16 %v2118, %v2110
    %v2887 = vpack.c.b16 %v2119, %v2111
    %v2888 = vpack.c.b16 %v2120, %v2112
    %v2889 = vpack.c.b16 %v2129, %v2121
    %v2890 = vpack.c.b16 %v2130, %v2122
    %v2891 = vpack.c.b16 %v2131, %v2123
    %v2892 = vpack.c.b16 %v2132, %v2124
    %v2893 = vpack.c.b16 %v2133, %v2125
    %v2894 = vpack.c.b16 %v2134, %v2126
    %v2895 = vpack.c.b16 %v2135, %v2127
    %v2896 = vpack.c.b16 %v2136, %v2128
    %v2897 = vpack.c.b16 %v2145, %v2137
    %v2898 = vpack.c.b16 %v2146, %v2138
    %v2899 = vpack.c.b16 %v2147, %v2139
    %v2900 = vpack.c.b16 %v2148, %v2140
    %v2901 = vpack.c.b16 %v2149, %v2141
    %v2902 = vpack.c.b16 %v2150, %v2142
    %v2903 = vpack.c.b16 %v2151, %v2143
    %v2904 = vpack.c.b16 %v2152, %v2144
    %v2905 = vpack.c.b16 %v2161, %v2153
    %v2906 = vpack.c.b16 %v2162, %v2154
    %v2907 = vpack.c.b16 %v2163, %v2155
    %v2908 = vpack.c.b16 %v2164, %v2156
    %v2909 = vpack.c.b16 %v2165, %v2157
    %v2910 = vpack.c.b16 %v2166, %v2158
    %v2911 = vpack.c.b16 %v2167, %v2159
    %v2912 = vpack.c.b16 %v2168, %v2160
    %v2913 = vpack.c.b16 %v2177, %v2169
    %v2914 = vpack.c.b16 %v2178, %v2170
    %v2915 = vpack.c.b16 %v2179, %v2171
    %v2916 = vpack.c.b16 %v2180, %v2172
    %v2917 = vpack.c.b16 %v2181, %v2173
    %v2918 = vpack.c.b16 %v2182, %v2174
    %v2919 = vpack.c.b16 %v2183, %v2175
    %v2920 = vpack.c.b16 %v2184, %v2176
    %v2921 = vpack.c.b16 %v2193, %v2185
    %v2922 = vpack.c.b16 %v2194, %v2186
    %v2923 = vpack.c.b16 %v2195, %v2187
    %v2924 = vpack.c.b16 %v2196, %v2188
    %v2925 = vpack.c.b16 %v2197, %v2189
    %v2926 = vpack.c.b16 %v2198, %v2190
    %v2927 = vpack.c.b16 %v2199, %v2191
    %v2928 = vpack.c.b16 %v2200, %v2192
    %v2929 = vpack.c.b16 %v2209, %v2201
    %v2930 = vpack.c.b16 %v2210, %v2202
    %v2931 = vpack.c.b16 %v2211, %v2203
    %v2932 = vpack.c.b16 %v2212, %v2204
    %v2933 = vpack.c.b16 %v2213, %v2205
    %v2934 = vpack.c.b16 %v2214, %v2206
    %v2935 = vpack.c.b16 %v2215, %v2207
    %v2936 = vpack.c.b16 %v2216, %v2208
    %v2937 = vpack.c.b16 %v2225, %v2217
    %v2938 = vpack.c.b16 %v2226, %v2218
    %v2939 = vpack.c.b16 %v2227, %v2219
    %v2940 = vpack.c.b16 %v2228, %v2220
    %v2941 = vpack.c.b16 %v2229, %v2221
    %v2942 = vpack.c.b16 %v2230, %v2222
    %v2943 = vpack.c.b16 %v2231, %v2223
    %v2944 = vpack.c.b16 %v2232, %v2224
    %v2945 = vpack.c.b16 %v2241, %v2233
    %v2946 = vpack.c.b16 %v2242, %v2234
    %v2947 = vpack.c.b16 %v2243, %v2235
    %v2948 = vpack.c.b16 %v2244, %v2236
    %v2949 = vpack.c.b16 %v2245, %v2237
    %v2950 = vpack.c.b16 %v2246, %v2238
    %v2951 = vpack.c.b16 %v2247, %v2239
    %v2952 = vpack.c.b16 %v2248, %v2240
    %v2953 = vpack.c.b16 %v2257, %v2249
    %v2954 = vpack.c.b16 %v2258, %v2250
    %v2955 = vpack.c.b16 %v2259, %v2251
    %v2956 = vpack.c.b16 %v2260, %v2252
    %v2957 = vpack.c.b16 %v2261, %v2253
    %v2958 = vpack.c.b16 %v2262, %v2254
    %v2959 = vpack.c.b16 %v2263, %v2255
    %v2960 = vpack.c.b16 %v2264, %v2256
    %v2961 = vpack.c.b16 %v2273, %v2265
    %v2962 = vpack.c.b16 %v2274, %v2266
    %v2963 = vpack.c.b16 %v2275, %v2267
    %v2964 = vpack.c.b16 %v2276, %v2268
    %v2965 = vpack.c.b16 %v2277, %v2269
    %v2966 = vpack.c.b16 %v2278, %v2270
    %v2967 = vpack.c.b16 %v2279, %v2271
    %v2968 = vpack.c.b16 %v2280, %v2272
    %v2969 = vpack.c.b16 %v2289, %v2281
    %v2970 = vpack.c.b16 %v2290, %v2282
    %v2971 = vpack.c.b16 %v2291, %v2283
    %v2972 = vpack.c.b16 %v2292, %v2284
    %v2973 = vpack.c.b16 %v2293, %v2285
    %v2974 = vpack.c.b16 %v2294, %v2286
    %v2975 = vpack.c.b16 %v2295, %v2287
    %v2976 = vpack.c.b16 %v2296, %v2288
    %v2977 = vpack.c.b16 %v2305, %v2297
    %v2978 = vpack.c.b16 %v2306, %v2298
    %v2979 = vpack.c.b16 %v2307, %v2299
    %v2980 = vpack.c.b16 %v2308, %v2300
    %v2981 = vpack.c.b16 %v2309, %v2301
    %v2982 = vpack.c.b16 %v2310, %v2302
    %v2983 = vpack.c.b16 %v2311, %v2303
    %v2984 = vpack.c.b16 %v2312, %v2304
    %v2985 = vpack.c.b16 %v2321, %v2313
    %v2986 = vpack.c.b16 %v2322, %v2314
    %v2987 = vpack.c.b16 %v2323, %v2315
    %v2988 = vpack.c.b16 %v2324, %v2316
    %v2989 = vpack.c.b16 %v2325, %v2317
    %v2990 = vpack.c.b16 %v2326, %v2318
    %v2991 = vpack.c.b16 %v2327, %v2319
    %v2992 = vpack.c.b16 %v2328, %v2320
    %v2993 = vpack.c.b16 %v2337, %v2329
    %v2994 = vpack.c.b16 %v2338, %v2330
    %v2995 = vpack.c.b16 %v2339, %v2331
    %v2996 = vpack.c.b16 %v2340, %v2332
    %v2997 = vpack.c.b16 %v2341, %v2333
    %v2998 = vpack.c.b16 %v2342, %v2334
    %v2999 = vpack.c.b16 %v2343, %v2335
    %v3000 = vpack.c.b16 %v2344, %v2336
    %v3001 = vpack.c.b16 %v2353, %v2345
    %v3002 = vpack.c.b16 %v2354, %v2346
    %v3003 = vpack.c.b16 %v2355, %v2347
    %v3004 = vpack.c.b16 %v2356, %v2348
    %v3005 = vpack.c.b16 %v2357, %v2349
    %v3006 = vpack.c.b16 %v2358, %v2350
    %v3007 = vpack.c.b16 %v2359, %v2351
    %v3008 = vpack.c.b16 %v2360, %v2352
    %v3009 = vpack.c.b16 %v2369, %v2361
    %v3010 = vpack.c.b16 %v2370, %v2362
    %v3011 = vpack.c.b16 %v2371, %v2363
    %v3012 = vpack.c.b16 %v2372, %v2364
    %v3013 = vpack.c.b16 %v2373, %v2365
    %v3014 = vpack.c.b16 %v2374, %v2366
    %v3015 = vpack.c.b16 %v2375, %v2367
    %v3016 = vpack.c.b16 %v2376, %v2368
    %v3017 = vpack.c.b16 %v2385, %v2377
    %v3018 = vpack.c.b16 %v2386, %v2378
    %v3019 = vpack.c.b16 %v2387, %v2379
    %v3020 = vpack.c.b16 %v2388, %v2380
    %v3021 = vpack.c.b16 %v2389, %v2381
    %v3022 = vpack.c.b16 %v2390, %v2382
    %v3023 = vpack.c.b16 %v2391, %v2383
    %v3024 = vpack.c.b16 %v2392, %v2384
    %v3025 = vpack.c.b16 %v2401, %v2393
    %v3026 = vpack.c.b16 %v2402, %v2394
    %v3027 = vpack.c.b16 %v2403, %v2395
    %v3028 = vpack.c.b16 %v2404, %v2396
    %v3029 = vpack.c.b16 %v2405, %v2397
    %v3030 = vpack.c.b16 %v2406, %v2398
    %v3031 = vpack.c.b16 %v2407, %v2399
    %v3032 = vpack.c.b16 %v2408, %v2400
    %v3033 = vpack.c.b16 %v2417, %v2409
    %v3034 = vpack.c.b16 %v2418, %v2410
    %v3035 = vpack.c.b16 %v2419, %v2411
    %v3036 = vpack.c.b16 %v2420, %v2412
    %v3037 = vpack.c.b16 %v2421, %v2413
    %v3038 = vpack.c.b16 %v2422, %v2414
    %v3039 = vpack.c.b16 %v2423, %v2415
    %v3040 = vpack.c.b16 %v2424, %v2416
    %v3041 = vpack.c.b16 %v2433, %v2425
    %v3042 = vpack.c.b16 %v2434, %v2426
    %v3043 = vpack.c.b16 %v2435, %v2427
    %v3044 = vpack.c.b16 %v2436, %v2428
    %v3045 = vpack.c.b16 %v2437, %v2429
    %v3046 = vpack.c.b16 %v2438, %v2430
    %v3047 = vpack.c.b16 %v2439, %v2431
    %v3048 = vpack.c.b16 %v2440, %v2432
    %v3049 = vpack.c.b16 %v2449, %v2441
    %v3050 = vpack.c.b16 %v2450, %v2442
    %v3051 = vpack.c.b16 %v2451, %v2443
    %v3052 = vpack.c.b16 %v2452, %v2444
    %v3053 = vpack.c.b16 %v2453, %v2445
    %v3054 = vpack.c.b16 %v2454, %v2446
    %v3055 = vpack.c.b16 %v2455, %v2447
    %v3056 = vpack.c.b16 %v2456, %v2448
    %v3057 = vpack.c.b16 %v2465, %v2457
    %v3058 = vpack.c.b16 %v2466, %v2458
    %v3059 = vpack.c.b16 %v2467, %v2459
    %v3060 = vpack.c.b16 %v2468, %v2460
    %v3061 = vpack.c.b16 %v2469, %v2461
    %v3062 = vpack.c.b16 %v2470, %v2462
    %v3063 = vpack.c.b16 %v2471, %v2463
    %v3064 = vpack.c.b16 %v2472, %v2464
    %v3065 = vpack.c.b16 %v2481, %v2473
    %v3066 = vpack.c.b16 %v2482, %v2474
    %v3067 = vpack.c.b16 %v2483, %v2475
    %v3068 = vpack.c.b16 %v2484, %v2476
    %v3069 = vpack.c.b16 %v2485, %v2477
    %v3070 = vpack.c.b16 %v2486, %v2478
    %v3071 = vpack.c.b16 %v2487, %v2479
    %v3072 = vpack.c.b16 %v2488, %v2480
    %v3073 = vpack.c.b16 %v2497, %v2489
    %v3074 = vpack.c.b16 %v2498, %v2490
    %v3075 = vpack.c.b16 %v2499, %v2491
    %v3076 = vpack.c.b16 %v2500, %v2492
    %v3077 = vpack.c.b16 %v2501, %v2493
    %v3078 = vpack.c.b16 %v2502, %v2494
    %v3079 = vpack.c.b16 %v2503, %v2495
    %v3080 = vpack.c.b16 %v2504, %v2496
    %v3081 = vpack.c.b16 %v2513, %v2505
    %v3082 = vpack.c.b16 %v2514, %v2506
    %v3083 = vpack.c.b16 %v2515, %v2507
    %v3084 = vpack.c.b16 %v2516, %v2508
    %v3085 = vpack.c.b16 %v2517, %v2509
    %v3086 = vpack.c.b16 %v2518, %v2510
    %v3087 = vpack.c.b16 %v2519, %v2511
    %v3088 = vpack.c.b16 %v2520, %v2512
    %v3089 = vpack.c.b16 %v2529, %v2521
    %v3090 = vpack.c.b16 %v2530, %v2522
    %v3091 = vpack.c.b16 %v2531, %v2523
    %v3092 = vpack.c.b16 %v2532, %v2524
    %v3093 = vpack.c.b16 %v2533, %v2525
    %v3094 = vpack.c.b16 %v2534, %v2526
    %v3095 = vpack.c.b16 %v2535, %v2527
    %v3096 = vpack.c.b16 %v2536, %v2528
    %v3097 = vpack.c.b16 %v2545, %v2537
    %v3098 = vpack.c.b16 %v2546, %v2538
    %v3099 = vpack.c.b16 %v2547, %v2539
    %v3100 = vpack.c.b16 %v2548, %v2540
    %v3101 = vpack.c.b16 %v2549, %v2541
    %v3102 = vpack.c.b16 %v2550, %v2542
    %v3103 = vpack.c.b16 %v2551, %v2543
    %v3104 = vpack.c.b16 %v2552, %v2544
    %v3105 = vpack.c.b16 %v2561, %v2553
    %v3106 = vpack.c.b16 %v2562, %v2554
    %v3107 = vpack.c.b16 %v2563, %v2555
    %v3108 = vpack.c.b16 %v2564, %v2556
    %v3109 = vpack.c.b16 %v2565, %v2557
    %v3110 = vpack.c.b16 %v2566, %v2558
    %v3111 = vpack.c.b16 %v2567, %v2559
    %v3112 = vpack.c.b16 %v2568, %v2560
    %v3113 = vpack.c.b16 %v2577, %v2569
    %v3114 = vpack.c.b16 %v2578, %v2570
    %v3115 = vpack.c.b16 %v2579, %v2571
    %v3116 = vpack.c.b16 %v2580, %v2572
    %v3117 = vpack.c.b16 %v2581, %v2573
    %v3118 = vpack.c.b16 %v2582, %v2574
    %v3119 = vpack.c.b16 %v2583, %v2575
    %v3120 = vpack.c.b16 %v2584, %v2576
    %v3121 = vpack.c.b16 %v2593, %v2585
    %v3122 = vpack.c.b16 %v2594, %v2586
    %v3123 = vpack.c.b16 %v2595, %v2587
    %v3124 = vpack.c.b16 %v2596, %v2588
    %v3125 = vpack.c.b16 %v2597, %v2589
    %v3126 = vpack.c.b16 %v2598, %v2590
    %v3127 = vpack.c.b16 %v2599, %v2591
    %v3128 = vpack.c.b16 %v2600, %v2592
    %v3129 = vpack.c.b16 %v2609, %v2601
    %v3130 = vpack.c.b16 %v2610, %v2602
    %v3131 = vpack.c.b16 %v2611, %v2603
    %v3132 = vpack.c.b16 %v2612, %v2604
    %v3133 = vpack.c.b16 %v2613, %v2605
    %v3134 = vpack.c.b16 %v2614, %v2606
    %v3135 = vpack.c.b16 %v2615, %v2607
    %v3136 = vpack.c.b16 %v2616, %v2608
    %v3137 = vpack.c.b16 %v2625, %v2617
    %v3138 = vpack.c.b16 %v2626, %v2618
    %v3139 = vpack.c.b16 %v2627, %v2619
    %v3140 = vpack.c.b16 %v2628, %v2620
    %v3141 = vpack.c.b16 %v2629, %v2621
    %v3142 = vpack.c.b16 %v2630, %v2622
    %v3143 = vpack.c.b16 %v2631, %v2623
    %v3144 = vpack.c.b16 %v2632, %v2624
    %3657 = vmatprep.subr.bf16.mxu0 %v2634
    %3658 = vmatpush1.bf16.msra.mxu0 %v2633
    %3659 = vmatprep.subr.bf16.mxu0 %v2642
    %3660 = vmatpush1.bf16.msra.mxu0 %v2641
    %3661 = vmatprep.subr.bf16.mxu0 %v2650
    %3662 = vmatpush1.bf16.msra.mxu0 %v2649
    %3663 = vmatprep.subr.bf16.mxu0 %v2658
    %3664 = vmatpush1.bf16.msra.mxu0 %v2657
    %3665 = vmatprep.subr.bf16.mxu0 %v2666
    %3666 = vmatpush1.bf16.msra.mxu0 %v2665
    %3667 = vmatprep.subr.bf16.mxu0 %v2674
    %3668 = vmatpush1.bf16.msra.mxu0 %v2673
    %3669 = vmatprep.subr.bf16.mxu0 %v2682
    %3670 = vmatpush1.bf16.msra.mxu0 %v2681
    %3671 = vmatprep.subr.bf16.mxu0 %v2690
    %3672 = vmatpush1.bf16.msra.mxu0 %v2689
    %3673 = vmatprep.subr.bf16.mxu0 %v2698
    %3674 = vmatpush1.bf16.msra.mxu0 %v2697
    %3675 = vmatprep.subr.bf16.mxu0 %v2706
    %3676 = vmatpush1.bf16.msra.mxu0 %v2705
    %3677 = vmatprep.subr.bf16.mxu0 %v2714
    %3678 = vmatpush1.bf16.msra.mxu0 %v2713
    %3679 = vmatprep.subr.bf16.mxu0 %v2722
    %3680 = vmatpush1.bf16.msra.mxu0 %v2721
    %3681 = vmatprep.subr.bf16.mxu0 %v2730
    %3682 = vmatpush1.bf16.msra.mxu0 %v2729
    %3683 = vmatprep.subr.bf16.mxu0 %v2738
    %3684 = vmatpush1.bf16.msra.mxu0 %v2737
    %3685 = vmatprep.subr.bf16.mxu0 %v2746
    %3686 = vmatpush1.bf16.msra.mxu0 %v2745
    %3687 = vmatprep.subr.bf16.mxu0 %v2754
    %3688 = vmatpush1.bf16.msra.mxu0 %v2753
    %3689 = vmatprep.mubr.bf16.mxu0 %v173
    %3690 = vmatmul.mubr.bf16.gmra.mrb[0].mxu0 %v172
    %v3691 = vpop.f32.mrb[0].mxu0
    %v3692 = vadd.f32 0.0, %v3691
    %v3693 = vpop.f32.mrb[0].mxu0
    %v3694 = vadd.f32 0.0, %v3693
    %v3695 = vpop.f32.mrb[0].mxu0
    %v3696 = vadd.f32 0.0, %v3695
    %v3697 = vpop.f32.mrb[0].mxu0
    %v3698 = vadd.f32 0.0, %v3697
    %3699 = vmatprep.mubr.bf16.mxu0 %v175
    %3700 = vmatmul.mubr.bf16.gmra.mrb[0].mxu0 %v174
    %v3701 = vpop.f32.mrb[0].mxu0
    %v3702 = vadd.f32 0.0, %v3701
    %v3703 = vpop.f32.mrb[0].mxu0
    %v3704 = vadd.f32 0.0, %v3703
    %v3705 = vpop.f32.mrb[0].mxu0
    %v3706 = vadd.f32 0.0, %v3705
    %v3707 = vpop.f32.mrb[0].mxu0
    %v3708 = vadd.f32 0.0, %v3707
    %3709 = vmatprep.mubr.bf16.mxu0 %v177
    %3710 = vmatmul.mubr.bf16.gmra.mrb[0].mxu0 %v176
    %v3711 = vpop.f32.mrb[0].mxu0
    %v3712 = vadd.f32 0.0, %v3711
    %v3713 = vpop.f32.mrb[0].mxu0
    %v3714 = vadd.f32 0.0, %v3713
    %v3715 = vpop.f32.mrb[0].mxu0
    %v3716 = vadd.f32 0.0, %v3715
    %v3717 = vpop.f32.mrb[0].mxu0
    %v3718 = vadd.f32 0.0, %v3717
    %3719 = vmatprep.mubr.bf16.mxu0 %v179
    %3720 = vmatmul.mubr.bf16.gmra.mrb[0].mxu0 %v178
    %v3721 = vpop.f32.mrb[0].mxu0
    %v3722 = vadd.f32 0.0, %v3721
    %v3723 = vpop.f32.mrb[0].mxu0
    %v3724 = vadd.f32 0.0, %v3723
    %v3725 = vpop.f32.mrb[0].mxu0
    %v3726 = vadd.f32 0.0, %v3725
    %v3727 = vpop.f32.mrb[0].mxu0
    %v3728 = vadd.f32 0.0, %v3727
    %3729 = vmatprep.mubr.bf16.mxu0 %v181
    %3730 = vmatmul.mubr.bf16.gmra.mrb[0].mxu0 %v180
    %v3731 = vpop.f32.mrb[0].mxu0
    %v3732 = vadd.f32 0.0, %v3731
    %v3733 = vpop.f32.mrb[0].mxu0
    %v3734 = vadd.f32 0.0, %v3733
    %v3735 = vpop.f32.mrb[0].mxu0
    %v3736 = vadd.f32 0.0, %v3735
    %v3737 = vpop.f32.mrb[0].mxu0
    %v3738 = vadd.f32 0.0, %v3737
    %3739 = vmatprep.mubr.bf16.mxu0 %v183
    %3740 = vmatmul.mubr.bf16.gmra.mrb[0].mxu0 %v182
    %v3741 = vpop.f32.mrb[0].mxu0
    %v3742 = vadd.f32 0.0, %v3741
    %v3743 = vpop.f32.mrb[0].mxu0
    %v3744 = vadd.f32 0.0, %v3743
    %v3745 = vpop.f32.mrb[0].mxu0
    %v3746 = vadd.f32 0.0, %v3745
    %v3747 = vpop.f32.mrb[0].mxu0
    %v3748 = vadd.f32 0.0, %v3747
    %3749 = vmatprep.mubr.bf16.mxu0 %v185
    %3750 = vmatmul.mubr.bf16.gmra.mrb[0].mxu0 %v184
    %v3751 = vpop.f32.mrb[0].mxu0
    %v3752 = vadd.f32 0.0, %v3751
    %v3753 = vpop.f32.mrb[0].mxu0
    %v3754 = vadd.f32 0.0, %v3753
    %v3755 = vpop.f32.mrb[0].mxu0
    %v3756 = vadd.f32 0.0, %v3755
    %v3757 = vpop.f32.mrb[0].mxu0
    %v3758 = vadd.f32 0.0, %v3757
    %3759 = vmatprep.mubr.bf16.mxu0 %v187
    %3760 = vmatmul.mubr.bf16.gmra.mrb[0].mxu0 %v186
    %v3761 = vpop.f32.mrb[0].mxu0
    %v3762 = vadd.f32 0.0, %v3761
    %v3763 = vpop.f32.mrb[0].mxu0
    %v3764 = vadd.f32 0.0, %v3763
    %v3765 = vpop.f32.mrb[0].mxu0
    %v3766 = vadd.f32 0.0, %v3765
    %v3767 = vpop.f32.mrb[0].mxu0
    %v3768 = vadd.f32 0.0, %v3767
    %3769 = vdwg.mxu0
    %3770 = vmatprep.subr.bf16.mxu0 %v2762
    %3771 = vmatpush1.bf16.msra.mxu0 %v2761
    %3772 = vmatprep.subr.bf16.mxu0 %v2770
    %3773 = vmatpush1.bf16.msra.mxu0 %v2769
    %3774 = vmatprep.subr.bf16.mxu0 %v2778
    %3775 = vmatpush1.bf16.msra.mxu0 %v2777
    %3776 = vmatprep.subr.bf16.mxu0 %v2786
    %3777 = vmatpush1.bf16.msra.mxu0 %v2785
    %3778 = vmatprep.subr.bf16.mxu0 %v2794
    %3779 = vmatpush1.bf16.msra.mxu0 %v2793
    %3780 = vmatprep.subr.bf16.mxu0 %v2802
    %3781 = vmatpush1.bf16.msra.mxu0 %v2801
    %3782 = vmatprep.subr.bf16.mxu0 %v2810
    %3783 = vmatpush1.bf16.msra.mxu0 %v2809
    %3784 = vmatprep.subr.bf16.mxu0 %v2818
    %3785 = vmatpush1.bf16.msra.mxu0 %v2817
    %3786 = vmatprep.subr.bf16.mxu0 %v2826
    %3787 = vmatpush1.bf16.msra.mxu0 %v2825
    %3788 = vmatprep.subr.bf16.mxu0 %v2834
    %3789 = vmatpush1.bf16.msra.mxu0 %v2833
    %3790 = vmatprep.subr.bf16.mxu0 %v2842
    %3791 = vmatpush1.bf16.msra.mxu0 %v2841
    %3792 = vmatprep.subr.bf16.mxu0 %v2850
    %3793 = vmatpush1.bf16.msra.mxu0 %v2849
    %3794 = vmatprep.subr.bf16.mxu0 %v2858
    %3795 = vmatpush1.bf16.msra.mxu0 %v2857
    %3796 = vmatprep.subr.bf16.mxu0 %v2866
    %3797 = vmatpush1.bf16.msra.mxu0 %v2865
    %3798 = vmatprep.subr.bf16.mxu0 %v2874
    %3799 = vmatpush1.bf16.msra.mxu0 %v2873
    %3800 = vmatprep.subr.bf16.mxu0 %v2882
    %3801 = vmatpush1.bf16.msra.mxu0 %v2881
    %3802 = vmatprep.mubr.bf16.mxu0 %v280
    %3803 = vmatmul.mubr.bf16.gmra.mrb[0].mxu0 %v268
    %v3804 = vpop.f32.mrb[0].mxu0
    %v3805 = vadd.f32 %v3692, %v3804
    %v3806 = vpop.f32.mrb[0].mxu0
    %v3807 = vadd.f32 %v3694, %v3806
    %v3808 = vpop.f32.mrb[0].mxu0
    %v3809 = vadd.f32 %v3696, %v3808
    %v3810 = vpop.f32.mrb[0].mxu0
    %v3811 = vadd.f32 %v3698, %v3810
    %3812 = vmatprep.mubr.bf16.mxu0 %v296
    %3813 = vmatmul.mubr.bf16.gmra.mrb[0].mxu0 %v288
    %v3814 = vpop.f32.mrb[0].mxu0
    %v3815 = vadd.f32 %v3702, %v3814
    %v3816 = vpop.f32.mrb[0].mxu0
    %v3817 = vadd.f32 %v3704, %v3816
    %v3818 = vpop.f32.mrb[0].mxu0
    %v3819 = vadd.f32 %v3706, %v3818
    %v3820 = vpop.f32.mrb[0].mxu0
    %v3821 = vadd.f32 %v3708, %v3820
    %3822 = vmatprep.mubr.bf16.mxu0 %v312
    %3823 = vmatmul.mubr.bf16.gmra.mrb[0].mxu0 %v304
    %v3824 = vpop.f32.mrb[0].mxu0
    %v3825 = vadd.f32 %v3712, %v3824
    %v3826 = vpop.f32.mrb[0].mxu0
    %v3827 = vadd.f32 %v3714, %v3826
    %v3828 = vpop.f32.mrb[0].mxu0
    %v3829 = vadd.f32 %v3716, %v3828
    %v3830 = vpop.f32.mrb[0].mxu0
    %v3831 = vadd.f32 %v3718, %v3830
    %3832 = vmatprep.mubr.bf16.mxu0 %v328
    %3833 = vmatmul.mubr.bf16.gmra.mrb[0].mxu0 %v320
    %v3834 = vpop.f32.mrb[0].mxu0
    %v3835 = vadd.f32 %v3722, %v3834
    %v3836 = vpop.f32.mrb[0].mxu0
    %v3837 = vadd.f32 %v3724, %v3836
    %v3838 = vpop.f32.mrb[0].mxu0
    %v3839 = vadd.f32 %v3726, %v3838
    %v3840 = vpop.f32.mrb[0].mxu0
    %v3841 = vadd.f32 %v3728, %v3840
    %3842 = vmatprep.mubr.bf16.mxu0 %v344
    %3843 = vmatmul.mubr.bf16.gmra.mrb[0].mxu0 %v336
    %v3844 = vpop.f32.mrb[0].mxu0
    %v3845 = vadd.f32 %v3732, %v3844
    %v3846 = vpop.f32.mrb[0].mxu0
    %v3847 = vadd.f32 %v3734, %v3846
    %v3848 = vpop.f32.mrb[0].mxu0
    %v3849 = vadd.f32 %v3736, %v3848
    %v3850 = vpop.f32.mrb[0].mxu0
    %v3851 = vadd.f32 %v3738, %v3850
    %3852 = vmatprep.mubr.bf16.mxu0 %v360
    %3853 = vmatmul.mubr.bf16.gmra.mrb[0].mxu0 %v352
    %v3854 = vpop.f32.mrb[0].mxu0
    %v3855 = vadd.f32 %v3742, %v3854
    %v3856 = vpop.f32.mrb[0].mxu0
    %v3857 = vadd.f32 %v3744, %v3856
    %v3858 = vpop.f32.mrb[0].mxu0
    %v3859 = vadd.f32 %v3746, %v3858
    %v3860 = vpop.f32.mrb[0].mxu0
    %v3861 = vadd.f32 %v3748, %v3860
    %3862 = vmatprep.mubr.bf16.mxu0 %v376
    %3863 = vmatmul.mubr.bf16.gmra.mrb[0].mxu0 %v368
    %v3864 = vpop.f32.mrb[0].mxu0
    %v3865 = vadd.f32 %v3752, %v3864
    %v3866 = vpop.f32.mrb[0].mxu0
    %v3867 = vadd.f32 %v3754, %v3866
    %v3868 = vpop.f32.mrb[0].mxu0
    %v3869 = vadd.f32 %v3756, %v3868
    %v3870 = vpop.f32.mrb[0].mxu0
    %v3871 = vadd.f32 %v3758, %v3870
    %3872 = vmatprep.mubr.bf16.mxu0 %v392
    %3873 = vmatmul.mubr.bf16.gmra.mrb[0].mxu0 %v384
    %v3874 = vpop.f32.mrb[0].mxu0
    %v3875 = vadd.f32 %v3762, %v3874
    %v3876 = vpop.f32.mrb[0].mxu0
    %v3877 = vadd.f32 %v3764, %v3876
    %v3878 = vpop.f32.mrb[0].mxu0
    %v3879 = vadd.f32 %v3766, %v3878
    %v3880 = vpop.f32.mrb[0].mxu0
    %v3881 = vadd.f32 %v3768, %v3880
    %3882 = vdwg.mxu0
    %3883 = vmatprep.subr.bf16.mxu0 %v2890
    %3884 = vmatpush1.bf16.msra.mxu0 %v2889
    %3885 = vmatprep.subr.bf16.mxu0 %v2898
    %3886 = vmatpush1.bf16.msra.mxu0 %v2897
    %3887 = vmatprep.subr.bf16.mxu0 %v2906
    %3888 = vmatpush1.bf16.msra.mxu0 %v2905
    %3889 = vmatprep.subr.bf16.mxu0 %v2914
    %3890 = vmatpush1.bf16.msra.mxu0 %v2913
    %3891 = vmatprep.subr.bf16.mxu0 %v2922
    %3892 = vmatpush1.bf16.msra.mxu0 %v2921
    %3893 = vmatprep.subr.bf16.mxu0 %v2930
    %3894 = vmatpush1.bf16.msra.mxu0 %v2929
    %3895 = vmatprep.subr.bf16.mxu0 %v2938
    %3896 = vmatpush1.bf16.msra.mxu0 %v2937
    %3897 = vmatprep.subr.bf16.mxu0 %v2946
    %3898 = vmatpush1.bf16.msra.mxu0 %v2945
    %3899 = vmatprep.subr.bf16.mxu0 %v2954
    %3900 = vmatpush1.bf16.msra.mxu0 %v2953
    %3901 = vmatprep.subr.bf16.mxu0 %v2962
    %3902 = vmatpush1.bf16.msra.mxu0 %v2961
    %3903 = vmatprep.subr.bf16.mxu0 %v2970
    %3904 = vmatpush1.bf16.msra.mxu0 %v2969
    %3905 = vmatprep.subr.bf16.mxu0 %v2978
    %3906 = vmatpush1.bf16.msra.mxu0 %v2977
    %3907 = vmatprep.subr.bf16.mxu0 %v2986
    %3908 = vmatpush1.bf16.msra.mxu0 %v2985
    %3909 = vmatprep.subr.bf16.mxu0 %v2994
    %3910 = vmatpush1.bf16.msra.mxu0 %v2993
    %3911 = vmatprep.subr.bf16.mxu0 %v3002
    %3912 = vmatpush1.bf16.msra.mxu0 %v3001
    %3913 = vmatprep.subr.bf16.mxu0 %v3010
    %3914 = vmatpush1.bf16.msra.mxu0 %v3009
    %3915 = vmatprep.mubr.bf16.mxu0 %v433
    %3916 = vmatmul.mubr.bf16.gmra.mrb[0].mxu0 %v430
    %v3917 = vpop.f32.mrb[0].mxu0
    %v3918 = vadd.f32 %v3805, %v3917
    %v3919 = vpop.f32.mrb[0].mxu0
    %v3920 = vadd.f32 %v3807, %v3919
    %v3921 = vpop.f32.mrb[0].mxu0
    %v3922 = vadd.f32 %v3809, %v3921
    %v3923 = vpop.f32.mrb[0].mxu0
    %v3924 = vadd.f32 %v3811, %v3923
    %3925 = vmatprep.mubr.bf16.mxu0 %v437
    %3926 = vmatmul.mubr.bf16.gmra.mrb[0].mxu0 %v435
    %v3927 = vpop.f32.mrb[0].mxu0
    %v3928 = vadd.f32 %v3815, %v3927
    %v3929 = vpop.f32.mrb[0].mxu0
    %v3930 = vadd.f32 %v3817, %v3929
    %v3931 = vpop.f32.mrb[0].mxu0
    %v3932 = vadd.f32 %v3819, %v3931
    %v3933 = vpop.f32.mrb[0].mxu0
    %v3934 = vadd.f32 %v3821, %v3933
    %3935 = vmatprep.mubr.bf16.mxu0 %v441
    %3936 = vmatmul.mubr.bf16.gmra.mrb[0].mxu0 %v439
    %v3937 = vpop.f32.mrb[0].mxu0
    %v3938 = vadd.f32 %v3825, %v3937
    %v3939 = vpop.f32.mrb[0].mxu0
    %v3940 = vadd.f32 %v3827, %v3939
    %v3941 = vpop.f32.mrb[0].mxu0
    %v3942 = vadd.f32 %v3829, %v3941
    %v3943 = vpop.f32.mrb[0].mxu0
    %v3944 = vadd.f32 %v3831, %v3943
    %3945 = vmatprep.mubr.bf16.mxu0 %v445
    %3946 = vmatmul.mubr.bf16.gmra.mrb[0].mxu0 %v443
    %v3947 = vpop.f32.mrb[0].mxu0
    %v3948 = vadd.f32 %v3835, %v3947
    %v3949 = vpop.f32.mrb[0].mxu0
    %v3950 = vadd.f32 %v3837, %v3949
    %v3951 = vpop.f32.mrb[0].mxu0
    %v3952 = vadd.f32 %v3839, %v3951
    %v3953 = vpop.f32.mrb[0].mxu0
    %v3954 = vadd.f32 %v3841, %v3953
    %3955 = vmatprep.mubr.bf16.mxu0 %v449
    %3956 = vmatmul.mubr.bf16.gmra.mrb[0].mxu0 %v447
    %v3957 = vpop.f32.mrb[0].mxu0
    %v3958 = vadd.f32 %v3845, %v3957
    %v3959 = vpop.f32.mrb[0].mxu0
    %v3960 = vadd.f32 %v3847, %v3959
    %v3961 = vpop.f32.mrb[0].mxu0
    %v3962 = vadd.f32 %v3849, %v3961
    %v3963 = vpop.f32.mrb[0].mxu0
    %v3964 = vadd.f32 %v3851, %v3963
    %3965 = vmatprep.mubr.bf16.mxu0 %v453
    %3966 = vmatmul.mubr.bf16.gmra.mrb[0].mxu0 %v451
    %v3967 = vpop.f32.mrb[0].mxu0
    %v3968 = vadd.f32 %v3855, %v3967
    %v3969 = vpop.f32.mrb[0].mxu0
    %v3970 = vadd.f32 %v3857, %v3969
    %v3971 = vpop.f32.mrb[0].mxu0
    %v3972 = vadd.f32 %v3859, %v3971
    %v3973 = vpop.f32.mrb[0].mxu0
    %v3974 = vadd.f32 %v3861, %v3973
    %3975 = vmatprep.mubr.bf16.mxu0 %v457
    %3976 = vmatmul.mubr.bf16.gmra.mrb[0].mxu0 %v455
    %v3977 = vpop.f32.mrb[0].mxu0
    %v3978 = vadd.f32 %v3865, %v3977
    %v3979 = vpop.f32.mrb[0].mxu0
    %v3980 = vadd.f32 %v3867, %v3979
    %v3981 = vpop.f32.mrb[0].mxu0
    %v3982 = vadd.f32 %v3869, %v3981
    %v3983 = vpop.f32.mrb[0].mxu0
    %v3984 = vadd.f32 %v3871, %v3983
    %3985 = vmatprep.mubr.bf16.mxu0 %v461
    %3986 = vmatmul.mubr.bf16.gmra.mrb[0].mxu0 %v459
    %v3987 = vpop.f32.mrb[0].mxu0
    %v3988 = vadd.f32 %v3875, %v3987
    %v3989 = vpop.f32.mrb[0].mxu0
    %v3990 = vadd.f32 %v3877, %v3989
    %v3991 = vpop.f32.mrb[0].mxu0
    %v3992 = vadd.f32 %v3879, %v3991
    %v3993 = vpop.f32.mrb[0].mxu0
    %v3994 = vadd.f32 %v3881, %v3993
    %3995 = vdwg.mxu0
    %3996 = vmatprep.subr.bf16.mxu0 %v3018
    %3997 = vmatpush1.bf16.msra.mxu0 %v3017
    %3998 = vmatprep.subr.bf16.mxu0 %v3026
    %3999 = vmatpush1.bf16.msra.mxu0 %v3025
    %4000 = vmatprep.subr.bf16.mxu0 %v3034
    %4001 = vmatpush1.bf16.msra.mxu0 %v3033
    %4002 = vmatprep.subr.bf16.mxu0 %v3042
    %4003 = vmatpush1.bf16.msra.mxu0 %v3041
    %4004 = vmatprep.subr.bf16.mxu0 %v3050
    %4005 = vmatpush1.bf16.msra.mxu0 %v3049
    %4006 = vmatprep.subr.bf16.mxu0 %v3058
    %4007 = vmatpush1.bf16.msra.mxu0 %v3057
    %4008 = vmatprep.subr.bf16.mxu0 %v3066
    %4009 = vmatpush1.bf16.msra.mxu0 %v3065
    %4010 = vmatprep.subr.bf16.mxu0 %v3074
    %4011 = vmatpush1.bf16.msra.mxu0 %v3073
    %4012 = vmatprep.subr.bf16.mxu0 %v3082
    %4013 = vmatpush1.bf16.msra.mxu0 %v3081
    %4014 = vmatprep.subr.bf16.mxu0 %v3090
    %4015 = vmatpush1.bf16.msra.mxu0 %v3089
    %4016 = vmatprep.subr.bf16.mxu0 %v3098
    %4017 = vmatpush1.bf16.msra.mxu0 %v3097
    %4018 = vmatprep.subr.bf16.mxu0 %v3106
    %4019 = vmatpush1.bf16.msra.mxu0 %v3105
    %4020 = vmatprep.subr.bf16.mxu0 %v3114
    %4021 = vmatpush1.bf16.msra.mxu0 %v3113
    %4022 = vmatprep.subr.bf16.mxu0 %v3122
    %4023 = vmatpush1.bf16.msra.mxu0 %v3121
    %4024 = vmatprep.subr.bf16.mxu0 %v3130
    %4025 = vmatpush1.bf16.msra.mxu0 %v3129
    %4026 = vmatprep.subr.bf16.mxu0 %v3138
    %4027 = vmatpush1.bf16.msra.mxu0 %v3137
    %4028 = vmatprep.mubr.bf16.mxu0 %v502
    %4029 = vmatmul.mubr.bf16.gmra.mrb[0].mxu0 %v490
    %v4030 = vpop.f32.mrb[0].mxu0
    %v4031 = vadd.f32 %v3918, %v4030
    %v4032 = vpop.f32.mrb[0].mxu0
    %v4033 = vadd.f32 %v3920, %v4032
    %v4034 = vpop.f32.mrb[0].mxu0
    %v4035 = vadd.f32 %v3922, %v4034
    %v4036 = vpop.f32.mrb[0].mxu0
    %v4037 = vadd.f32 %v3924, %v4036
    %4038 = vmatprep.mubr.bf16.mxu0 %v510
    %4039 = vmatmul.mubr.bf16.gmra.mrb[0].mxu0 %v506
    %v4040 = vpop.f32.mrb[0].mxu0
    %v4041 = vadd.f32 %v3928, %v4040
    %v4042 = vpop.f32.mrb[0].mxu0
    %v4043 = vadd.f32 %v3930, %v4042
    %v4044 = vpop.f32.mrb[0].mxu0
    %v4045 = vadd.f32 %v3932, %v4044
    %v4046 = vpop.f32.mrb[0].mxu0
    %v4047 = vadd.f32 %v3934, %v4046
    %4048 = vmatprep.mubr.bf16.mxu0 %v518
    %4049 = vmatmul.mubr.bf16.gmra.mrb[0].mxu0 %v514
    %v4050 = vpop.f32.mrb[0].mxu0
    %v4051 = vadd.f32 %v3938, %v4050
    %v4052 = vpop.f32.mrb[0].mxu0
    %v4053 = vadd.f32 %v3940, %v4052
    %v4054 = vpop.f32.mrb[0].mxu0
    %v4055 = vadd.f32 %v3942, %v4054
    %v4056 = vpop.f32.mrb[0].mxu0
    %v4057 = vadd.f32 %v3944, %v4056
    %4058 = vmatprep.mubr.bf16.mxu0 %v526
    %4059 = vmatmul.mubr.bf16.gmra.mrb[0].mxu0 %v522
    %v4060 = vpop.f32.mrb[0].mxu0
    %v4061 = vadd.f32 %v3948, %v4060
    %v4062 = vpop.f32.mrb[0].mxu0
    %v4063 = vadd.f32 %v3950, %v4062
    %v4064 = vpop.f32.mrb[0].mxu0
    %v4065 = vadd.f32 %v3952, %v4064
    %v4066 = vpop.f32.mrb[0].mxu0
    %v4067 = vadd.f32 %v3954, %v4066
    %4068 = vmatprep.mubr.bf16.mxu0 %v534
    %4069 = vmatmul.mubr.bf16.gmra.mrb[0].mxu0 %v530
    %v4070 = vpop.f32.mrb[0].mxu0
    %v4071 = vadd.f32 %v3958, %v4070
    %v4072 = vpop.f32.mrb[0].mxu0
    %v4073 = vadd.f32 %v3960, %v4072
    %v4074 = vpop.f32.mrb[0].mxu0
    %v4075 = vadd.f32 %v3962, %v4074
    %v4076 = vpop.f32.mrb[0].mxu0
    %v4077 = vadd.f32 %v3964, %v4076
    %4078 = vmatprep.mubr.bf16.mxu0 %v542
    %4079 = vmatmul.mubr.bf16.gmra.mrb[0].mxu0 %v538
    %v4080 = vpop.f32.mrb[0].mxu0
    %v4081 = vadd.f32 %v3968, %v4080
    %v4082 = vpop.f32.mrb[0].mxu0
    %v4083 = vadd.f32 %v3970, %v4082
    %v4084 = vpop.f32.mrb[0].mxu0
    %v4085 = vadd.f32 %v3972, %v4084
    %v4086 = vpop.f32.mrb[0].mxu0
    %v4087 = vadd.f32 %v3974, %v4086
    %4088 = vmatprep.mubr.bf16.mxu0 %v550
    %4089 = vmatmul.mubr.bf16.gmra.mrb[0].mxu0 %v546
    %v4090 = vpop.f32.mrb[0].mxu0
    %v4091 = vadd.f32 %v3978, %v4090
    %v4092 = vpop.f32.mrb[0].mxu0
    %v4093 = vadd.f32 %v3980, %v4092
    %v4094 = vpop.f32.mrb[0].mxu0
    %v4095 = vadd.f32 %v3982, %v4094
    %v4096 = vpop.f32.mrb[0].mxu0
    %v4097 = vadd.f32 %v3984, %v4096
    %4098 = vmatprep.mubr.bf16.mxu0 %v568
    %4099 = vmatmul.mubr.bf16.gmra.mrb[0].mxu0 %v559
    %v4100 = vpop.f32.mrb[0].mxu0
    %v4101 = vadd.f32 %v3988, %v4100
    %v4102 = vpop.f32.mrb[0].mxu0
    %v4103 = vadd.f32 %v3990, %v4102
    %v4104 = vpop.f32.mrb[0].mxu0
    %v4105 = vadd.f32 %v3992, %v4104
    %v4106 = vpop.f32.mrb[0].mxu0
    %v4107 = vadd.f32 %v3994, %v4106
    %4108 = vdwg.mxu0
    %4109 = vmatprep.subr.bf16.mxu0 %v2636
    %4110 = vmatpush1.bf16.msra.mxu0 %v2635
    %4111 = vmatprep.subr.bf16.mxu0 %v2644
    %4112 = vmatpush1.bf16.msra.mxu0 %v2643
    %4113 = vmatprep.subr.bf16.mxu0 %v2652
    %4114 = vmatpush1.bf16.msra.mxu0 %v2651
    %4115 = vmatprep.subr.bf16.mxu0 %v2660
    %4116 = vmatpush1.bf16.msra.mxu0 %v2659
    %4117 = vmatprep.subr.bf16.mxu0 %v2668
    %4118 = vmatpush1.bf16.msra.mxu0 %v2667
    %4119 = vmatprep.subr.bf16.mxu0 %v2676
    %4120 = vmatpush1.bf16.msra.mxu0 %v2675
    %4121 = vmatprep.subr.bf16.mxu0 %v2684
    %4122 = vmatpush1.bf16.msra.mxu0 %v2683
    %4123 = vmatprep.subr.bf16.mxu0 %v2692
    %4124 = vmatpush1.bf16.msra.mxu0 %v2691
    %4125 = vmatprep.subr.bf16.mxu0 %v2700
    %4126 = vmatpush1.bf16.msra.mxu0 %v2699
    %4127 = vmatprep.subr.bf16.mxu0 %v2708
    %4128 = vmatpush1.bf16.msra.mxu0 %v2707
    %4129 = vmatprep.subr.bf16.mxu0 %v2716
    %4130 = vmatpush1.bf16.msra.mxu0 %v2715
    %4131 = vmatprep.subr.bf16.mxu0 %v2724
    %4132 = vmatpush1.bf16.msra.mxu0 %v2723
    %4133 = vmatprep.subr.bf16.mxu0 %v2732
    %4134 = vmatpush1.bf16.msra.mxu0 %v2731
    %4135 = vmatprep.subr.bf16.mxu0 %v2740
    %4136 = vmatpush1.bf16.msra.mxu0 %v2739
    %4137 = vmatprep.subr.bf16.mxu0 %v2748
    %4138 = vmatpush1.bf16.msra.mxu0 %v2747
    %4139 = vmatprep.subr.bf16.mxu0 %v2756
    %4140 = vmatpush1.bf16.msra.mxu0 %v2755
    %4141 = vmatprep.mubr.bf16.mxu0 %v173
    %4142 = vmatmul.mubr.bf16.gmra.mrb[0].mxu0 %v172
    %v4143 = vpop.f32.mrb[0].mxu0
    %v4144 = vadd.f32 0.0, %v4143
    %v4145 = vpop.f32.mrb[0].mxu0
    %v4146 = vadd.f32 0.0, %v4145
    %v4147 = vpop.f32.mrb[0].mxu0
    %v4148 = vadd.f32 0.0, %v4147
    %v4149 = vpop.f32.mrb[0].mxu0
    %v4150 = vadd.f32 0.0, %v4149
    %4151 = vmatprep.mubr.bf16.mxu0 %v175
    %4152 = vmatmul.mubr.bf16.gmra.mrb[0].mxu0 %v174
    %v4153 = vpop.f32.mrb[0].mxu0
    %v4154 = vadd.f32 0.0, %v4153
    %v4155 = vpop.f32.mrb[0].mxu0
    %v4156 = vadd.f32 0.0, %v4155
    %v4157 = vpop.f32.mrb[0].mxu0
    %v4158 = vadd.f32 0.0, %v4157
    %v4159 = vpop.f32.mrb[0].mxu0
    %v4160 = vadd.f32 0.0, %v4159
    %4161 = vmatprep.mubr.bf16.mxu0 %v177
    %4162 = vmatmul.mubr.bf16.gmra.mrb[0].mxu0 %v176
    %v4163 = vpop.f32.mrb[0].mxu0
    %v4164 = vadd.f32 0.0, %v4163
    %v4165 = vpop.f32.mrb[0].mxu0
    %v4166 = vadd.f32 0.0, %v4165
    %v4167 = vpop.f32.mrb[0].mxu0
    %v4168 = vadd.f32 0.0, %v4167
    %v4169 = vpop.f32.mrb[0].mxu0
    %v4170 = vadd.f32 0.0, %v4169
    %4171 = vmatprep.mubr.bf16.mxu0 %v179
    %4172 = vmatmul.mubr.bf16.gmra.mrb[0].mxu0 %v178
    %v4173 = vpop.f32.mrb[0].mxu0
    %v4174 = vadd.f32 0.0, %v4173
    %v4175 = vpop.f32.mrb[0].mxu0
    %v4176 = vadd.f32 0.0, %v4175
    %v4177 = vpop.f32.mrb[0].mxu0
    %v4178 = vadd.f32 0.0, %v4177
    %v4179 = vpop.f32.mrb[0].mxu0
    %v4180 = vadd.f32 0.0, %v4179
    %4181 = vmatprep.mubr.bf16.mxu0 %v181
    %4182 = vmatmul.mubr.bf16.gmra.mrb[0].mxu0 %v180
    %v4183 = vpop.f32.mrb[0].mxu0
    %v4184 = vadd.f32 0.0, %v4183
    %v4185 = vpop.f32.mrb[0].mxu0
    %v4186 = vadd.f32 0.0, %v4185
    %v4187 = vpop.f32.mrb[0].mxu0
    %v4188 = vadd.f32 0.0, %v4187
    %v4189 = vpop.f32.mrb[0].mxu0
    %v4190 = vadd.f32 0.0, %v4189
    %4191 = vmatprep.mubr.bf16.mxu0 %v183
    %4192 = vmatmul.mubr.bf16.gmra.mrb[0].mxu0 %v182
    %v4193 = vpop.f32.mrb[0].mxu0
    %v4194 = vadd.f32 0.0, %v4193
    %v4195 = vpop.f32.mrb[0].mxu0
    %v4196 = vadd.f32 0.0, %v4195
    %v4197 = vpop.f32.mrb[0].mxu0
    %v4198 = vadd.f32 0.0, %v4197
    %v4199 = vpop.f32.mrb[0].mxu0
    %v4200 = vadd.f32 0.0, %v4199
    %4201 = vmatprep.mubr.bf16.mxu0 %v185
    %4202 = vmatmul.mubr.bf16.gmra.mrb[0].mxu0 %v184
    %v4203 = vpop.f32.mrb[0].mxu0
    %v4204 = vadd.f32 0.0, %v4203
    %v4205 = vpop.f32.mrb[0].mxu0
    %v4206 = vadd.f32 0.0, %v4205
    %v4207 = vpop.f32.mrb[0].mxu0
    %v4208 = vadd.f32 0.0, %v4207
    %v4209 = vpop.f32.mrb[0].mxu0
    %v4210 = vadd.f32 0.0, %v4209
    %4211 = vmatprep.mubr.bf16.mxu0 %v187
    %4212 = vmatmul.mubr.bf16.gmra.mrb[0].mxu0 %v186
    %v4213 = vpop.f32.mrb[0].mxu0
    %v4214 = vadd.f32 0.0, %v4213
    %v4215 = vpop.f32.mrb[0].mxu0
    %v4216 = vadd.f32 0.0, %v4215
    %v4217 = vpop.f32.mrb[0].mxu0
    %v4218 = vadd.f32 0.0, %v4217
    %v4219 = vpop.f32.mrb[0].mxu0
    %v4220 = vadd.f32 0.0, %v4219
    %4221 = vdwg.mxu0
    %4222 = vmatprep.subr.bf16.mxu0 %v2764
    %4223 = vmatpush1.bf16.msra.mxu0 %v2763
    %4224 = vmatprep.subr.bf16.mxu0 %v2772
    %4225 = vmatpush1.bf16.msra.mxu0 %v2771
    %4226 = vmatprep.subr.bf16.mxu0 %v2780
    %4227 = vmatpush1.bf16.msra.mxu0 %v2779
    %4228 = vmatprep.subr.bf16.mxu0 %v2788
    %4229 = vmatpush1.bf16.msra.mxu0 %v2787
    %4230 = vmatprep.subr.bf16.mxu0 %v2796
    %4231 = vmatpush1.bf16.msra.mxu0 %v2795
    %4232 = vmatprep.subr.bf16.mxu0 %v2804
    %4233 = vmatpush1.bf16.msra.mxu0 %v2803
    %4234 = vmatprep.subr.bf16.mxu0 %v2812
    %4235 = vmatpush1.bf16.msra.mxu0 %v2811
    %4236 = vmatprep.subr.bf16.mxu0 %v2820
    %4237 = vmatpush1.bf16.msra.mxu0 %v2819
    %4238 = vmatprep.subr.bf16.mxu0 %v2828
    %4239 = vmatpush1.bf16.msra.mxu0 %v2827
    %4240 = vmatprep.subr.bf16.mxu0 %v2836
    %4241 = vmatpush1.bf16.msra.mxu0 %v2835
    %4242 = vmatprep.subr.bf16.mxu0 %v2844
    %4243 = vmatpush1.bf16.msra.mxu0 %v2843
    %4244 = vmatprep.subr.bf16.mxu0 %v2852
    %4245 = vmatpush1.bf16.msra.mxu0 %v2851
    %4246 = vmatprep.subr.bf16.mxu0 %v2860
    %4247 = vmatpush1.bf16.msra.mxu0 %v2859
    %4248 = vmatprep.subr.bf16.mxu0 %v2868
    %4249 = vmatpush1.bf16.msra.mxu0 %v2867
    %4250 = vmatprep.subr.bf16.mxu0 %v2876
    %4251 = vmatpush1.bf16.msra.mxu0 %v2875
    %4252 = vmatprep.subr.bf16.mxu0 %v2884
    %4253 = vmatpush1.bf16.msra.mxu0 %v2883
    %4254 = vmatprep.mubr.bf16.mxu0 %v280
    %4255 = vmatmul.mubr.bf16.gmra.mrb[0].mxu0 %v268
    %v4256 = vpop.f32.mrb[0].mxu0
    %v4257 = vadd.f32 %v4144, %v4256
    %v4258 = vpop.f32.mrb[0].mxu0
    %v4259 = vadd.f32 %v4146, %v4258
    %v4260 = vpop.f32.mrb[0].mxu0
    %v4261 = vadd.f32 %v4148, %v4260
    %v4262 = vpop.f32.mrb[0].mxu0
    %v4263 = vadd.f32 %v4150, %v4262
    %4264 = vmatprep.mubr.bf16.mxu0 %v296
    %4265 = vmatmul.mubr.bf16.gmra.mrb[0].mxu0 %v288
    %v4266 = vpop.f32.mrb[0].mxu0
    %v4267 = vadd.f32 %v4154, %v4266
    %v4268 = vpop.f32.mrb[0].mxu0
    %v4269 = vadd.f32 %v4156, %v4268
    %v4270 = vpop.f32.mrb[0].mxu0
    %v4271 = vadd.f32 %v4158, %v4270
    %v4272 = vpop.f32.mrb[0].mxu0
    %v4273 = vadd.f32 %v4160, %v4272
    %4274 = vmatprep.mubr.bf16.mxu0 %v312
    %4275 = vmatmul.mubr.bf16.gmra.mrb[0].mxu0 %v304
    %v4276 = vpop.f32.mrb[0].mxu0
    %v4277 = vadd.f32 %v4164, %v4276
    %v4278 = vpop.f32.mrb[0].mxu0
    %v4279 = vadd.f32 %v4166, %v4278
    %v4280 = vpop.f32.mrb[0].mxu0
    %v4281 = vadd.f32 %v4168, %v4280
    %v4282 = vpop.f32.mrb[0].mxu0
    %v4283 = vadd.f32 %v4170, %v4282
    %4284 = vmatprep.mubr.bf16.mxu0 %v328
    %4285 = vmatmul.mubr.bf16.gmra.mrb[0].mxu0 %v320
    %v4286 = vpop.f32.mrb[0].mxu0
    %v4287 = vadd.f32 %v4174, %v4286
    %v4288 = vpop.f32.mrb[0].mxu0
    %v4289 = vadd.f32 %v4176, %v4288
    %v4290 = vpop.f32.mrb[0].mxu0
    %v4291 = vadd.f32 %v4178, %v4290
    %v4292 = vpop.f32.mrb[0].mxu0
    %v4293 = vadd.f32 %v4180, %v4292
    %4294 = vmatprep.mubr.bf16.mxu0 %v344
    %4295 = vmatmul.mubr.bf16.gmra.mrb[0].mxu0 %v336
    %v4296 = vpop.f32.mrb[0].mxu0
    %v4297 = vadd.f32 %v4184, %v4296
    %v4298 = vpop.f32.mrb[0].mxu0
    %v4299 = vadd.f32 %v4186, %v4298
    %v4300 = vpop.f32.mrb[0].mxu0
    %v4301 = vadd.f32 %v4188, %v4300
    %v4302 = vpop.f32.mrb[0].mxu0
    %v4303 = vadd.f32 %v4190, %v4302
    %4304 = vmatprep.mubr.bf16.mxu0 %v360
    %4305 = vmatmul.mubr.bf16.gmra.mrb[0].mxu0 %v352
    %v4306 = vpop.f32.mrb[0].mxu0
    %v4307 = vadd.f32 %v4194, %v4306
    %v4308 = vpop.f32.mrb[0].mxu0
    %v4309 = vadd.f32 %v4196, %v4308
    %v4310 = vpop.f32.mrb[0].mxu0
    %v4311 = vadd.f32 %v4198, %v4310
    %v4312 = vpop.f32.mrb[0].mxu0
    %v4313 = vadd.f32 %v4200, %v4312
    %4314 = vmatprep.mubr.bf16.mxu0 %v376
    %4315 = vmatmul.mubr.bf16.gmra.mrb[0].mxu0 %v368
    %v4316 = vpop.f32.mrb[0].mxu0
    %v4317 = vadd.f32 %v4204, %v4316
    %v4318 = vpop.f32.mrb[0].mxu0
    %v4319 = vadd.f32 %v4206, %v4318
    %v4320 = vpop.f32.mrb[0].mxu0
    %v4321 = vadd.f32 %v4208, %v4320
    %v4322 = vpop.f32.mrb[0].mxu0
    %v4323 = vadd.f32 %v4210, %v4322
    %4324 = vmatprep.mubr.bf16.mxu0 %v392
    %4325 = vmatmul.mubr.bf16.gmra.mrb[0].mxu0 %v384
    %v4326 = vpop.f32.mrb[0].mxu0
    %v4327 = vadd.f32 %v4214, %v4326
    %v4328 = vpop.f32.mrb[0].mxu0
    %v4329 = vadd.f32 %v4216, %v4328
    %v4330 = vpop.f32.mrb[0].mxu0
    %v4331 = vadd.f32 %v4218, %v4330
    %v4332 = vpop.f32.mrb[0].mxu0
    %v4333 = vadd.f32 %v4220, %v4332
    %4334 = vdwg.mxu0
    %4335 = vmatprep.subr.bf16.mxu0 %v2892
    %4336 = vmatpush1.bf16.msra.mxu0 %v2891
    %4337 = vmatprep.subr.bf16.mxu0 %v2900
    %4338 = vmatpush1.bf16.msra.mxu0 %v2899
    %4339 = vmatprep.subr.bf16.mxu0 %v2908
    %4340 = vmatpush1.bf16.msra.mxu0 %v2907
    %4341 = vmatprep.subr.bf16.mxu0 %v2916
    %4342 = vmatpush1.bf16.msra.mxu0 %v2915
    %4343 = vmatprep.subr.bf16.mxu0 %v2924
    %4344 = vmatpush1.bf16.msra.mxu0 %v2923
    %4345 = vmatprep.subr.bf16.mxu0 %v2932
    %4346 = vmatpush1.bf16.msra.mxu0 %v2931
    %4347 = vmatprep.subr.bf16.mxu0 %v2940
    %4348 = vmatpush1.bf16.msra.mxu0 %v2939
    %4349 = vmatprep.subr.bf16.mxu0 %v2948
    %4350 = vmatpush1.bf16.msra.mxu0 %v2947
    %4351 = vmatprep.subr.bf16.mxu0 %v2956
    %4352 = vmatpush1.bf16.msra.mxu0 %v2955
    %4353 = vmatprep.subr.bf16.mxu0 %v2964
    %4354 = vmatpush1.bf16.msra.mxu0 %v2963
    %4355 = vmatprep.subr.bf16.mxu0 %v2972
    %4356 = vmatpush1.bf16.msra.mxu0 %v2971
    %4357 = vmatprep.subr.bf16.mxu0 %v2980
    %4358 = vmatpush1.bf16.msra.mxu0 %v2979
    %4359 = vmatprep.subr.bf16.mxu0 %v2988
    %4360 = vmatpush1.bf16.msra.mxu0 %v2987
    %4361 = vmatprep.subr.bf16.mxu0 %v2996
    %4362 = vmatpush1.bf16.msra.mxu0 %v2995
    %4363 = vmatprep.subr.bf16.mxu0 %v3004
    %4364 = vmatpush1.bf16.msra.mxu0 %v3003
    %4365 = vmatprep.subr.bf16.mxu0 %v3012
    %4366 = vmatpush1.bf16.msra.mxu0 %v3011
    %4367 = vmatprep.mubr.bf16.mxu0 %v433
    %4368 = vmatmul.mubr.bf16.gmra.mrb[0].mxu0 %v430
    %v4369 = vpop.f32.mrb[0].mxu0
    %v4370 = vadd.f32 %v4257, %v4369
    %v4371 = vpop.f32.mrb[0].mxu0
    %v4372 = vadd.f32 %v4259, %v4371
    %v4373 = vpop.f32.mrb[0].mxu0
    %v4374 = vadd.f32 %v4261, %v4373
    %v4375 = vpop.f32.mrb[0].mxu0
    %v4376 = vadd.f32 %v4263, %v4375
    %4377 = vmatprep.mubr.bf16.mxu0 %v437
    %4378 = vmatmul.mubr.bf16.gmra.mrb[0].mxu0 %v435
    %v4379 = vpop.f32.mrb[0].mxu0
    %v4380 = vadd.f32 %v4267, %v4379
    %v4381 = vpop.f32.mrb[0].mxu0
    %v4382 = vadd.f32 %v4269, %v4381
    %v4383 = vpop.f32.mrb[0].mxu0
    %v4384 = vadd.f32 %v4271, %v4383
    %v4385 = vpop.f32.mrb[0].mxu0
    %v4386 = vadd.f32 %v4273, %v4385
    %4387 = vmatprep.mubr.bf16.mxu0 %v441
    %4388 = vmatmul.mubr.bf16.gmra.mrb[0].mxu0 %v439
    %v4389 = vpop.f32.mrb[0].mxu0
    %v4390 = vadd.f32 %v4277, %v4389
    %v4391 = vpop.f32.mrb[0].mxu0
    %v4392 = vadd.f32 %v4279, %v4391
    %v4393 = vpop.f32.mrb[0].mxu0
    %v4394 = vadd.f32 %v4281, %v4393
    %v4395 = vpop.f32.mrb[0].mxu0
    %v4396 = vadd.f32 %v4283, %v4395
    %4397 = vmatprep.mubr.bf16.mxu0 %v445
    %4398 = vmatmul.mubr.bf16.gmra.mrb[0].mxu0 %v443
    %v4399 = vpop.f32.mrb[0].mxu0
    %v4400 = vadd.f32 %v4287, %v4399
    %v4401 = vpop.f32.mrb[0].mxu0
    %v4402 = vadd.f32 %v4289, %v4401
    %v4403 = vpop.f32.mrb[0].mxu0
    %v4404 = vadd.f32 %v4291, %v4403
    %v4405 = vpop.f32.mrb[0].mxu0
    %v4406 = vadd.f32 %v4293, %v4405
    %4407 = vmatprep.mubr.bf16.mxu0 %v449
    %4408 = vmatmul.mubr.bf16.gmra.mrb[0].mxu0 %v447
    %v4409 = vpop.f32.mrb[0].mxu0
    %v4410 = vadd.f32 %v4297, %v4409
    %v4411 = vpop.f32.mrb[0].mxu0
    %v4412 = vadd.f32 %v4299, %v4411
    %v4413 = vpop.f32.mrb[0].mxu0
    %v4414 = vadd.f32 %v4301, %v4413
    %v4415 = vpop.f32.mrb[0].mxu0
    %v4416 = vadd.f32 %v4303, %v4415
    %4417 = vmatprep.mubr.bf16.mxu0 %v453
    %4418 = vmatmul.mubr.bf16.gmra.mrb[0].mxu0 %v451
    %v4419 = vpop.f32.mrb[0].mxu0
    %v4420 = vadd.f32 %v4307, %v4419
    %v4421 = vpop.f32.mrb[0].mxu0
    %v4422 = vadd.f32 %v4309, %v4421
    %v4423 = vpop.f32.mrb[0].mxu0
    %v4424 = vadd.f32 %v4311, %v4423
    %v4425 = vpop.f32.mrb[0].mxu0
    %v4426 = vadd.f32 %v4313, %v4425
    %4427 = vmatprep.mubr.bf16.mxu0 %v457
    %4428 = vmatmul.mubr.bf16.gmra.mrb[0].mxu0 %v455
    %v4429 = vpop.f32.mrb[0].mxu0
    %v4430 = vadd.f32 %v4317, %v4429
    %v4431 = vpop.f32.mrb[0].mxu0
    %v4432 = vadd.f32 %v4319, %v4431
    %v4433 = vpop.f32.mrb[0].mxu0
    %v4434 = vadd.f32 %v4321, %v4433
    %v4435 = vpop.f32.mrb[0].mxu0
    %v4436 = vadd.f32 %v4323, %v4435
    %4437 = vmatprep.mubr.bf16.mxu0 %v461
    %4438 = vmatmul.mubr.bf16.gmra.mrb[0].mxu0 %v459
    %v4439 = vpop.f32.mrb[0].mxu0
    %v4440 = vadd.f32 %v4327, %v4439
    %v4441 = vpop.f32.mrb[0].mxu0
    %v4442 = vadd.f32 %v4329, %v4441
    %v4443 = vpop.f32.mrb[0].mxu0
    %v4444 = vadd.f32 %v4331, %v4443
    %v4445 = vpop.f32.mrb[0].mxu0
    %v4446 = vadd.f32 %v4333, %v4445
    %4447 = vdwg.mxu0
    %4448 = vmatprep.subr.bf16.mxu0 %v3020
    %4449 = vmatpush1.bf16.msra.mxu0 %v3019
    %4450 = vmatprep.subr.bf16.mxu0 %v3028
    %4451 = vmatpush1.bf16.msra.mxu0 %v3027
    %4452 = vmatprep.subr.bf16.mxu0 %v3036
    %4453 = vmatpush1.bf16.msra.mxu0 %v3035
    %4454 = vmatprep.subr.bf16.mxu0 %v3044
    %4455 = vmatpush1.bf16.msra.mxu0 %v3043
    %4456 = vmatprep.subr.bf16.mxu0 %v3052
    %4457 = vmatpush1.bf16.msra.mxu0 %v3051
    %4458 = vmatprep.subr.bf16.mxu0 %v3060
    %4459 = vmatpush1.bf16.msra.mxu0 %v3059
    %4460 = vmatprep.subr.bf16.mxu0 %v3068
    %4461 = vmatpush1.bf16.msra.mxu0 %v3067
    %4462 = vmatprep.subr.bf16.mxu0 %v3076
    %4463 = vmatpush1.bf16.msra.mxu0 %v3075
    %4464 = vmatprep.subr.bf16.mxu0 %v3084
    %4465 = vmatpush1.bf16.msra.mxu0 %v3083
    %4466 = vmatprep.subr.bf16.mxu0 %v3092
    %4467 = vmatpush1.bf16.msra.mxu0 %v3091
    %4468 = vmatprep.subr.bf16.mxu0 %v3100
    %4469 = vmatpush1.bf16.msra.mxu0 %v3099
    %4470 = vmatprep.subr.bf16.mxu0 %v3108
    %4471 = vmatpush1.bf16.msra.mxu0 %v3107
    %4472 = vmatprep.subr.bf16.mxu0 %v3116
    %4473 = vmatpush1.bf16.msra.mxu0 %v3115
    %4474 = vmatprep.subr.bf16.mxu0 %v3124
    %4475 = vmatpush1.bf16.msra.mxu0 %v3123
    %4476 = vmatprep.subr.bf16.mxu0 %v3132
    %4477 = vmatpush1.bf16.msra.mxu0 %v3131
    %4478 = vmatprep.subr.bf16.mxu0 %v3140
    %4479 = vmatpush1.bf16.msra.mxu0 %v3139
    %4480 = vmatprep.mubr.bf16.mxu0 %v502
    %4481 = vmatmul.mubr.bf16.gmra.mrb[0].mxu0 %v490
    %v4482 = vpop.f32.mrb[0].mxu0
    %v4483 = vadd.f32 %v4370, %v4482
    %v4484 = vpop.f32.mrb[0].mxu0
    %v4485 = vadd.f32 %v4372, %v4484
    %v4486 = vpop.f32.mrb[0].mxu0
    %v4487 = vadd.f32 %v4374, %v4486
    %v4488 = vpop.f32.mrb[0].mxu0
    %v4489 = vadd.f32 %v4376, %v4488
    %4490 = vmatprep.mubr.bf16.mxu0 %v510
    %4491 = vmatmul.mubr.bf16.gmra.mrb[0].mxu0 %v506
    %v4492 = vpop.f32.mrb[0].mxu0
    %v4493 = vadd.f32 %v4380, %v4492
    %v4494 = vpop.f32.mrb[0].mxu0
    %v4495 = vadd.f32 %v4382, %v4494
    %v4496 = vpop.f32.mrb[0].mxu0
    %v4497 = vadd.f32 %v4384, %v4496
    %v4498 = vpop.f32.mrb[0].mxu0
    %v4499 = vadd.f32 %v4386, %v4498
    %4500 = vmatprep.mubr.bf16.mxu0 %v518
    %4501 = vmatmul.mubr.bf16.gmra.mrb[0].mxu0 %v514
    %v4502 = vpop.f32.mrb[0].mxu0
    %v4503 = vadd.f32 %v4390, %v4502
    %v4504 = vpop.f32.mrb[0].mxu0
    %v4505 = vadd.f32 %v4392, %v4504
    %v4506 = vpop.f32.mrb[0].mxu0
    %v4507 = vadd.f32 %v4394, %v4506
    %v4508 = vpop.f32.mrb[0].mxu0
    %v4509 = vadd.f32 %v4396, %v4508
    %4510 = vmatprep.mubr.bf16.mxu0 %v526
    %4511 = vmatmul.mubr.bf16.gmra.mrb[0].mxu0 %v522
    %v4512 = vpop.f32.mrb[0].mxu0
    %v4513 = vadd.f32 %v4400, %v4512
    %v4514 = vpop.f32.mrb[0].mxu0
    %v4515 = vadd.f32 %v4402, %v4514
    %v4516 = vpop.f32.mrb[0].mxu0
    %v4517 = vadd.f32 %v4404, %v4516
    %v4518 = vpop.f32.mrb[0].mxu0
    %v4519 = vadd.f32 %v4406, %v4518
    %4520 = vmatprep.mubr.bf16.mxu0 %v534
    %4521 = vmatmul.mubr.bf16.gmra.mrb[0].mxu0 %v530
    %v4522 = vpop.f32.mrb[0].mxu0
    %v4523 = vadd.f32 %v4410, %v4522
    %v4524 = vpop.f32.mrb[0].mxu0
    %v4525 = vadd.f32 %v4412, %v4524
    %v4526 = vpop.f32.mrb[0].mxu0
    %v4527 = vadd.f32 %v4414, %v4526
    %v4528 = vpop.f32.mrb[0].mxu0
    %v4529 = vadd.f32 %v4416, %v4528
    %4530 = vmatprep.mubr.bf16.mxu0 %v542
    %4531 = vmatmul.mubr.bf16.gmra.mrb[0].mxu0 %v538
    %v4532 = vpop.f32.mrb[0].mxu0
    %v4533 = vadd.f32 %v4420, %v4532
    %v4534 = vpop.f32.mrb[0].mxu0
    %v4535 = vadd.f32 %v4422, %v4534
    %v4536 = vpop.f32.mrb[0].mxu0
    %v4537 = vadd.f32 %v4424, %v4536
    %v4538 = vpop.f32.mrb[0].mxu0
    %v4539 = vadd.f32 %v4426, %v4538
    %4540 = vmatprep.mubr.bf16.mxu0 %v550
    %4541 = vmatmul.mubr.bf16.gmra.mrb[0].mxu0 %v546
    %v4542 = vpop.f32.mrb[0].mxu0
    %v4543 = vadd.f32 %v4430, %v4542
    %v4544 = vpop.f32.mrb[0].mxu0
    %v4545 = vadd.f32 %v4432, %v4544
    %v4546 = vpop.f32.mrb[0].mxu0
    %v4547 = vadd.f32 %v4434, %v4546
    %v4548 = vpop.f32.mrb[0].mxu0
    %v4549 = vadd.f32 %v4436, %v4548
    %4550 = vmatprep.mubr.bf16.mxu0 %v568
    %4551 = vmatmul.mubr.bf16.gmra.mrb[0].mxu0 %v559
    %v4552 = vpop.f32.mrb[0].mxu0
    %v4553 = vadd.f32 %v4440, %v4552
    %v4554 = vpop.f32.mrb[0].mxu0
    %v4555 = vadd.f32 %v4442, %v4554
    %v4556 = vpop.f32.mrb[0].mxu0
    %v4557 = vadd.f32 %v4444, %v4556
    %v4558 = vpop.f32.mrb[0].mxu0
    %v4559 = vadd.f32 %v4446, %v4558
    %4560 = vdwg.mxu0
    %4561 = vmatprep.subr.bf16.mxu0 %v2638
    %4562 = vmatpush1.bf16.msra.mxu0 %v2637
    %4563 = vmatprep.subr.bf16.mxu0 %v2646
    %4564 = vmatpush1.bf16.msra.mxu0 %v2645
    %4565 = vmatprep.subr.bf16.mxu0 %v2654
    %4566 = vmatpush1.bf16.msra.mxu0 %v2653
    %4567 = vmatprep.subr.bf16.mxu0 %v2662
    %4568 = vmatpush1.bf16.msra.mxu0 %v2661
    %4569 = vmatprep.subr.bf16.mxu0 %v2670
    %4570 = vmatpush1.bf16.msra.mxu0 %v2669
    %4571 = vmatprep.subr.bf16.mxu0 %v2678
    %4572 = vmatpush1.bf16.msra.mxu0 %v2677
    %4573 = vmatprep.subr.bf16.mxu0 %v2686
    %4574 = vmatpush1.bf16.msra.mxu0 %v2685
    %4575 = vmatprep.subr.bf16.mxu0 %v2694
    %4576 = vmatpush1.bf16.msra.mxu0 %v2693
    %4577 = vmatprep.subr.bf16.mxu0 %v2702
    %4578 = vmatpush1.bf16.msra.mxu0 %v2701
    %4579 = vmatprep.subr.bf16.mxu0 %v2710
    %4580 = vmatpush1.bf16.msra.mxu0 %v2709
    %4581 = vmatprep.subr.bf16.mxu0 %v2718
    %4582 = vmatpush1.bf16.msra.mxu0 %v2717
    %4583 = vmatprep.subr.bf16.mxu0 %v2726
    %4584 = vmatpush1.bf16.msra.mxu0 %v2725
    %4585 = vmatprep.subr.bf16.mxu0 %v2734
    %4586 = vmatpush1.bf16.msra.mxu0 %v2733
    %4587 = vmatprep.subr.bf16.mxu0 %v2742
    %4588 = vmatpush1.bf16.msra.mxu0 %v2741
    %4589 = vmatprep.subr.bf16.mxu0 %v2750
    %4590 = vmatpush1.bf16.msra.mxu0 %v2749
    %4591 = vmatprep.subr.bf16.mxu0 %v2758
    %4592 = vmatpush1.bf16.msra.mxu0 %v2757
    %4593 = vmatprep.mubr.bf16.mxu0 %v173
    %4594 = vmatmul.mubr.bf16.gmra.mrb[0].mxu0 %v172
    %v4595 = vpop.f32.mrb[0].mxu0
    %v4596 = vadd.f32 0.0, %v4595
    %v4597 = vpop.f32.mrb[0].mxu0
    %v4598 = vadd.f32 0.0, %v4597
    %v4599 = vpop.f32.mrb[0].mxu0
    %v4600 = vadd.f32 0.0, %v4599
    %v4601 = vpop.f32.mrb[0].mxu0
    %v4602 = vadd.f32 0.0, %v4601
    %4603 = vmatprep.mubr.bf16.mxu0 %v175
    %4604 = vmatmul.mubr.bf16.gmra.mrb[0].mxu0 %v174
    %v4605 = vpop.f32.mrb[0].mxu0
    %v4606 = vadd.f32 0.0, %v4605
    %v4607 = vpop.f32.mrb[0].mxu0
    %v4608 = vadd.f32 0.0, %v4607
    %v4609 = vpop.f32.mrb[0].mxu0
    %v4610 = vadd.f32 0.0, %v4609
    %v4611 = vpop.f32.mrb[0].mxu0
    %v4612 = vadd.f32 0.0, %v4611
    %4613 = vmatprep.mubr.bf16.mxu0 %v177
    %4614 = vmatmul.mubr.bf16.gmra.mrb[0].mxu0 %v176
    %v4615 = vpop.f32.mrb[0].mxu0
    %v4616 = vadd.f32 0.0, %v4615
    %v4617 = vpop.f32.mrb[0].mxu0
    %v4618 = vadd.f32 0.0, %v4617
    %v4619 = vpop.f32.mrb[0].mxu0
    %v4620 = vadd.f32 0.0, %v4619
    %v4621 = vpop.f32.mrb[0].mxu0
    %v4622 = vadd.f32 0.0, %v4621
    %4623 = vmatprep.mubr.bf16.mxu0 %v179
    %4624 = vmatmul.mubr.bf16.gmra.mrb[0].mxu0 %v178
    %v4625 = vpop.f32.mrb[0].mxu0
    %v4626 = vadd.f32 0.0, %v4625
    %v4627 = vpop.f32.mrb[0].mxu0
    %v4628 = vadd.f32 0.0, %v4627
    %v4629 = vpop.f32.mrb[0].mxu0
    %v4630 = vadd.f32 0.0, %v4629
    %v4631 = vpop.f32.mrb[0].mxu0
    %v4632 = vadd.f32 0.0, %v4631
    %4633 = vmatprep.mubr.bf16.mxu0 %v181
    %4634 = vmatmul.mubr.bf16.gmra.mrb[0].mxu0 %v180
    %v4635 = vpop.f32.mrb[0].mxu0
    %v4636 = vadd.f32 0.0, %v4635
    %v4637 = vpop.f32.mrb[0].mxu0
    %v4638 = vadd.f32 0.0, %v4637
    %v4639 = vpop.f32.mrb[0].mxu0
    %v4640 = vadd.f32 0.0, %v4639
    %v4641 = vpop.f32.mrb[0].mxu0
    %v4642 = vadd.f32 0.0, %v4641
    %4643 = vmatprep.mubr.bf16.mxu0 %v183
    %4644 = vmatmul.mubr.bf16.gmra.mrb[0].mxu0 %v182
    %v4645 = vpop.f32.mrb[0].mxu0
    %v4646 = vadd.f32 0.0, %v4645
    %v4647 = vpop.f32.mrb[0].mxu0
    %v4648 = vadd.f32 0.0, %v4647
    %v4649 = vpop.f32.mrb[0].mxu0
    %v4650 = vadd.f32 0.0, %v4649
    %v4651 = vpop.f32.mrb[0].mxu0
    %v4652 = vadd.f32 0.0, %v4651
    %4653 = vmatprep.mubr.bf16.mxu0 %v185
    %4654 = vmatmul.mubr.bf16.gmra.mrb[0].mxu0 %v184
    %v4655 = vpop.f32.mrb[0].mxu0
    %v4656 = vadd.f32 0.0, %v4655
    %v4657 = vpop.f32.mrb[0].mxu0
    %v4658 = vadd.f32 0.0, %v4657
    %v4659 = vpop.f32.mrb[0].mxu0
    %v4660 = vadd.f32 0.0, %v4659
    %v4661 = vpop.f32.mrb[0].mxu0
    %v4662 = vadd.f32 0.0, %v4661
    %4663 = vmatprep.mubr.bf16.mxu0 %v187
    %4664 = vmatmul.mubr.bf16.gmra.mrb[0].mxu0 %v186
    %v4665 = vpop.f32.mrb[0].mxu0
    %v4666 = vadd.f32 0.0, %v4665
    %v4667 = vpop.f32.mrb[0].mxu0
    %v4668 = vadd.f32 0.0, %v4667
    %v4669 = vpop.f32.mrb[0].mxu0
    %v4670 = vadd.f32 0.0, %v4669
    %v4671 = vpop.f32.mrb[0].mxu0
    %v4672 = vadd.f32 0.0, %v4671
    %4673 = vdwg.mxu0
    %4674 = vmatprep.subr.bf16.mxu0 %v2766
    %4675 = vmatpush1.bf16.msra.mxu0 %v2765
    %4676 = vmatprep.subr.bf16.mxu0 %v2774
    %4677 = vmatpush1.bf16.msra.mxu0 %v2773
    %4678 = vmatprep.subr.bf16.mxu0 %v2782
    %4679 = vmatpush1.bf16.msra.mxu0 %v2781
    %4680 = vmatprep.subr.bf16.mxu0 %v2790
    %4681 = vmatpush1.bf16.msra.mxu0 %v2789
    %4682 = vmatprep.subr.bf16.mxu0 %v2798
    %4683 = vmatpush1.bf16.msra.mxu0 %v2797
    %4684 = vmatprep.subr.bf16.mxu0 %v2806
    %4685 = vmatpush1.bf16.msra.mxu0 %v2805
    %4686 = vmatprep.subr.bf16.mxu0 %v2814
    %4687 = vmatpush1.bf16.msra.mxu0 %v2813
    %4688 = vmatprep.subr.bf16.mxu0 %v2822
    %4689 = vmatpush1.bf16.msra.mxu0 %v2821
    %4690 = vmatprep.subr.bf16.mxu0 %v2830
    %4691 = vmatpush1.bf16.msra.mxu0 %v2829
    %4692 = vmatprep.subr.bf16.mxu0 %v2838
    %4693 = vmatpush1.bf16.msra.mxu0 %v2837
    %4694 = vmatprep.subr.bf16.mxu0 %v2846
    %4695 = vmatpush1.bf16.msra.mxu0 %v2845
    %4696 = vmatprep.subr.bf16.mxu0 %v2854
    %4697 = vmatpush1.bf16.msra.mxu0 %v2853
    %4698 = vmatprep.subr.bf16.mxu0 %v2862
    %4699 = vmatpush1.bf16.msra.mxu0 %v2861
    %4700 = vmatprep.subr.bf16.mxu0 %v2870
    %4701 = vmatpush1.bf16.msra.mxu0 %v2869
    %4702 = vmatprep.subr.bf16.mxu0 %v2878
    %4703 = vmatpush1.bf16.msra.mxu0 %v2877
    %4704 = vmatprep.subr.bf16.mxu0 %v2886
    %4705 = vmatpush1.bf16.msra.mxu0 %v2885
    %4706 = vmatprep.mubr.bf16.mxu0 %v280
    %4707 = vmatmul.mubr.bf16.gmra.mrb[0].mxu0 %v268
    %v4708 = vpop.f32.mrb[0].mxu0
    %v4709 = vadd.f32 %v4596, %v4708
    %v4710 = vpop.f32.mrb[0].mxu0
    %v4711 = vadd.f32 %v4598, %v4710
    %v4712 = vpop.f32.mrb[0].mxu0
    %v4713 = vadd.f32 %v4600, %v4712
    %v4714 = vpop.f32.mrb[0].mxu0
    %v4715 = vadd.f32 %v4602, %v4714
    %4716 = vmatprep.mubr.bf16.mxu0 %v296
    %4717 = vmatmul.mubr.bf16.gmra.mrb[0].mxu0 %v288
    %v4718 = vpop.f32.mrb[0].mxu0
    %v4719 = vadd.f32 %v4606, %v4718
    %v4720 = vpop.f32.mrb[0].mxu0
    %v4721 = vadd.f32 %v4608, %v4720
    %v4722 = vpop.f32.mrb[0].mxu0
    %v4723 = vadd.f32 %v4610, %v4722
    %v4724 = vpop.f32.mrb[0].mxu0
    %v4725 = vadd.f32 %v4612, %v4724
    %4726 = vmatprep.mubr.bf16.mxu0 %v312
    %4727 = vmatmul.mubr.bf16.gmra.mrb[0].mxu0 %v304
    %v4728 = vpop.f32.mrb[0].mxu0
    %v4729 = vadd.f32 %v4616, %v4728
    %v4730 = vpop.f32.mrb[0].mxu0
    %v4731 = vadd.f32 %v4618, %v4730
    %v4732 = vpop.f32.mrb[0].mxu0
    %v4733 = vadd.f32 %v4620, %v4732
    %v4734 = vpop.f32.mrb[0].mxu0
    %v4735 = vadd.f32 %v4622, %v4734
    %4736 = vmatprep.mubr.bf16.mxu0 %v328
    %4737 = vmatmul.mubr.bf16.gmra.mrb[0].mxu0 %v320
    %v4738 = vpop.f32.mrb[0].mxu0
    %v4739 = vadd.f32 %v4626, %v4738
    %v4740 = vpop.f32.mrb[0].mxu0
    %v4741 = vadd.f32 %v4628, %v4740
    %v4742 = vpop.f32.mrb[0].mxu0
    %v4743 = vadd.f32 %v4630, %v4742
    %v4744 = vpop.f32.mrb[0].mxu0
    %v4745 = vadd.f32 %v4632, %v4744
    %4746 = vmatprep.mubr.bf16.mxu0 %v344
    %4747 = vmatmul.mubr.bf16.gmra.mrb[0].mxu0 %v336
    %v4748 = vpop.f32.mrb[0].mxu0
    %v4749 = vadd.f32 %v4636, %v4748
    %v4750 = vpop.f32.mrb[0].mxu0
    %v4751 = vadd.f32 %v4638, %v4750
    %v4752 = vpop.f32.mrb[0].mxu0
    %v4753 = vadd.f32 %v4640, %v4752
    %v4754 = vpop.f32.mrb[0].mxu0
    %v4755 = vadd.f32 %v4642, %v4754
    %4756 = vmatprep.mubr.bf16.mxu0 %v360
    %4757 = vmatmul.mubr.bf16.gmra.mrb[0].mxu0 %v352
    %v4758 = vpop.f32.mrb[0].mxu0
    %v4759 = vadd.f32 %v4646, %v4758
    %v4760 = vpop.f32.mrb[0].mxu0
    %v4761 = vadd.f32 %v4648, %v4760
    %v4762 = vpop.f32.mrb[0].mxu0
    %v4763 = vadd.f32 %v4650, %v4762
    %v4764 = vpop.f32.mrb[0].mxu0
    %v4765 = vadd.f32 %v4652, %v4764
    %4766 = vmatprep.mubr.bf16.mxu0 %v376
    %4767 = vmatmul.mubr.bf16.gmra.mrb[0].mxu0 %v368
    %v4768 = vpop.f32.mrb[0].mxu0
    %v4769 = vadd.f32 %v4656, %v4768
    %v4770 = vpop.f32.mrb[0].mxu0
    %v4771 = vadd.f32 %v4658, %v4770
    %v4772 = vpop.f32.mrb[0].mxu0
    %v4773 = vadd.f32 %v4660, %v4772
    %v4774 = vpop.f32.mrb[0].mxu0
    %v4775 = vadd.f32 %v4662, %v4774
    %4776 = vmatprep.mubr.bf16.mxu0 %v392
    %4777 = vmatmul.mubr.bf16.gmra.mrb[0].mxu0 %v384
    %v4778 = vpop.f32.mrb[0].mxu0
    %v4779 = vadd.f32 %v4666, %v4778
    %v4780 = vpop.f32.mrb[0].mxu0
    %v4781 = vadd.f32 %v4668, %v4780
    %v4782 = vpop.f32.mrb[0].mxu0
    %v4783 = vadd.f32 %v4670, %v4782
    %v4784 = vpop.f32.mrb[0].mxu0
    %v4785 = vadd.f32 %v4672, %v4784
    %4786 = vdwg.mxu0
    %4787 = vmatprep.subr.bf16.mxu0 %v2894
    %4788 = vmatpush1.bf16.msra.mxu0 %v2893
    %4789 = vmatprep.subr.bf16.mxu0 %v2902
    %4790 = vmatpush1.bf16.msra.mxu0 %v2901
    %4791 = vmatprep.subr.bf16.mxu0 %v2910
    %4792 = vmatpush1.bf16.msra.mxu0 %v2909
    %4793 = vmatprep.subr.bf16.mxu0 %v2918
    %4794 = vmatpush1.bf16.msra.mxu0 %v2917
    %4795 = vmatprep.subr.bf16.mxu0 %v2926
    %4796 = vmatpush1.bf16.msra.mxu0 %v2925
    %4797 = vmatprep.subr.bf16.mxu0 %v2934
    %4798 = vmatpush1.bf16.msra.mxu0 %v2933
    %4799 = vmatprep.subr.bf16.mxu0 %v2942
    %4800 = vmatpush1.bf16.msra.mxu0 %v2941
    %4801 = vmatprep.subr.bf16.mxu0 %v2950
    %4802 = vmatpush1.bf16.msra.mxu0 %v2949
    %4803 = vmatprep.subr.bf16.mxu0 %v2958
    %4804 = vmatpush1.bf16.msra.mxu0 %v2957
    %4805 = vmatprep.subr.bf16.mxu0 %v2966
    %4806 = vmatpush1.bf16.msra.mxu0 %v2965
    %4807 = vmatprep.subr.bf16.mxu0 %v2974
    %4808 = vmatpush1.bf16.msra.mxu0 %v2973
    %4809 = vmatprep.subr.bf16.mxu0 %v2982
    %4810 = vmatpush1.bf16.msra.mxu0 %v2981
    %4811 = vmatprep.subr.bf16.mxu0 %v2990
    %4812 = vmatpush1.bf16.msra.mxu0 %v2989
    %4813 = vmatprep.subr.bf16.mxu0 %v2998
    %4814 = vmatpush1.bf16.msra.mxu0 %v2997
    %4815 = vmatprep.subr.bf16.mxu0 %v3006
    %4816 = vmatpush1.bf16.msra.mxu0 %v3005
    %4817 = vmatprep.subr.bf16.mxu0 %v3014
    %4818 = vmatpush1.bf16.msra.mxu0 %v3013
    %4819 = vmatprep.mubr.bf16.mxu0 %v433
    %4820 = vmatmul.mubr.bf16.gmra.mrb[0].mxu0 %v430
    %v4821 = vpop.f32.mrb[0].mxu0
    %v4822 = vadd.f32 %v4709, %v4821
    %v4823 = vpop.f32.mrb[0].mxu0
    %v4824 = vadd.f32 %v4711, %v4823
    %v4825 = vpop.f32.mrb[0].mxu0
    %v4826 = vadd.f32 %v4713, %v4825
    %v4827 = vpop.f32.mrb[0].mxu0
    %v4828 = vadd.f32 %v4715, %v4827
    %4829 = vmatprep.mubr.bf16.mxu0 %v437
    %4830 = vmatmul.mubr.bf16.gmra.mrb[0].mxu0 %v435
    %v4831 = vpop.f32.mrb[0].mxu0
    %v4832 = vadd.f32 %v4719, %v4831
    %v4833 = vpop.f32.mrb[0].mxu0
    %v4834 = vadd.f32 %v4721, %v4833
    %v4835 = vpop.f32.mrb[0].mxu0
    %v4836 = vadd.f32 %v4723, %v4835
    %v4837 = vpop.f32.mrb[0].mxu0
    %v4838 = vadd.f32 %v4725, %v4837
    %4839 = vmatprep.mubr.bf16.mxu0 %v441
    %4840 = vmatmul.mubr.bf16.gmra.mrb[0].mxu0 %v439
    %v4841 = vpop.f32.mrb[0].mxu0
    %v4842 = vadd.f32 %v4729, %v4841
    %v4843 = vpop.f32.mrb[0].mxu0
    %v4844 = vadd.f32 %v4731, %v4843
    %v4845 = vpop.f32.mrb[0].mxu0
    %v4846 = vadd.f32 %v4733, %v4845
    %v4847 = vpop.f32.mrb[0].mxu0
    %v4848 = vadd.f32 %v4735, %v4847
    %4849 = vmatprep.mubr.bf16.mxu0 %v445
    %4850 = vmatmul.mubr.bf16.gmra.mrb[0].mxu0 %v443
    %v4851 = vpop.f32.mrb[0].mxu0
    %v4852 = vadd.f32 %v4739, %v4851
    %v4853 = vpop.f32.mrb[0].mxu0
    %v4854 = vadd.f32 %v4741, %v4853
    %v4855 = vpop.f32.mrb[0].mxu0
    %v4856 = vadd.f32 %v4743, %v4855
    %v4857 = vpop.f32.mrb[0].mxu0
    %v4858 = vadd.f32 %v4745, %v4857
    %4859 = vmatprep.mubr.bf16.mxu0 %v449
    %4860 = vmatmul.mubr.bf16.gmra.mrb[0].mxu0 %v447
    %v4861 = vpop.f32.mrb[0].mxu0
    %v4862 = vadd.f32 %v4749, %v4861
    %v4863 = vpop.f32.mrb[0].mxu0
    %v4864 = vadd.f32 %v4751, %v4863
    %v4865 = vpop.f32.mrb[0].mxu0
    %v4866 = vadd.f32 %v4753, %v4865
    %v4867 = vpop.f32.mrb[0].mxu0
    %v4868 = vadd.f32 %v4755, %v4867
    %4869 = vmatprep.mubr.bf16.mxu0 %v453
    %4870 = vmatmul.mubr.bf16.gmra.mrb[0].mxu0 %v451
    %v4871 = vpop.f32.mrb[0].mxu0
    %v4872 = vadd.f32 %v4759, %v4871
    %v4873 = vpop.f32.mrb[0].mxu0
    %v4874 = vadd.f32 %v4761, %v4873
    %v4875 = vpop.f32.mrb[0].mxu0
    %v4876 = vadd.f32 %v4763, %v4875
    %v4877 = vpop.f32.mrb[0].mxu0
    %v4878 = vadd.f32 %v4765, %v4877
    %4879 = vmatprep.mubr.bf16.mxu0 %v457
    %4880 = vmatmul.mubr.bf16.gmra.mrb[0].mxu0 %v455
    %v4881 = vpop.f32.mrb[0].mxu0
    %v4882 = vadd.f32 %v4769, %v4881
    %v4883 = vpop.f32.mrb[0].mxu0
    %v4884 = vadd.f32 %v4771, %v4883
    %v4885 = vpop.f32.mrb[0].mxu0
    %v4886 = vadd.f32 %v4773, %v4885
    %v4887 = vpop.f32.mrb[0].mxu0
    %v4888 = vadd.f32 %v4775, %v4887
    %4889 = vmatprep.mubr.bf16.mxu0 %v461
    %4890 = vmatmul.mubr.bf16.gmra.mrb[0].mxu0 %v459
    %v4891 = vpop.f32.mrb[0].mxu0
    %v4892 = vadd.f32 %v4779, %v4891
    %v4893 = vpop.f32.mrb[0].mxu0
    %v4894 = vadd.f32 %v4781, %v4893
    %v4895 = vpop.f32.mrb[0].mxu0
    %v4896 = vadd.f32 %v4783, %v4895
    %v4897 = vpop.f32.mrb[0].mxu0
    %v4898 = vadd.f32 %v4785, %v4897
    %4899 = vdwg.mxu0
    %4900 = vmatprep.subr.bf16.mxu0 %v3022
    %4901 = vmatpush1.bf16.msra.mxu0 %v3021
    %4902 = vmatprep.subr.bf16.mxu0 %v3030
    %4903 = vmatpush1.bf16.msra.mxu0 %v3029
    %4904 = vmatprep.subr.bf16.mxu0 %v3038
    %4905 = vmatpush1.bf16.msra.mxu0 %v3037
    %4906 = vmatprep.subr.bf16.mxu0 %v3046
    %4907 = vmatpush1.bf16.msra.mxu0 %v3045
    %4908 = vmatprep.subr.bf16.mxu0 %v3054
    %4909 = vmatpush1.bf16.msra.mxu0 %v3053
    %4910 = vmatprep.subr.bf16.mxu0 %v3062
    %4911 = vmatpush1.bf16.msra.mxu0 %v3061
    %4912 = vmatprep.subr.bf16.mxu0 %v3070
    %4913 = vmatpush1.bf16.msra.mxu0 %v3069
    %4914 = vmatprep.subr.bf16.mxu0 %v3078
    %4915 = vmatpush1.bf16.msra.mxu0 %v3077
    %4916 = vmatprep.subr.bf16.mxu0 %v3086
    %4917 = vmatpush1.bf16.msra.mxu0 %v3085
    %4918 = vmatprep.subr.bf16.mxu0 %v3094
    %4919 = vmatpush1.bf16.msra.mxu0 %v3093
    %4920 = vmatprep.subr.bf16.mxu0 %v3102
    %4921 = vmatpush1.bf16.msra.mxu0 %v3101
    %4922 = vmatprep.subr.bf16.mxu0 %v3110
    %4923 = vmatpush1.bf16.msra.mxu0 %v3109
    %4924 = vmatprep.subr.bf16.mxu0 %v3118
    %4925 = vmatpush1.bf16.msra.mxu0 %v3117
    %4926 = vmatprep.subr.bf16.mxu0 %v3126
    %4927 = vmatpush1.bf16.msra.mxu0 %v3125
    %4928 = vmatprep.subr.bf16.mxu0 %v3134
    %4929 = vmatpush1.bf16.msra.mxu0 %v3133
    %4930 = vmatprep.subr.bf16.mxu0 %v3142
    %4931 = vmatpush1.bf16.msra.mxu0 %v3141
    %4932 = vmatprep.mubr.bf16.mxu0 %v502
    %4933 = vmatmul.mubr.bf16.gmra.mrb[0].mxu0 %v490
    %v4934 = vpop.f32.mrb[0].mxu0
    %v4935 = vadd.f32 %v4822, %v4934
    %v4936 = vpop.f32.mrb[0].mxu0
    %v4937 = vadd.f32 %v4824, %v4936
    %v4938 = vpop.f32.mrb[0].mxu0
    %v4939 = vadd.f32 %v4826, %v4938
    %v4940 = vpop.f32.mrb[0].mxu0
    %v4941 = vadd.f32 %v4828, %v4940
    %4942 = vmatprep.mubr.bf16.mxu0 %v510
    %4943 = vmatmul.mubr.bf16.gmra.mrb[0].mxu0 %v506
    %v4944 = vpop.f32.mrb[0].mxu0
    %v4945 = vadd.f32 %v4832, %v4944
    %v4946 = vpop.f32.mrb[0].mxu0
    %v4947 = vadd.f32 %v4834, %v4946
    %v4948 = vpop.f32.mrb[0].mxu0
    %v4949 = vadd.f32 %v4836, %v4948
    %v4950 = vpop.f32.mrb[0].mxu0
    %v4951 = vadd.f32 %v4838, %v4950
    %4952 = vmatprep.mubr.bf16.mxu0 %v518
    %4953 = vmatmul.mubr.bf16.gmra.mrb[0].mxu0 %v514
    %v4954 = vpop.f32.mrb[0].mxu0
    %v4955 = vadd.f32 %v4842, %v4954
    %v4956 = vpop.f32.mrb[0].mxu0
    %v4957 = vadd.f32 %v4844, %v4956
    %v4958 = vpop.f32.mrb[0].mxu0
    %v4959 = vadd.f32 %v4846, %v4958
    %v4960 = vpop.f32.mrb[0].mxu0
    %v4961 = vadd.f32 %v4848, %v4960
    %4962 = vmatprep.mubr.bf16.mxu0 %v526
    %4963 = vmatmul.mubr.bf16.gmra.mrb[0].mxu0 %v522
    %v4964 = vpop.f32.mrb[0].mxu0
    %v4965 = vadd.f32 %v4852, %v4964
    %v4966 = vpop.f32.mrb[0].mxu0
    %v4967 = vadd.f32 %v4854, %v4966
    %v4968 = vpop.f32.mrb[0].mxu0
    %v4969 = vadd.f32 %v4856, %v4968
    %v4970 = vpop.f32.mrb[0].mxu0
    %v4971 = vadd.f32 %v4858, %v4970
    %4972 = vmatprep.mubr.bf16.mxu0 %v534
    %4973 = vmatmul.mubr.bf16.gmra.mrb[0].mxu0 %v530
    %v4974 = vpop.f32.mrb[0].mxu0
    %v4975 = vadd.f32 %v4862, %v4974
    %v4976 = vpop.f32.mrb[0].mxu0
    %v4977 = vadd.f32 %v4864, %v4976
    %v4978 = vpop.f32.mrb[0].mxu0
    %v4979 = vadd.f32 %v4866, %v4978
    %v4980 = vpop.f32.mrb[0].mxu0
    %v4981 = vadd.f32 %v4868, %v4980
    %4982 = vmatprep.mubr.bf16.mxu0 %v542
    %4983 = vmatmul.mubr.bf16.gmra.mrb[0].mxu0 %v538
    %v4984 = vpop.f32.mrb[0].mxu0
    %v4985 = vadd.f32 %v4872, %v4984
    %v4986 = vpop.f32.mrb[0].mxu0
    %v4987 = vadd.f32 %v4874, %v4986
    %v4988 = vpop.f32.mrb[0].mxu0
    %v4989 = vadd.f32 %v4876, %v4988
    %v4990 = vpop.f32.mrb[0].mxu0
    %v4991 = vadd.f32 %v4878, %v4990
    %4992 = vmatprep.mubr.bf16.mxu0 %v550
    %4993 = vmatmul.mubr.bf16.gmra.mrb[0].mxu0 %v546
    %v4994 = vpop.f32.mrb[0].mxu0
    %v4995 = vadd.f32 %v4882, %v4994
    %v4996 = vpop.f32.mrb[0].mxu0
    %v4997 = vadd.f32 %v4884, %v4996
    %v4998 = vpop.f32.mrb[0].mxu0
    %v4999 = vadd.f32 %v4886, %v4998
    %v5000 = vpop.f32.mrb[0].mxu0
    %v5001 = vadd.f32 %v4888, %v5000
    %5002 = vmatprep.mubr.bf16.mxu0 %v568
    %5003 = vmatmul.mubr.bf16.gmra.mrb[0].mxu0 %v559
    %v5004 = vpop.f32.mrb[0].mxu0
    %v5005 = vadd.f32 %v4892, %v5004
    %v5006 = vpop.f32.mrb[0].mxu0
    %v5007 = vadd.f32 %v4894, %v5006
    %v5008 = vpop.f32.mrb[0].mxu0
    %v5009 = vadd.f32 %v4896, %v5008
    %v5010 = vpop.f32.mrb[0].mxu0
    %v5011 = vadd.f32 %v4898, %v5010
    %5012 = vdwg.mxu0
    %5013 = vmatprep.subr.bf16.mxu0 %v2640
    %5014 = vmatpush1.bf16.msra.mxu0 %v2639
    %5015 = vmatprep.subr.bf16.mxu0 %v2648
    %5016 = vmatpush1.bf16.msra.mxu0 %v2647
    %5017 = vmatprep.subr.bf16.mxu0 %v2656
    %5018 = vmatpush1.bf16.msra.mxu0 %v2655
    %5019 = vmatprep.subr.bf16.mxu0 %v2664
    %5020 = vmatpush1.bf16.msra.mxu0 %v2663
    %5021 = vmatprep.subr.bf16.mxu0 %v2672
    %5022 = vmatpush1.bf16.msra.mxu0 %v2671
    %5023 = vmatprep.subr.bf16.mxu0 %v2680
    %5024 = vmatpush1.bf16.msra.mxu0 %v2679
    %5025 = vmatprep.subr.bf16.mxu0 %v2688
    %5026 = vmatpush1.bf16.msra.mxu0 %v2687
    %5027 = vmatprep.subr.bf16.mxu0 %v2696
    %5028 = vmatpush1.bf16.msra.mxu0 %v2695
    %5029 = vmatprep.subr.bf16.mxu0 %v2704
    %5030 = vmatpush1.bf16.msra.mxu0 %v2703
    %5031 = vmatprep.subr.bf16.mxu0 %v2712
    %5032 = vmatpush1.bf16.msra.mxu0 %v2711
    %5033 = vmatprep.subr.bf16.mxu0 %v2720
    %5034 = vmatpush1.bf16.msra.mxu0 %v2719
    %5035 = vmatprep.subr.bf16.mxu0 %v2728
    %5036 = vmatpush1.bf16.msra.mxu0 %v2727
    %5037 = vmatprep.subr.bf16.mxu0 %v2736
    %5038 = vmatpush1.bf16.msra.mxu0 %v2735
    %5039 = vmatprep.subr.bf16.mxu0 %v2744
    %5040 = vmatpush1.bf16.msra.mxu0 %v2743
    %5041 = vmatprep.subr.bf16.mxu0 %v2752
    %5042 = vmatpush1.bf16.msra.mxu0 %v2751
    %5043 = vmatprep.subr.bf16.mxu0 %v2760
    %5044 = vmatpush1.bf16.msra.mxu0 %v2759
    %5045 = vmatprep.mubr.bf16.mxu0 %v173
    %5046 = vmatmul.mubr.bf16.gmra.mrb[0].mxu0 %v172
    %v5047 = vpop.f32.mrb[0].mxu0
    %v5048 = vadd.f32 0.0, %v5047
    %v5049 = vpop.f32.mrb[0].mxu0
    %v5050 = vadd.f32 0.0, %v5049
    %v5051 = vpop.f32.mrb[0].mxu0
    %v5052 = vadd.f32 0.0, %v5051
    %v5053 = vpop.f32.mrb[0].mxu0
    %v5054 = vadd.f32 0.0, %v5053
    %5055 = vmatprep.mubr.bf16.mxu0 %v175
    %5056 = vmatmul.mubr.bf16.gmra.mrb[0].mxu0 %v174
    %v5057 = vpop.f32.mrb[0].mxu0
    %v5058 = vadd.f32 0.0, %v5057
    %v5059 = vpop.f32.mrb[0].mxu0
    %v5060 = vadd.f32 0.0, %v5059
    %v5061 = vpop.f32.mrb[0].mxu0
    %v5062 = vadd.f32 0.0, %v5061
    %v5063 = vpop.f32.mrb[0].mxu0
    %v5064 = vadd.f32 0.0, %v5063
    %5065 = vmatprep.mubr.bf16.mxu0 %v177
    %5066 = vmatmul.mubr.bf16.gmra.mrb[0].mxu0 %v176
    %v5067 = vpop.f32.mrb[0].mxu0
    %v5068 = vadd.f32 0.0, %v5067
    %v5069 = vpop.f32.mrb[0].mxu0
    %v5070 = vadd.f32 0.0, %v5069
    %v5071 = vpop.f32.mrb[0].mxu0
    %v5072 = vadd.f32 0.0, %v5071
    %v5073 = vpop.f32.mrb[0].mxu0
    %v5074 = vadd.f32 0.0, %v5073
    %5075 = vmatprep.mubr.bf16.mxu0 %v179
    %5076 = vmatmul.mubr.bf16.gmra.mrb[0].mxu0 %v178
    %v5077 = vpop.f32.mrb[0].mxu0
    %v5078 = vadd.f32 0.0, %v5077
    %v5079 = vpop.f32.mrb[0].mxu0
    %v5080 = vadd.f32 0.0, %v5079
    %v5081 = vpop.f32.mrb[0].mxu0
    %v5082 = vadd.f32 0.0, %v5081
    %v5083 = vpop.f32.mrb[0].mxu0
    %v5084 = vadd.f32 0.0, %v5083
    %5085 = vmatprep.mubr.bf16.mxu0 %v181
    %5086 = vmatmul.mubr.bf16.gmra.mrb[0].mxu0 %v180
    %v5087 = vpop.f32.mrb[0].mxu0
    %v5088 = vadd.f32 0.0, %v5087
    %v5089 = vpop.f32.mrb[0].mxu0
    %v5090 = vadd.f32 0.0, %v5089
    %v5091 = vpop.f32.mrb[0].mxu0
    %v5092 = vadd.f32 0.0, %v5091
    %v5093 = vpop.f32.mrb[0].mxu0
    %v5094 = vadd.f32 0.0, %v5093
    %5095 = vmatprep.mubr.bf16.mxu0 %v183
    %5096 = vmatmul.mubr.bf16.gmra.mrb[0].mxu0 %v182
    %v5097 = vpop.f32.mrb[0].mxu0
    %v5098 = vadd.f32 0.0, %v5097
    %v5099 = vpop.f32.mrb[0].mxu0
    %v5100 = vadd.f32 0.0, %v5099
    %v5101 = vpop.f32.mrb[0].mxu0
    %v5102 = vadd.f32 0.0, %v5101
    %v5103 = vpop.f32.mrb[0].mxu0
    %v5104 = vadd.f32 0.0, %v5103
    %5105 = vmatprep.mubr.bf16.mxu0 %v185
    %5106 = vmatmul.mubr.bf16.gmra.mrb[0].mxu0 %v184
    %v5107 = vpop.f32.mrb[0].mxu0
    %v5108 = vadd.f32 0.0, %v5107
    %v5109 = vpop.f32.mrb[0].mxu0
    %v5110 = vadd.f32 0.0, %v5109
    %v5111 = vpop.f32.mrb[0].mxu0
    %v5112 = vadd.f32 0.0, %v5111
    %v5113 = vpop.f32.mrb[0].mxu0
    %v5114 = vadd.f32 0.0, %v5113
    %5115 = vmatprep.mubr.bf16.mxu0 %v187
    %5116 = vmatmul.mubr.bf16.gmra.mrb[0].mxu0 %v186
    %v5117 = vpop.f32.mrb[0].mxu0
    %v5118 = vadd.f32 0.0, %v5117
    %v5119 = vpop.f32.mrb[0].mxu0
    %v5120 = vadd.f32 0.0, %v5119
    %v5121 = vpop.f32.mrb[0].mxu0
    %v5122 = vadd.f32 0.0, %v5121
    %v5123 = vpop.f32.mrb[0].mxu0
    %v5124 = vadd.f32 0.0, %v5123
    %5125 = vdwg.mxu0
    %5126 = vmatprep.subr.bf16.mxu0 %v2768
    %5127 = vmatpush1.bf16.msra.mxu0 %v2767
    %5128 = vmatprep.subr.bf16.mxu0 %v2776
    %5129 = vmatpush1.bf16.msra.mxu0 %v2775
    %5130 = vmatprep.subr.bf16.mxu0 %v2784
    %5131 = vmatpush1.bf16.msra.mxu0 %v2783
    %5132 = vmatprep.subr.bf16.mxu0 %v2792
    %5133 = vmatpush1.bf16.msra.mxu0 %v2791
    %5134 = vmatprep.subr.bf16.mxu0 %v2800
    %5135 = vmatpush1.bf16.msra.mxu0 %v2799
    %5136 = vmatprep.subr.bf16.mxu0 %v2808
    %5137 = vmatpush1.bf16.msra.mxu0 %v2807
    %5138 = vmatprep.subr.bf16.mxu0 %v2816
    %5139 = vmatpush1.bf16.msra.mxu0 %v2815
    %5140 = vmatprep.subr.bf16.mxu0 %v2824
    %5141 = vmatpush1.bf16.msra.mxu0 %v2823
    %5142 = vmatprep.subr.bf16.mxu0 %v2832
    %5143 = vmatpush1.bf16.msra.mxu0 %v2831
    %5144 = vmatprep.subr.bf16.mxu0 %v2840
    %5145 = vmatpush1.bf16.msra.mxu0 %v2839
    %5146 = vmatprep.subr.bf16.mxu0 %v2848
    %5147 = vmatpush1.bf16.msra.mxu0 %v2847
    %5148 = vmatprep.subr.bf16.mxu0 %v2856
    %5149 = vmatpush1.bf16.msra.mxu0 %v2855
    %5150 = vmatprep.subr.bf16.mxu0 %v2864
    %5151 = vmatpush1.bf16.msra.mxu0 %v2863
    %5152 = vmatprep.subr.bf16.mxu0 %v2872
    %5153 = vmatpush1.bf16.msra.mxu0 %v2871
    %5154 = vmatprep.subr.bf16.mxu0 %v2880
    %5155 = vmatpush1.bf16.msra.mxu0 %v2879
    %5156 = vmatprep.subr.bf16.mxu0 %v2888
    %5157 = vmatpush1.bf16.msra.mxu0 %v2887
    %5158 = vmatprep.mubr.bf16.mxu0 %v280
    %5159 = vmatmul.mubr.bf16.gmra.mrb[0].mxu0 %v268
    %v5160 = vpop.f32.mrb[0].mxu0
    %v5161 = vadd.f32 %v5048, %v5160
    %v5162 = vpop.f32.mrb[0].mxu0
    %v5163 = vadd.f32 %v5050, %v5162
    %v5164 = vpop.f32.mrb[0].mxu0
    %v5165 = vadd.f32 %v5052, %v5164
    %v5166 = vpop.f32.mrb[0].mxu0
    %v5167 = vadd.f32 %v5054, %v5166
    %5168 = vmatprep.mubr.bf16.mxu0 %v296
    %5169 = vmatmul.mubr.bf16.gmra.mrb[0].mxu0 %v288
    %v5170 = vpop.f32.mrb[0].mxu0
    %v5171 = vadd.f32 %v5058, %v5170
    %v5172 = vpop.f32.mrb[0].mxu0
    %v5173 = vadd.f32 %v5060, %v5172
    %v5174 = vpop.f32.mrb[0].mxu0
    %v5175 = vadd.f32 %v5062, %v5174
    %v5176 = vpop.f32.mrb[0].mxu0
    %v5177 = vadd.f32 %v5064, %v5176
    %5178 = vmatprep.mubr.bf16.mxu0 %v312
    %5179 = vmatmul.mubr.bf16.gmra.mrb[0].mxu0 %v304
    %v5180 = vpop.f32.mrb[0].mxu0
    %v5181 = vadd.f32 %v5068, %v5180
    %v5182 = vpop.f32.mrb[0].mxu0
    %v5183 = vadd.f32 %v5070, %v5182
    %v5184 = vpop.f32.mrb[0].mxu0
    %v5185 = vadd.f32 %v5072, %v5184
    %v5186 = vpop.f32.mrb[0].mxu0
    %v5187 = vadd.f32 %v5074, %v5186
    %5188 = vmatprep.mubr.bf16.mxu0 %v328
    %5189 = vmatmul.mubr.bf16.gmra.mrb[0].mxu0 %v320
    %v5190 = vpop.f32.mrb[0].mxu0
    %v5191 = vadd.f32 %v5078, %v5190
    %v5192 = vpop.f32.mrb[0].mxu0
    %v5193 = vadd.f32 %v5080, %v5192
    %v5194 = vpop.f32.mrb[0].mxu0
    %v5195 = vadd.f32 %v5082, %v5194
    %v5196 = vpop.f32.mrb[0].mxu0
    %v5197 = vadd.f32 %v5084, %v5196
    %5198 = vmatprep.mubr.bf16.mxu0 %v344
    %5199 = vmatmul.mubr.bf16.gmra.mrb[0].mxu0 %v336
    %v5200 = vpop.f32.mrb[0].mxu0
    %v5201 = vadd.f32 %v5088, %v5200
    %v5202 = vpop.f32.mrb[0].mxu0
    %v5203 = vadd.f32 %v5090, %v5202
    %v5204 = vpop.f32.mrb[0].mxu0
    %v5205 = vadd.f32 %v5092, %v5204
    %v5206 = vpop.f32.mrb[0].mxu0
    %v5207 = vadd.f32 %v5094, %v5206
    %5208 = vmatprep.mubr.bf16.mxu0 %v360
    %5209 = vmatmul.mubr.bf16.gmra.mrb[0].mxu0 %v352
    %v5210 = vpop.f32.mrb[0].mxu0
    %v5211 = vadd.f32 %v5098, %v5210
    %v5212 = vpop.f32.mrb[0].mxu0
    %v5213 = vadd.f32 %v5100, %v5212
    %v5214 = vpop.f32.mrb[0].mxu0
    %v5215 = vadd.f32 %v5102, %v5214
    %v5216 = vpop.f32.mrb[0].mxu0
    %v5217 = vadd.f32 %v5104, %v5216
    %5218 = vmatprep.mubr.bf16.mxu0 %v376
    %5219 = vmatmul.mubr.bf16.gmra.mrb[0].mxu0 %v368
    %v5220 = vpop.f32.mrb[0].mxu0
    %v5221 = vadd.f32 %v5108, %v5220
    %v5222 = vpop.f32.mrb[0].mxu0
    %v5223 = vadd.f32 %v5110, %v5222
    %v5224 = vpop.f32.mrb[0].mxu0
    %v5225 = vadd.f32 %v5112, %v5224
    %v5226 = vpop.f32.mrb[0].mxu0
    %v5227 = vadd.f32 %v5114, %v5226
    %5228 = vmatprep.mubr.bf16.mxu0 %v392
    %5229 = vmatmul.mubr.bf16.gmra.mrb[0].mxu0 %v384
    %v5230 = vpop.f32.mrb[0].mxu0
    %v5231 = vadd.f32 %v5118, %v5230
    %v5232 = vpop.f32.mrb[0].mxu0
    %v5233 = vadd.f32 %v5120, %v5232
    %v5234 = vpop.f32.mrb[0].mxu0
    %v5235 = vadd.f32 %v5122, %v5234
    %v5236 = vpop.f32.mrb[0].mxu0
    %v5237 = vadd.f32 %v5124, %v5236
    %5238 = vdwg.mxu0
    %5239 = vmatprep.subr.bf16.mxu0 %v2896
    %5240 = vmatpush1.bf16.msra.mxu0 %v2895
    %5241 = vmatprep.subr.bf16.mxu0 %v2904
    %5242 = vmatpush1.bf16.msra.mxu0 %v2903
    %5243 = vmatprep.subr.bf16.mxu0 %v2912
    %5244 = vmatpush1.bf16.msra.mxu0 %v2911
    %5245 = vmatprep.subr.bf16.mxu0 %v2920
    %5246 = vmatpush1.bf16.msra.mxu0 %v2919
    %5247 = vmatprep.subr.bf16.mxu0 %v2928
    %5248 = vmatpush1.bf16.msra.mxu0 %v2927
    %5249 = vmatprep.subr.bf16.mxu0 %v2936
    %5250 = vmatpush1.bf16.msra.mxu0 %v2935
    %5251 = vmatprep.subr.bf16.mxu0 %v2944
    %5252 = vmatpush1.bf16.msra.mxu0 %v2943
    %5253 = vmatprep.subr.bf16.mxu0 %v2952
    %5254 = vmatpush1.bf16.msra.mxu0 %v2951
    %5255 = vmatprep.subr.bf16.mxu0 %v2960
    %5256 = vmatpush1.bf16.msra.mxu0 %v2959
    %5257 = vmatprep.subr.bf16.mxu0 %v2968
    %5258 = vmatpush1.bf16.msra.mxu0 %v2967
    %5259 = vmatprep.subr.bf16.mxu0 %v2976
    %5260 = vmatpush1.bf16.msra.mxu0 %v2975
    %5261 = vmatprep.subr.bf16.mxu0 %v2984
    %5262 = vmatpush1.bf16.msra.mxu0 %v2983
    %5263 = vmatprep.subr.bf16.mxu0 %v2992
    %5264 = vmatpush1.bf16.msra.mxu0 %v2991
    %5265 = vmatprep.subr.bf16.mxu0 %v3000
    %5266 = vmatpush1.bf16.msra.mxu0 %v2999
    %5267 = vmatprep.subr.bf16.mxu0 %v3008
    %5268 = vmatpush1.bf16.msra.mxu0 %v3007
    %5269 = vmatprep.subr.bf16.mxu0 %v3016
    %5270 = vmatpush1.bf16.msra.mxu0 %v3015
    %5271 = vmatprep.mubr.bf16.mxu0 %v433
    %5272 = vmatmul.mubr.bf16.gmra.mrb[0].mxu0 %v430
    %v5273 = vpop.f32.mrb[0].mxu0
    %v5274 = vadd.f32 %v5161, %v5273
    %v5275 = vpop.f32.mrb[0].mxu0
    %v5276 = vadd.f32 %v5163, %v5275
    %v5277 = vpop.f32.mrb[0].mxu0
    %v5278 = vadd.f32 %v5165, %v5277
    %v5279 = vpop.f32.mrb[0].mxu0
    %v5280 = vadd.f32 %v5167, %v5279
    %5281 = vmatprep.mubr.bf16.mxu0 %v437
    %5282 = vmatmul.mubr.bf16.gmra.mrb[0].mxu0 %v435
    %v5283 = vpop.f32.mrb[0].mxu0
    %v5284 = vadd.f32 %v5171, %v5283
    %v5285 = vpop.f32.mrb[0].mxu0
    %v5286 = vadd.f32 %v5173, %v5285
    %v5287 = vpop.f32.mrb[0].mxu0
    %v5288 = vadd.f32 %v5175, %v5287
    %v5289 = vpop.f32.mrb[0].mxu0
    %v5290 = vadd.f32 %v5177, %v5289
    %5291 = vmatprep.mubr.bf16.mxu0 %v441
    %5292 = vmatmul.mubr.bf16.gmra.mrb[0].mxu0 %v439
    %v5293 = vpop.f32.mrb[0].mxu0
    %v5294 = vadd.f32 %v5181, %v5293
    %v5295 = vpop.f32.mrb[0].mxu0
    %v5296 = vadd.f32 %v5183, %v5295
    %v5297 = vpop.f32.mrb[0].mxu0
    %v5298 = vadd.f32 %v5185, %v5297
    %v5299 = vpop.f32.mrb[0].mxu0
    %v5300 = vadd.f32 %v5187, %v5299
    %5301 = vmatprep.mubr.bf16.mxu0 %v445
    %5302 = vmatmul.mubr.bf16.gmra.mrb[0].mxu0 %v443
    %v5303 = vpop.f32.mrb[0].mxu0
    %v5304 = vadd.f32 %v5191, %v5303
    %v5305 = vpop.f32.mrb[0].mxu0
    %v5306 = vadd.f32 %v5193, %v5305
    %v5307 = vpop.f32.mrb[0].mxu0
    %v5308 = vadd.f32 %v5195, %v5307
    %v5309 = vpop.f32.mrb[0].mxu0
    %v5310 = vadd.f32 %v5197, %v5309
    %5311 = vmatprep.mubr.bf16.mxu0 %v449
    %5312 = vmatmul.mubr.bf16.gmra.mrb[0].mxu0 %v447
    %v5313 = vpop.f32.mrb[0].mxu0
    %v5314 = vadd.f32 %v5201, %v5313
    %v5315 = vpop.f32.mrb[0].mxu0
    %v5316 = vadd.f32 %v5203, %v5315
    %v5317 = vpop.f32.mrb[0].mxu0
    %v5318 = vadd.f32 %v5205, %v5317
    %v5319 = vpop.f32.mrb[0].mxu0
    %v5320 = vadd.f32 %v5207, %v5319
    %5321 = vmatprep.mubr.bf16.mxu0 %v453
    %5322 = vmatmul.mubr.bf16.gmra.mrb[0].mxu0 %v451
    %v5323 = vpop.f32.mrb[0].mxu0
    %v5324 = vadd.f32 %v5211, %v5323
    %v5325 = vpop.f32.mrb[0].mxu0
    %v5326 = vadd.f32 %v5213, %v5325
    %v5327 = vpop.f32.mrb[0].mxu0
    %v5328 = vadd.f32 %v5215, %v5327
    %v5329 = vpop.f32.mrb[0].mxu0
    %v5330 = vadd.f32 %v5217, %v5329
    %5331 = vmatprep.mubr.bf16.mxu0 %v457
    %5332 = vmatmul.mubr.bf16.gmra.mrb[0].mxu0 %v455
    %v5333 = vpop.f32.mrb[0].mxu0
    %v5334 = vadd.f32 %v5221, %v5333
    %v5335 = vpop.f32.mrb[0].mxu0
    %v5336 = vadd.f32 %v5223, %v5335
    %v5337 = vpop.f32.mrb[0].mxu0
    %v5338 = vadd.f32 %v5225, %v5337
    %v5339 = vpop.f32.mrb[0].mxu0
    %v5340 = vadd.f32 %v5227, %v5339
    %5341 = vmatprep.mubr.bf16.mxu0 %v461
    %5342 = vmatmul.mubr.bf16.gmra.mrb[0].mxu0 %v459
    %v5343 = vpop.f32.mrb[0].mxu0
    %v5344 = vadd.f32 %v5231, %v5343
    %v5345 = vpop.f32.mrb[0].mxu0
    %v5346 = vadd.f32 %v5233, %v5345
    %v5347 = vpop.f32.mrb[0].mxu0
    %v5348 = vadd.f32 %v5235, %v5347
    %v5349 = vpop.f32.mrb[0].mxu0
    %v5350 = vadd.f32 %v5237, %v5349
    %5351 = vdwg.mxu0
    %5352 = vmatprep.subr.bf16.mxu0 %v3024
    %5353 = vmatpush1.bf16.msra.mxu0 %v3023
    %5354 = vmatprep.subr.bf16.mxu0 %v3032
    %5355 = vmatpush1.bf16.msra.mxu0 %v3031
    %5356 = vmatprep.subr.bf16.mxu0 %v3040
    %5357 = vmatpush1.bf16.msra.mxu0 %v3039
    %5358 = vmatprep.subr.bf16.mxu0 %v3048
    %5359 = vmatpush1.bf16.msra.mxu0 %v3047
    %5360 = vmatprep.subr.bf16.mxu0 %v3056
    %5361 = vmatpush1.bf16.msra.mxu0 %v3055
    %5362 = vmatprep.subr.bf16.mxu0 %v3064
    %5363 = vmatpush1.bf16.msra.mxu0 %v3063
    %5364 = vmatprep.subr.bf16.mxu0 %v3072
    %5365 = vmatpush1.bf16.msra.mxu0 %v3071
    %5366 = vmatprep.subr.bf16.mxu0 %v3080
    %5367 = vmatpush1.bf16.msra.mxu0 %v3079
    %5368 = vmatprep.subr.bf16.mxu0 %v3088
    %5369 = vmatpush1.bf16.msra.mxu0 %v3087
    %5370 = vmatprep.subr.bf16.mxu0 %v3096
    %5371 = vmatpush1.bf16.msra.mxu0 %v3095
    %5372 = vmatprep.subr.bf16.mxu0 %v3104
    %5373 = vmatpush1.bf16.msra.mxu0 %v3103
    %5374 = vmatprep.subr.bf16.mxu0 %v3112
    %5375 = vmatpush1.bf16.msra.mxu0 %v3111
    %5376 = vmatprep.subr.bf16.mxu0 %v3120
    %5377 = vmatpush1.bf16.msra.mxu0 %v3119
    %5378 = vmatprep.subr.bf16.mxu0 %v3128
    %5379 = vmatpush1.bf16.msra.mxu0 %v3127
    %5380 = vmatprep.subr.bf16.mxu0 %v3136
    %5381 = vmatpush1.bf16.msra.mxu0 %v3135
    %5382 = vmatprep.subr.bf16.mxu0 %v3144
    %5383 = vmatpush1.bf16.msra.mxu0 %v3143
    %5384 = vmatprep.mubr.bf16.mxu0 %v502
    %5385 = vmatmul.mubr.bf16.gmra.mrb[0].mxu0 %v490
    %v5386 = vpop.f32.mrb[0].mxu0
    %v5387 = vadd.f32 %v5274, %v5386
    %v5388 = vpop.f32.mrb[0].mxu0
    %v5389 = vadd.f32 %v5276, %v5388
    %v5390 = vpop.f32.mrb[0].mxu0
    %v5391 = vadd.f32 %v5278, %v5390
    %v5392 = vpop.f32.mrb[0].mxu0
    %v5393 = vadd.f32 %v5280, %v5392
    %5394 = vmatprep.mubr.bf16.mxu0 %v510
    %5395 = vmatmul.mubr.bf16.gmra.mrb[0].mxu0 %v506
    %v5396 = vpop.f32.mrb[0].mxu0
    %v5397 = vadd.f32 %v5284, %v5396
    %v5398 = vpop.f32.mrb[0].mxu0
    %v5399 = vadd.f32 %v5286, %v5398
    %v5400 = vpop.f32.mrb[0].mxu0
    %v5401 = vadd.f32 %v5288, %v5400
    %v5402 = vpop.f32.mrb[0].mxu0
    %v5403 = vadd.f32 %v5290, %v5402
    %5404 = vmatprep.mubr.bf16.mxu0 %v518
    %5405 = vmatmul.mubr.bf16.gmra.mrb[0].mxu0 %v514
    %v5406 = vpop.f32.mrb[0].mxu0
    %v5407 = vadd.f32 %v5294, %v5406
    %v5408 = vpop.f32.mrb[0].mxu0
    %v5409 = vadd.f32 %v5296, %v5408
    %v5410 = vpop.f32.mrb[0].mxu0
    %v5411 = vadd.f32 %v5298, %v5410
    %v5412 = vpop.f32.mrb[0].mxu0
    %v5413 = vadd.f32 %v5300, %v5412
    %5414 = vmatprep.mubr.bf16.mxu0 %v526
    %5415 = vmatmul.mubr.bf16.gmra.mrb[0].mxu0 %v522
    %v5416 = vpop.f32.mrb[0].mxu0
    %v5417 = vadd.f32 %v5304, %v5416
    %v5418 = vpop.f32.mrb[0].mxu0
    %v5419 = vadd.f32 %v5306, %v5418
    %v5420 = vpop.f32.mrb[0].mxu0
    %v5421 = vadd.f32 %v5308, %v5420
    %v5422 = vpop.f32.mrb[0].mxu0
    %v5423 = vadd.f32 %v5310, %v5422
    %5424 = vmatprep.mubr.bf16.mxu0 %v534
    %5425 = vmatmul.mubr.bf16.gmra.mrb[0].mxu0 %v530
    %v5426 = vpop.f32.mrb[0].mxu0
    %v5427 = vadd.f32 %v5314, %v5426
    %v5428 = vpop.f32.mrb[0].mxu0
    %v5429 = vadd.f32 %v5316, %v5428
    %v5430 = vpop.f32.mrb[0].mxu0
    %v5431 = vadd.f32 %v5318, %v5430
    %v5432 = vpop.f32.mrb[0].mxu0
    %v5433 = vadd.f32 %v5320, %v5432
    %5434 = vmatprep.mubr.bf16.mxu0 %v542
    %5435 = vmatmul.mubr.bf16.gmra.mrb[0].mxu0 %v538
    %v5436 = vpop.f32.mrb[0].mxu0
    %v5437 = vadd.f32 %v5324, %v5436
    %v5438 = vpop.f32.mrb[0].mxu0
    %v5439 = vadd.f32 %v5326, %v5438
    %v5440 = vpop.f32.mrb[0].mxu0
    %v5441 = vadd.f32 %v5328, %v5440
    %v5442 = vpop.f32.mrb[0].mxu0
    %v5443 = vadd.f32 %v5330, %v5442
    %5444 = vmatprep.mubr.bf16.mxu0 %v550
    %5445 = vmatmul.mubr.bf16.gmra.mrb[0].mxu0 %v546
    %v5446 = vpop.f32.mrb[0].mxu0
    %v5447 = vadd.f32 %v5334, %v5446
    %v5448 = vpop.f32.mrb[0].mxu0
    %v5449 = vadd.f32 %v5336, %v5448
    %v5450 = vpop.f32.mrb[0].mxu0
    %v5451 = vadd.f32 %v5338, %v5450
    %v5452 = vpop.f32.mrb[0].mxu0
    %v5453 = vadd.f32 %v5340, %v5452
    %5454 = vmatprep.mubr.bf16.mxu0 %v568
    %5455 = vmatmul.mubr.bf16.gmra.mrb[0].mxu0 %v559
    %v5456 = vpop.f32.mrb[0].mxu0
    %v5457 = vadd.f32 %v5344, %v5456
    %v5458 = vpop.f32.mrb[0].mxu0
    %v5459 = vadd.f32 %v5346, %v5458
    %v5460 = vpop.f32.mrb[0].mxu0
    %v5461 = vadd.f32 %v5348, %v5460
    %v5462 = vpop.f32.mrb[0].mxu0
    %v5463 = vadd.f32 %v5350, %v5462
    %5464 = vdwg.mxu0
    %v5465 = vmul.f32 %v4031, %v4031
    %v5466 = vmul.f32 %v4033, %v4033
    %v5467 = vmul.f32 %v4483, %v4483
    %v5468 = vmul.f32 %v4485, %v4485
    %v5469 = vmul.f32 %v4035, %v4035
    %v5470 = vmul.f32 %v4037, %v4037
    %v5471 = vmul.f32 %v4487, %v4487
    %v5472 = vmul.f32 %v4489, %v4489
    %v5473 = vmul.f32 %v4041, %v4041
    %v5474 = vmul.f32 %v4043, %v4043
    %v5475 = vmul.f32 %v4493, %v4493
    %v5476 = vmul.f32 %v4495, %v4495
    %v5477 = vmul.f32 %v4045, %v4045
    %v5478 = vmul.f32 %v4047, %v4047
    %v5479 = vmul.f32 %v4497, %v4497
    %v5480 = vmul.f32 %v4499, %v4499
    %v5481 = vmul.f32 %v4051, %v4051
    %v5482 = vmul.f32 %v4053, %v4053
    %v5483 = vmul.f32 %v4503, %v4503
    %v5484 = vmul.f32 %v4505, %v4505
    %v5485 = vmul.f32 %v4055, %v4055
    %v5486 = vmul.f32 %v4057, %v4057
    %v5487 = vmul.f32 %v4507, %v4507
    %v5488 = vmul.f32 %v4509, %v4509
    %v5489 = vmul.f32 %v4061, %v4061
    %v5490 = vmul.f32 %v4063, %v4063
    %v5491 = vmul.f32 %v4513, %v4513
    %v5492 = vmul.f32 %v4515, %v4515
    %v5493 = vmul.f32 %v4065, %v4065
    %v5494 = vmul.f32 %v4067, %v4067
    %v5495 = vmul.f32 %v4517, %v4517
    %v5496 = vmul.f32 %v4519, %v4519
    %v5497 = vmul.f32 %v4071, %v4071
    %v5498 = vmul.f32 %v4073, %v4073
    %v5499 = vmul.f32 %v4523, %v4523
    %v5500 = vmul.f32 %v4525, %v4525
    %v5501 = vmul.f32 %v4075, %v4075
    %v5502 = vmul.f32 %v4077, %v4077
    %v5503 = vmul.f32 %v4527, %v4527
    %v5504 = vmul.f32 %v4529, %v4529
    %v5505 = vmul.f32 %v4081, %v4081
    %v5506 = vmul.f32 %v4083, %v4083
    %v5507 = vmul.f32 %v4533, %v4533
    %v5508 = vmul.f32 %v4535, %v4535
    %v5509 = vmul.f32 %v4085, %v4085
    %v5510 = vmul.f32 %v4087, %v4087
    %v5511 = vmul.f32 %v4537, %v4537
    %v5512 = vmul.f32 %v4539, %v4539
    %v5513 = vmul.f32 %v4091, %v4091
    %v5514 = vmul.f32 %v4093, %v4093
    %v5515 = vmul.f32 %v4543, %v4543
    %v5516 = vmul.f32 %v4545, %v4545
    %v5517 = vmul.f32 %v4095, %v4095
    %v5518 = vmul.f32 %v4097, %v4097
    %v5519 = vmul.f32 %v4547, %v4547
    %v5520 = vmul.f32 %v4549, %v4549
    %v5521 = vmul.f32 %v4101, %v4101
    %v5522 = vmul.f32 %v4103, %v4103
    %v5523 = vmul.f32 %v4553, %v4553
    %v5524 = vmul.f32 %v4555, %v4555
    %v5525 = vmul.f32 %v4105, %v4105
    %v5526 = vmul.f32 %v4107, %v4107
    %v5527 = vmul.f32 %v4557, %v4557
    %v5528 = vmul.f32 %v4559, %v4559
    %v5529 = vmul.f32 %v4935, %v4935
    %v5530 = vmul.f32 %v4937, %v4937
    %v5531 = vmul.f32 %v5387, %v5387
    %v5532 = vmul.f32 %v5389, %v5389
    %v5533 = vmul.f32 %v4939, %v4939
    %v5534 = vmul.f32 %v4941, %v4941
    %v5535 = vmul.f32 %v5391, %v5391
    %v5536 = vmul.f32 %v5393, %v5393
    %v5537 = vmul.f32 %v4945, %v4945
    %v5538 = vmul.f32 %v4947, %v4947
    %v5539 = vmul.f32 %v5397, %v5397
    %v5540 = vmul.f32 %v5399, %v5399
    %v5541 = vmul.f32 %v4949, %v4949
    %v5542 = vmul.f32 %v4951, %v4951
    %v5543 = vmul.f32 %v5401, %v5401
    %v5544 = vmul.f32 %v5403, %v5403
    %v5545 = vmul.f32 %v4955, %v4955
    %v5546 = vmul.f32 %v4957, %v4957
    %v5547 = vmul.f32 %v5407, %v5407
    %v5548 = vmul.f32 %v5409, %v5409
    %v5549 = vmul.f32 %v4959, %v4959
    %v5550 = vmul.f32 %v4961, %v4961
    %v5551 = vmul.f32 %v5411, %v5411
    %v5552 = vmul.f32 %v5413, %v5413
    %v5553 = vmul.f32 %v4965, %v4965
    %v5554 = vmul.f32 %v4967, %v4967
    %v5555 = vmul.f32 %v5417, %v5417
    %v5556 = vmul.f32 %v5419, %v5419
    %v5557 = vmul.f32 %v4969, %v4969
    %v5558 = vmul.f32 %v4971, %v4971
    %v5559 = vmul.f32 %v5421, %v5421
    %v5560 = vmul.f32 %v5423, %v5423
    %v5561 = vmul.f32 %v4975, %v4975
    %v5562 = vmul.f32 %v4977, %v4977
    %v5563 = vmul.f32 %v5427, %v5427
    %v5564 = vmul.f32 %v5429, %v5429
    %v5565 = vmul.f32 %v4979, %v4979
    %v5566 = vmul.f32 %v4981, %v4981
    %v5567 = vmul.f32 %v5431, %v5431
    %v5568 = vmul.f32 %v5433, %v5433
    %v5569 = vmul.f32 %v4985, %v4985
    %v5570 = vmul.f32 %v4987, %v4987
    %v5571 = vmul.f32 %v5437, %v5437
    %v5572 = vmul.f32 %v5439, %v5439
    %v5573 = vmul.f32 %v4989, %v4989
    %v5574 = vmul.f32 %v4991, %v4991
    %v5575 = vmul.f32 %v5441, %v5441
    %v5576 = vmul.f32 %v5443, %v5443
    %v5577 = vmul.f32 %v4995, %v4995
    %v5578 = vmul.f32 %v4997, %v4997
    %v5579 = vmul.f32 %v5447, %v5447
    %v5580 = vmul.f32 %v5449, %v5449
    %v5581 = vmul.f32 %v4999, %v4999
    %v5582 = vmul.f32 %v5001, %v5001
    %v5583 = vmul.f32 %v5451, %v5451
    %v5584 = vmul.f32 %v5453, %v5453
    %v5585 = vmul.f32 %v5005, %v5005
    %v5586 = vmul.f32 %v5007, %v5007
    %v5587 = vmul.f32 %v5457, %v5457
    %v5588 = vmul.f32 %v5459, %v5459
    %v5589 = vmul.f32 %v5009, %v5009
    %v5590 = vmul.f32 %v5011, %v5011
    %v5591 = vmul.f32 %v5461, %v5461
    %v5592 = vmul.f32 %v5463, %v5463
    %v5593 = vadd.f32 %v5465, %v5529
    %v5594 = vadd.f32 %v5466, %v5530
    %v5595 = vadd.f32 %v5467, %v5531
    %v5596 = vadd.f32 %v5468, %v5532
    %v5597 = vadd.f32 %v5469, %v5533
    %v5598 = vadd.f32 %v5470, %v5534
    %v5599 = vadd.f32 %v5471, %v5535
    %v5600 = vadd.f32 %v5472, %v5536
    %v5601 = vadd.f32 %v5473, %v5537
    %v5602 = vadd.f32 %v5474, %v5538
    %v5603 = vadd.f32 %v5475, %v5539
    %v5604 = vadd.f32 %v5476, %v5540
    %v5605 = vadd.f32 %v5477, %v5541
    %v5606 = vadd.f32 %v5478, %v5542
    %v5607 = vadd.f32 %v5479, %v5543
    %v5608 = vadd.f32 %v5480, %v5544
    %v5609 = vadd.f32 %v5481, %v5545
    %v5610 = vadd.f32 %v5482, %v5546
    %v5611 = vadd.f32 %v5483, %v5547
    %v5612 = vadd.f32 %v5484, %v5548
    %v5613 = vadd.f32 %v5485, %v5549
    %v5614 = vadd.f32 %v5486, %v5550
    %v5615 = vadd.f32 %v5487, %v5551
    %v5616 = vadd.f32 %v5488, %v5552
    %v5617 = vadd.f32 %v5489, %v5553
    %v5618 = vadd.f32 %v5490, %v5554
    %v5619 = vadd.f32 %v5491, %v5555
    %v5620 = vadd.f32 %v5492, %v5556
    %v5621 = vadd.f32 %v5493, %v5557
    %v5622 = vadd.f32 %v5494, %v5558
    %v5623 = vadd.f32 %v5495, %v5559
    %v5624 = vadd.f32 %v5496, %v5560
    %v5625 = vadd.f32 %v5497, %v5561
    %v5626 = vadd.f32 %v5498, %v5562
    %v5627 = vadd.f32 %v5499, %v5563
    %v5628 = vadd.f32 %v5500, %v5564
    %v5629 = vadd.f32 %v5501, %v5565
    %v5630 = vadd.f32 %v5502, %v5566
    %v5631 = vadd.f32 %v5503, %v5567
    %v5632 = vadd.f32 %v5504, %v5568
    %v5633 = vadd.f32 %v5505, %v5569
    %v5634 = vadd.f32 %v5506, %v5570
    %v5635 = vadd.f32 %v5507, %v5571
    %v5636 = vadd.f32 %v5508, %v5572
    %v5637 = vadd.f32 %v5509, %v5573
    %v5638 = vadd.f32 %v5510, %v5574
    %v5639 = vadd.f32 %v5511, %v5575
    %v5640 = vadd.f32 %v5512, %v5576
    %v5641 = vadd.f32 %v5513, %v5577
    %v5642 = vadd.f32 %v5514, %v5578
    %v5643 = vadd.f32 %v5515, %v5579
    %v5644 = vadd.f32 %v5516, %v5580
    %v5645 = vadd.f32 %v5517, %v5581
    %v5646 = vadd.f32 %v5518, %v5582
    %v5647 = vadd.f32 %v5519, %v5583
    %v5648 = vadd.f32 %v5520, %v5584
    %v5649 = vadd.f32 %v5521, %v5585
    %v5650 = vadd.f32 %v5522, %v5586
    %v5651 = vadd.f32 %v5523, %v5587
    %v5652 = vadd.f32 %v5524, %v5588
    %v5653 = vadd.f32 %v5525, %v5589
    %v5654 = vadd.f32 %v5526, %v5590
    %v5655 = vadd.f32 %v5527, %v5591
    %v5656 = vadd.f32 %v5528, %v5592
    %v5657 = vpack.c.bf16 %v5597, %v5593
    %v5658 = vpack.c.bf16 %v5598, %v5594
    %v5659 = vpack.c.bf16 %v5599, %v5595
    %v5660 = vpack.c.bf16 %v5600, %v5596
    %v5661 = vpack.c.bf16 %v5605, %v5601
    %v5662 = vpack.c.bf16 %v5606, %v5602
    %v5663 = vpack.c.bf16 %v5607, %v5603
    %v5664 = vpack.c.bf16 %v5608, %v5604
    %v5665 = vpack.c.bf16 %v5613, %v5609
    %v5666 = vpack.c.bf16 %v5614, %v5610
    %v5667 = vpack.c.bf16 %v5615, %v5611
    %v5668 = vpack.c.bf16 %v5616, %v5612
    %v5669 = vpack.c.bf16 %v5621, %v5617
    %v5670 = vpack.c.bf16 %v5622, %v5618
    %v5671 = vpack.c.bf16 %v5623, %v5619
    %v5672 = vpack.c.bf16 %v5624, %v5620
    %v5673 = vpack.c.bf16 %v5629, %v5625
    %v5674 = vpack.c.bf16 %v5630, %v5626
    %v5675 = vpack.c.bf16 %v5631, %v5627
    %v5676 = vpack.c.bf16 %v5632, %v5628
    %v5677 = vpack.c.bf16 %v5637, %v5633
    %v5678 = vpack.c.bf16 %v5638, %v5634
    %v5679 = vpack.c.bf16 %v5639, %v5635
    %v5680 = vpack.c.bf16 %v5640, %v5636
    %v5681 = vpack.c.bf16 %v5645, %v5641
    %v5682 = vpack.c.bf16 %v5646, %v5642
    %v5683 = vpack.c.bf16 %v5647, %v5643
    %v5684 = vpack.c.bf16 %v5648, %v5644
    %v5685 = vpack.c.bf16 %v5653, %v5649
    %v5686 = vpack.c.bf16 %v5654, %v5650
    %v5687 = vpack.c.bf16 %v5655, %v5651
    %v5688 = vpack.c.bf16 %v5656, %v5652
    %v5689 = vld [vmem:[#allocation9] sm:$0xf]
    %v5690 = vld [vmem:[#allocation9 + $0x4] sm:$0xf]
    %v5691 = vld [vmem:[#allocation9 + $0x8] sm:$0xf]
    %v5692 = vld [vmem:[#allocation9 + $0xc] sm:$0xf]
    %v5693 = vld [vmem:[#allocation9 + $0x10] sm:$0xf]
    %v5694 = vld [vmem:[#allocation9 + $0x14] sm:$0xf]
    %v5695 = vld [vmem:[#allocation9 + $0x18] sm:$0xf]
    %v5696 = vld [vmem:[#allocation9 + $0x1c] sm:$0xf]
    %v5697 = vld [vmem:[#allocation9 + $0x20] sm:$0xf]
    %v5698 = vld [vmem:[#allocation9 + $0x24] sm:$0xf]
    %v5699 = vld [vmem:[#allocation9 + $0x28] sm:$0xf]
    %v5700 = vld [vmem:[#allocation9 + $0x2c] sm:$0xf]
    %v5701 = vld [vmem:[#allocation9 + $0x30] sm:$0xf]
    %v5702 = vld [vmem:[#allocation9 + $0x34] sm:$0xf]
    %v5703 = vld [vmem:[#allocation9 + $0x38] sm:$0xf]
    %v5704 = vld [vmem:[#allocation9 + $0x3c] sm:$0xf]
    %v5705 = vld [vmem:[#allocation9 + $0x40] sm:$0xf]
    %v5706 = vld [vmem:[#allocation9 + $0x44] sm:$0xf]
    %v5707 = vld [vmem:[#allocation9 + $0x48] sm:$0xf]
    %v5708 = vld [vmem:[#allocation9 + $0x4c] sm:$0xf]
    %v5709 = vld [vmem:[#allocation9 + $0x50] sm:$0xf]
    %v5710 = vld [vmem:[#allocation9 + $0x54] sm:$0xf]
    %v5711 = vld [vmem:[#allocation9 + $0x58] sm:$0xf]
    %v5712 = vld [vmem:[#allocation9 + $0x5c] sm:$0xf]
    %v5713 = vld [vmem:[#allocation9 + $0x60] sm:$0xf]
    %v5714 = vld [vmem:[#allocation9 + $0x64] sm:$0xf]
    %v5715 = vld [vmem:[#allocation9 + $0x68] sm:$0xf]
    %v5716 = vld [vmem:[#allocation9 + $0x6c] sm:$0xf]
    %v5717 = vld [vmem:[#allocation9 + $0x70] sm:$0xf]
    %v5718 = vld [vmem:[#allocation9 + $0x74] sm:$0xf]
    %v5719 = vld [vmem:[#allocation9 + $0x78] sm:$0xf]
    %v5720 = vld [vmem:[#allocation9 + $0x7c] sm:$0xf]
    %v5721 = vld [vmem:[#allocation9 + $0x80] sm:$0xf]
    %v5722 = vld [vmem:[#allocation9 + $0x84] sm:$0xf]
    %v5723 = vld [vmem:[#allocation9 + $0x88] sm:$0xf]
    %v5724 = vld [vmem:[#allocation9 + $0x8c] sm:$0xf]
    %v5725 = vld [vmem:[#allocation9 + $0x90] sm:$0xf]
    %v5726 = vld [vmem:[#allocation9 + $0x94] sm:$0xf]
    %v5727 = vld [vmem:[#allocation9 + $0x98] sm:$0xf]
    %v5728 = vld [vmem:[#allocation9 + $0x9c] sm:$0xf]
    %v5729 = vld [vmem:[#allocation9 + $0xa0] sm:$0xf]
    %v5730 = vld [vmem:[#allocation9 + $0xa4] sm:$0xf]
    %v5731 = vld [vmem:[#allocation9 + $0xa8] sm:$0xf]
    %v5732 = vld [vmem:[#allocation9 + $0xac] sm:$0xf]
    %v5733 = vld [vmem:[#allocation9 + $0xb0] sm:$0xf]
    %v5734 = vld [vmem:[#allocation9 + $0xb4] sm:$0xf]
    %v5735 = vld [vmem:[#allocation9 + $0xb8] sm:$0xf]
    %v5736 = vld [vmem:[#allocation9 + $0xbc] sm:$0xf]
    %v5737 = vld [vmem:[#allocation9 + $0xc0] sm:$0xf]
    %v5738 = vld [vmem:[#allocation9 + $0xc4] sm:$0xf]
    %v5739 = vld [vmem:[#allocation9 + $0xc8] sm:$0xf]
    %v5740 = vld [vmem:[#allocation9 + $0xcc] sm:$0xf]
    %v5741 = vld [vmem:[#allocation9 + $0xd0] sm:$0xf]
    %v5742 = vld [vmem:[#allocation9 + $0xd4] sm:$0xf]
    %v5743 = vld [vmem:[#allocation9 + $0xd8] sm:$0xf]
    %v5744 = vld [vmem:[#allocation9 + $0xdc] sm:$0xf]
    %v5745 = vld [vmem:[#allocation9 + $0xe0] sm:$0xf]
    %v5746 = vld [vmem:[#allocation9 + $0xe4] sm:$0xf]
    %v5747 = vld [vmem:[#allocation9 + $0xe8] sm:$0xf]
    %v5748 = vld [vmem:[#allocation9 + $0xec] sm:$0xf]
    %v5749 = vld [vmem:[#allocation9 + $0xf0] sm:$0xf]
    %v5750 = vld [vmem:[#allocation9 + $0xf4] sm:$0xf]
    %v5751 = vld [vmem:[#allocation9 + $0xf8] sm:$0xf]
    %v5752 = vld [vmem:[#allocation9 + $0xfc] sm:$0xf]
    %v5817 = vunpack.c.l.b16 %v5689
    %v5818 = vunpack.c.l.b16 %v5690
    %v5819 = vunpack.c.l.b16 %v5691
    %v5820 = vunpack.c.l.b16 %v5692
    %v5821 = vunpack.c.l.b16 %v5693
    %v5822 = vunpack.c.l.b16 %v5694
    %v5823 = vunpack.c.l.b16 %v5695
    %v5824 = vunpack.c.l.b16 %v5696
    %v5825 = vunpack.c.l.b16 %v5697
    %v5826 = vunpack.c.l.b16 %v5698
    %v5827 = vunpack.c.l.b16 %v5699
    %v5828 = vunpack.c.l.b16 %v5700
    %v5829 = vunpack.c.l.b16 %v5701
    %v5830 = vunpack.c.l.b16 %v5702
    %v5831 = vunpack.c.l.b16 %v5703
    %v5832 = vunpack.c.l.b16 %v5704
    %v5833 = vunpack.c.l.b16 %v5705
    %v5834 = vunpack.c.l.b16 %v5706
    %v5835 = vunpack.c.l.b16 %v5707
    %v5836 = vunpack.c.l.b16 %v5708
    %v5837 = vunpack.c.l.b16 %v5709
    %v5838 = vunpack.c.l.b16 %v5710
    %v5839 = vunpack.c.l.b16 %v5711
    %v5840 = vunpack.c.l.b16 %v5712
    %v5841 = vunpack.c.l.b16 %v5713
    %v5842 = vunpack.c.l.b16 %v5714
    %v5843 = vunpack.c.l.b16 %v5715
    %v5844 = vunpack.c.l.b16 %v5716
    %v5845 = vunpack.c.l.b16 %v5717
    %v5846 = vunpack.c.l.b16 %v5718
    %v5847 = vunpack.c.l.b16 %v5719
    %v5848 = vunpack.c.l.b16 %v5720
    %v5849 = vunpack.c.l.b16 %v5721
    %v5850 = vunpack.c.l.b16 %v5722
    %v5851 = vunpack.c.l.b16 %v5723
    %v5852 = vunpack.c.l.b16 %v5724
    %v5853 = vunpack.c.l.b16 %v5725
    %v5854 = vunpack.c.l.b16 %v5726
    %v5855 = vunpack.c.l.b16 %v5727
    %v5856 = vunpack.c.l.b16 %v5728
    %v5857 = vunpack.c.l.b16 %v5729
    %v5858 = vunpack.c.l.b16 %v5730
    %v5859 = vunpack.c.l.b16 %v5731
    %v5860 = vunpack.c.l.b16 %v5732
    %v5861 = vunpack.c.l.b16 %v5733
    %v5862 = vunpack.c.l.b16 %v5734
    %v5863 = vunpack.c.l.b16 %v5735
    %v5864 = vunpack.c.l.b16 %v5736
    %v5865 = vunpack.c.l.b16 %v5737
    %v5866 = vunpack.c.l.b16 %v5738
    %v5867 = vunpack.c.l.b16 %v5739
    %v5868 = vunpack.c.l.b16 %v5740
    %v5869 = vunpack.c.l.b16 %v5741
    %v5870 = vunpack.c.l.b16 %v5742
    %v5871 = vunpack.c.l.b16 %v5743
    %v5872 = vunpack.c.l.b16 %v5744
    %v5873 = vunpack.c.l.b16 %v5745
    %v5874 = vunpack.c.l.b16 %v5746
    %v5875 = vunpack.c.l.b16 %v5747
    %v5876 = vunpack.c.l.b16 %v5748
    %v5877 = vunpack.c.l.b16 %v5749
    %v5878 = vunpack.c.l.b16 %v5750
    %v5879 = vunpack.c.l.b16 %v5751
    %v5880 = vunpack.c.l.b16 %v5752
    %v5881 = vpack.c.b16 %v5818, %v5817
    %v5882 = vpack.c.b16 %v5820, %v5819
    %v5883 = vpack.c.b16 %v5822, %v5821
    %v5884 = vpack.c.b16 %v5824, %v5823
    %v5885 = vpack.c.b16 %v5826, %v5825
    %v5886 = vpack.c.b16 %v5828, %v5827
    %v5887 = vpack.c.b16 %v5830, %v5829
    %v5888 = vpack.c.b16 %v5832, %v5831
    %v5889 = vpack.c.b16 %v5834, %v5833
    %v5890 = vpack.c.b16 %v5836, %v5835
    %v5891 = vpack.c.b16 %v5838, %v5837
    %v5892 = vpack.c.b16 %v5840, %v5839
    %v5893 = vpack.c.b16 %v5842, %v5841
    %v5894 = vpack.c.b16 %v5844, %v5843
    %v5895 = vpack.c.b16 %v5846, %v5845
    %v5896 = vpack.c.b16 %v5848, %v5847
    %v5897 = vpack.c.b16 %v5850, %v5849
    %v5898 = vpack.c.b16 %v5852, %v5851
    %v5899 = vpack.c.b16 %v5854, %v5853
    %v5900 = vpack.c.b16 %v5856, %v5855
    %v5901 = vpack.c.b16 %v5858, %v5857
    %v5902 = vpack.c.b16 %v5860, %v5859
    %v5903 = vpack.c.b16 %v5862, %v5861
    %v5904 = vpack.c.b16 %v5864, %v5863
    %v5905 = vpack.c.b16 %v5866, %v5865
    %v5906 = vpack.c.b16 %v5868, %v5867
    %v5907 = vpack.c.b16 %v5870, %v5869
    %v5908 = vpack.c.b16 %v5872, %v5871
    %v5909 = vpack.c.b16 %v5874, %v5873
    %v5910 = vpack.c.b16 %v5876, %v5875
    %v5911 = vpack.c.b16 %v5878, %v5877
    %v5912 = vpack.c.b16 %v5880, %v5879
    %5945 = vmatprep.subr.bf16.mxu0 0
    %5946 = vmatpush1.bf16.msra.mxu0 %v5881
    %5947 = vmatprep.subr.bf16.mxu0 0
    %5948 = vmatpush1.bf16.msra.mxu0 %v5882
    %5949 = vmatprep.subr.bf16.mxu0 0
    %5950 = vmatpush1.bf16.msra.mxu0 %v5883
    %5951 = vmatprep.subr.bf16.mxu0 0
    %5952 = vmatpush1.bf16.msra.mxu0 %v5884
    %5953 = vmatprep.subr.bf16.mxu0 0
    %5954 = vmatpush1.bf16.msra.mxu0 %v5885
    %5955 = vmatprep.subr.bf16.mxu0 0
    %5956 = vmatpush1.bf16.msra.mxu0 %v5886
    %5957 = vmatprep.subr.bf16.mxu0 0
    %5958 = vmatpush1.bf16.msra.mxu0 %v5887
    %5959 = vmatprep.subr.bf16.mxu0 0
    %5960 = vmatpush1.bf16.msra.mxu0 %v5888
    %5961 = vmatprep.subr.bf16.mxu0 0
    %5962 = vmatpush1.bf16.msra.mxu0 %v5889
    %5963 = vmatprep.subr.bf16.mxu0 0
    %5964 = vmatpush1.bf16.msra.mxu0 %v5890
    %5965 = vmatprep.subr.bf16.mxu0 0
    %5966 = vmatpush1.bf16.msra.mxu0 %v5891
    %5967 = vmatprep.subr.bf16.mxu0 0
    %5968 = vmatpush1.bf16.msra.mxu0 %v5892
    %5969 = vmatprep.subr.bf16.mxu0 0
    %5970 = vmatpush1.bf16.msra.mxu0 %v5893
    %5971 = vmatprep.subr.bf16.mxu0 0
    %5972 = vmatpush1.bf16.msra.mxu0 %v5894
    %5973 = vmatprep.subr.bf16.mxu0 0
    %5974 = vmatpush1.bf16.msra.mxu0 %v5895
    %5975 = vmatprep.subr.bf16.mxu0 0
    %5976 = vmatpush1.bf16.msra.mxu0 %v5896
    %5977 = vmatprep.mubr.bf16.mxu0 %v5658
    %5978 = vmatmul.mubr.bf16.gmra.mrb[0].mxu0 %v5657
    %v5979 = vpop.f32.mrb[0].mxu0
    %v5980 = vadd.f32 1e-09, %v5979
    %v5981 = vpop.f32.mrb[0].mxu0
    %v5982 = vpop.f32.mrb[0].mxu0
    %v5983 = vadd.f32 1e-09, %v5982
    %v5984 = vpop.f32.mrb[0].mxu0
    %5985 = vmatprep.mubr.bf16.mxu0 %v5662
    %5986 = vmatmul.mubr.bf16.gmra.mrb[0].mxu0 %v5661
    %v5987 = vpop.f32.mrb[0].mxu0
    %v5988 = vadd.f32 1e-09, %v5987
    %v5989 = vpop.f32.mrb[0].mxu0
    %v5990 = vpop.f32.mrb[0].mxu0
    %v5991 = vadd.f32 1e-09, %v5990
    %v5992 = vpop.f32.mrb[0].mxu0
    %5993 = vmatprep.mubr.bf16.mxu0 %v5666
    %5994 = vmatmul.mubr.bf16.gmra.mrb[0].mxu0 %v5665
    %v5995 = vpop.f32.mrb[0].mxu0
    %v5996 = vadd.f32 1e-09, %v5995
    %v5997 = vpop.f32.mrb[0].mxu0
    %v5998 = vpop.f32.mrb[0].mxu0
    %v5999 = vadd.f32 1e-09, %v5998
    %v6000 = vpop.f32.mrb[0].mxu0
    %6001 = vmatprep.mubr.bf16.mxu0 %v5670
    %6002 = vmatmul.mubr.bf16.gmra.mrb[0].mxu0 %v5669
    %v6003 = vpop.f32.mrb[0].mxu0
    %v6004 = vadd.f32 1e-09, %v6003
    %v6005 = vpop.f32.mrb[0].mxu0
    %v6006 = vpop.f32.mrb[0].mxu0
    %v6007 = vadd.f32 1e-09, %v6006
    %v6008 = vpop.f32.mrb[0].mxu0
    %6009 = vmatprep.mubr.bf16.mxu0 %v5674
    %6010 = vmatmul.mubr.bf16.gmra.mrb[0].mxu0 %v5673
    %v6011 = vpop.f32.mrb[0].mxu0
    %v6012 = vadd.f32 1e-09, %v6011
    %v6013 = vpop.f32.mrb[0].mxu0
    %v6014 = vpop.f32.mrb[0].mxu0
    %v6015 = vadd.f32 1e-09, %v6014
    %v6016 = vpop.f32.mrb[0].mxu0
    %6017 = vmatprep.mubr.bf16.mxu0 %v5678
    %6018 = vmatmul.mubr.bf16.gmra.mrb[0].mxu0 %v5677
    %v6019 = vpop.f32.mrb[0].mxu0
    %v6020 = vadd.f32 1e-09, %v6019
    %v6021 = vpop.f32.mrb[0].mxu0
    %v6022 = vpop.f32.mrb[0].mxu0
    %v6023 = vadd.f32 1e-09, %v6022
    %v6024 = vpop.f32.mrb[0].mxu0
    %6025 = vmatprep.mubr.bf16.mxu0 %v5682
    %6026 = vmatmul.mubr.bf16.gmra.mrb[0].mxu0 %v5681
    %v6027 = vpop.f32.mrb[0].mxu0
    %v6028 = vadd.f32 1e-09, %v6027
    %v6029 = vpop.f32.mrb[0].mxu0
    %v6030 = vpop.f32.mrb[0].mxu0
    %v6031 = vadd.f32 1e-09, %v6030
    %v6032 = vpop.f32.mrb[0].mxu0
    %6033 = vmatprep.mubr.bf16.mxu0 %v5686
    %6034 = vmatmul.mubr.bf16.gmra.mrb[0].mxu0 %v5685
    %v6035 = vpop.f32.mrb[0].mxu0
    %v6036 = vadd.f32 1e-09, %v6035
    %v6037 = vpop.f32.mrb[0].mxu0
    %v6038 = vpop.f32.mrb[0].mxu0
    %v6039 = vadd.f32 1e-09, %v6038
    %v6040 = vpop.f32.mrb[0].mxu0
    %6041 = vdwg.mxu0
    %6042 = vmatprep.subr.bf16.mxu0 0
    %6043 = vmatpush1.bf16.msra.mxu0 %v5897
    %6044 = vmatprep.subr.bf16.mxu0 0
    %6045 = vmatpush1.bf16.msra.mxu0 %v5898
    %6046 = vmatprep.subr.bf16.mxu0 0
    %6047 = vmatpush1.bf16.msra.mxu0 %v5899
    %6048 = vmatprep.subr.bf16.mxu0 0
    %6049 = vmatpush1.bf16.msra.mxu0 %v5900
    %6050 = vmatprep.subr.bf16.mxu0 0
    %6051 = vmatpush1.bf16.msra.mxu0 %v5901
    %6052 = vmatprep.subr.bf16.mxu0 0
    %6053 = vmatpush1.bf16.msra.mxu0 %v5902
    %6054 = vmatprep.subr.bf16.mxu0 0
    %6055 = vmatpush1.bf16.msra.mxu0 %v5903
    %6056 = vmatprep.subr.bf16.mxu0 0
    %6057 = vmatpush1.bf16.msra.mxu0 %v5904
    %6058 = vmatprep.subr.bf16.mxu0 0
    %6059 = vmatpush1.bf16.msra.mxu0 %v5905
    %6060 = vmatprep.subr.bf16.mxu0 0
    %6061 = vmatpush1.bf16.msra.mxu0 %v5906
    %6062 = vmatprep.subr.bf16.mxu0 0
    %6063 = vmatpush1.bf16.msra.mxu0 %v5907
    %6064 = vmatprep.subr.bf16.mxu0 0
    %6065 = vmatpush1.bf16.msra.mxu0 %v5908
    %6066 = vmatprep.subr.bf16.mxu0 0
    %6067 = vmatpush1.bf16.msra.mxu0 %v5909
    %6068 = vmatprep.subr.bf16.mxu0 0
    %6069 = vmatpush1.bf16.msra.mxu0 %v5910
    %6070 = vmatprep.subr.bf16.mxu0 0
    %6071 = vmatpush1.bf16.msra.mxu0 %v5911
    %6072 = vmatprep.subr.bf16.mxu0 0
    %6073 = vmatpush1.bf16.msra.mxu0 %v5912
    %6074 = vmatprep.mubr.bf16.mxu0 %v5660
    %6075 = vmatmul.mubr.bf16.gmra.mrb[0].mxu0 %v5659
    %v6076 = vpop.f32.mrb[0].mxu0
    %v6077 = vadd.f32 %v5980, %v6076
    %v6078 = vpop.f32.mrb[0].mxu0
    %v6079 = vpop.f32.mrb[0].mxu0
    %v6080 = vadd.f32 %v5983, %v6079
    %v6081 = vpop.f32.mrb[0].mxu0
    %6082 = vmatprep.mubr.bf16.mxu0 %v5664
    %6083 = vmatmul.mubr.bf16.gmra.mrb[0].mxu0 %v5663
    %v6084 = vpop.f32.mrb[0].mxu0
    %v6085 = vadd.f32 %v5988, %v6084
    %v6086 = vpop.f32.mrb[0].mxu0
    %v6087 = vpop.f32.mrb[0].mxu0
    %v6088 = vadd.f32 %v5991, %v6087
    %v6089 = vpop.f32.mrb[0].mxu0
    %6090 = vmatprep.mubr.bf16.mxu0 %v5668
    %6091 = vmatmul.mubr.bf16.gmra.mrb[0].mxu0 %v5667
    %v6092 = vpop.f32.mrb[0].mxu0
    %v6093 = vadd.f32 %v5996, %v6092
    %v6094 = vpop.f32.mrb[0].mxu0
    %v6095 = vpop.f32.mrb[0].mxu0
    %v6096 = vadd.f32 %v5999, %v6095
    %v6097 = vpop.f32.mrb[0].mxu0
    %6098 = vmatprep.mubr.bf16.mxu0 %v5672
    %6099 = vmatmul.mubr.bf16.gmra.mrb[0].mxu0 %v5671
    %v6100 = vpop.f32.mrb[0].mxu0
    %v6101 = vadd.f32 %v6004, %v6100
    %v6102 = vpop.f32.mrb[0].mxu0
    %v6103 = vpop.f32.mrb[0].mxu0
    %v6104 = vadd.f32 %v6007, %v6103
    %v6105 = vpop.f32.mrb[0].mxu0
    %6106 = vmatprep.mubr.bf16.mxu0 %v5676
    %6107 = vmatmul.mubr.bf16.gmra.mrb[0].mxu0 %v5675
    %v6108 = vpop.f32.mrb[0].mxu0
    %v6109 = vadd.f32 %v6012, %v6108
    %v6110 = vpop.f32.mrb[0].mxu0
    %v6111 = vpop.f32.mrb[0].mxu0
    %v6112 = vadd.f32 %v6015, %v6111
    %v6113 = vpop.f32.mrb[0].mxu0
    %6114 = vmatprep.mubr.bf16.mxu0 %v5680
    %6115 = vmatmul.mubr.bf16.gmra.mrb[0].mxu0 %v5679
    %v6116 = vpop.f32.mrb[0].mxu0
    %v6117 = vadd.f32 %v6020, %v6116
    %v6118 = vpop.f32.mrb[0].mxu0
    %v6119 = vpop.f32.mrb[0].mxu0
    %v6120 = vadd.f32 %v6023, %v6119
    %v6121 = vpop.f32.mrb[0].mxu0
    %6122 = vmatprep.mubr.bf16.mxu0 %v5684
    %6123 = vmatmul.mubr.bf16.gmra.mrb[0].mxu0 %v5683
    %v6124 = vpop.f32.mrb[0].mxu0
    %v6125 = vadd.f32 %v6028, %v6124
    %v6126 = vpop.f32.mrb[0].mxu0
    %v6127 = vpop.f32.mrb[0].mxu0
    %v6128 = vadd.f32 %v6031, %v6127
    %v6129 = vpop.f32.mrb[0].mxu0
    %6130 = vmatprep.mubr.bf16.mxu0 %v5688
    %6131 = vmatmul.mubr.bf16.gmra.mrb[0].mxu0 %v5687
    %v6132 = vpop.f32.mrb[0].mxu0
    %v6133 = vadd.f32 %v6036, %v6132
    %v6134 = vpop.f32.mrb[0].mxu0
    %v6135 = vpop.f32.mrb[0].mxu0
    %v6136 = vadd.f32 %v6039, %v6135
    %v6137 = vpop.f32.mrb[0].mxu0
    %6138 = vdwg.mxu0
    %v6139 = vlog2.pop %v6077
    %v6140 = vmul.f32 %v6139, 0.6931472
    %v6141 = vlog2.pop %v6080
    %v6142 = vmul.f32 %v6141, 0.6931472
    %v6143 = vlog2.pop %v6085
    %v6144 = vmul.f32 %v6143, 0.6931472
    %v6145 = vlog2.pop %v6088
    %v6146 = vmul.f32 %v6145, 0.6931472
    %v6147 = vlog2.pop %v6093
    %v6148 = vmul.f32 %v6147, 0.6931472
    %v6149 = vlog2.pop %v6096
    %v6150 = vmul.f32 %v6149, 0.6931472
    %v6151 = vlog2.pop %v6101
    %v6152 = vmul.f32 %v6151, 0.6931472
    %v6153 = vlog2.pop %v6104
    %v6154 = vmul.f32 %v6153, 0.6931472
    %v6155 = vlog2.pop %v6109
    %v6156 = vmul.f32 %v6155, 0.6931472
    %v6157 = vlog2.pop %v6112
    %v6158 = vmul.f32 %v6157, 0.6931472
    %v6159 = vlog2.pop %v6117
    %v6160 = vmul.f32 %v6159, 0.6931472
    %v6161 = vlog2.pop %v6120
    %v6162 = vmul.f32 %v6161, 0.6931472
    %v6163 = vlog2.pop %v6125
    %v6164 = vmul.f32 %v6163, 0.6931472
    %v6165 = vlog2.pop %v6128
    %v6166 = vmul.f32 %v6165, 0.6931472
    %v6167 = vlog2.pop %v6133
    %v6168 = vmul.f32 %v6167, 0.6931472
    %v6169 = vlog2.pop %v6136
    %v6170 = vmul.f32 %v6169, 0.6931472
    %6171 = vst [vmem:[#allocation11] sm:$0xff] %v6140
    %6172 = vst [vmem:[#allocation11 + $0x8] sm:$0xff] %v6142
    %6173 = vst [vmem:[#allocation11 + $0x10] sm:$0xff] %v6144
    %6174 = vst [vmem:[#allocation11 + $0x18] sm:$0xff] %v6146
    %6175 = vst [vmem:[#allocation11 + $0x20] sm:$0xff] %v6148
    %6176 = vst [vmem:[#allocation11 + $0x28] sm:$0xff] %v6150
    %6177 = vst [vmem:[#allocation11 + $0x30] sm:$0xff] %v6152
    %6178 = vst [vmem:[#allocation11 + $0x38] sm:$0xff] %v6154
    %6179 = vst [vmem:[#allocation11 + $0x40] sm:$0xff] %v6156
    %6180 = vst [vmem:[#allocation11 + $0x48] sm:$0xff] %v6158
    %6181 = vst [vmem:[#allocation11 + $0x50] sm:$0xff] %v6160
    %6182 = vst [vmem:[#allocation11 + $0x58] sm:$0xff] %v6162
    %6183 = vst [vmem:[#allocation11 + $0x60] sm:$0xff] %v6164
    %6184 = vst [vmem:[#allocation11 + $0x68] sm:$0xff] %v6166
    %6185 = vst [vmem:[#allocation11 + $0x70] sm:$0xff] %v6168
    %6186 = vst [vmem:[#allocation11 + $0x78] sm:$0xff] %v6170
    // Predicated region
    $region34: #{_logmel_pallas.1} parent=1 // pred_check
      _
    $region35: #{_logmel_pallas.1} parent=1 // pred_check_branch
      %6188 = sbr.rel (0) target = $region37
    $region36: #{_logmel_pallas.1} parent=1 // pred_region
      %s6190 = ssub.s32 2048, 2048
      %6191 = vsyncadd [#allocation5], %s6190
      %s6192 = sshll.u32 [#allocation11], 4
      %s6193 = int_to_ptr.vmem [resolvable:$true] %s6192
      %6198 = dma.vmem_to_hbm [thread:$0]  %s6193, 2048, %s4, [#allocation5], 128, 128, 8
    $region37: #{_logmel_pallas.1} parent=1 // pred_fallthru
      _
    // Predicated region
    $region38: #{_logmel_pallas.1} parent=1 // pred_check
      _
    $region39: #{_logmel_pallas.1} parent=1 // pred_check_branch
      %6200 = sbr.rel (0) target = $region41
    $region40: #{_logmel_pallas.1} parent=1 // pred_region
      %6201 = dma.done [#allocation5], 2048
    $region41: #{_logmel_pallas.1} parent=1 // pred_fallthru
      _
    %6202 = vsyncpa [#allocation4], 1
    %6203 = vsyncpa [#allocation7], 1
    %6204 = vsyncpa [#allocation10], 1
    %6205 = vsyncpa [#allocation5], 1

</llo_original>
